<compile_context>
chip_gen: v5e
topology: v5e:2x2
jax: 0.10.0
libtpu: 0.0.40
codegen_flags: <defaults>
</compile_context>

<pallas_src>
import functools

import numpy as np
import jax
import jax.numpy as jnp
from jax.experimental import pallas as pl
from jax.experimental.pallas import tpu as pltpu


# ------------------------------------------------------------------ Pallas kernel

def _matmul_bias_act_kernel(w_ref, x_ref, b_ref, o_ref, *, act):
    # w_ref: (N, K) bf16   x_ref: (K, TM) bf16   b_ref: (N, 1) f32   o_ref: (N, TM) bf16
    acc = jnp.dot(w_ref[...], x_ref[...], preferred_element_type=jnp.float32)
    acc = acc + b_ref[...]                       # per-channel bias, broadcast over lanes
    if act == "silu":                            # SiLU / swish, computed in f32
        acc = acc * (1.0 / (1.0 + jnp.exp(-acc)))
    elif act == "relu":
        acc = jnp.maximum(acc, 0.0)
    o_ref[...] = acc.astype(o_ref.dtype)


def matmul_bias_act(w, cols, b, act=None):
    """Lane-dense fused matmul:  (N, K) @ (K, M) + b  ->  (N, M) with M on lanes.

    Grid has at most 2 steps: a single whole-M tile amortizes the per-step
    overhead, and 2 "parallel" steps feed both v7x TensorCores when M >= 256.
    """
    N, K = w.shape
    M = cols.shape[1]

    n_pad = ((N + 7) // 8) * 8              # sublane-align output channels
    if n_pad != N:
        w = jnp.pad(w, ((0, n_pad - N), (0, 0)))
        b = jnp.pad(b, (0, n_pad - N))
    m_pad = ((M + 127) // 128) * 128        # lane-align positions (already true here)
    if m_pad != M:
        cols = jnp.pad(cols, ((0, 0), (0, m_pad - M)))

    steps = 2 if m_pad % 256 == 0 else 1
    tm = m_pad // steps

    out = pl.pallas_call(
        functools.partial(_matmul_bias_act_kernel, act=act),
        out_shape=jax.ShapeDtypeStruct((n_pad, m_pad), jnp.bfloat16),
        grid=(steps,),
        in_specs=[
            pl.BlockSpec((n_pad, K), lambda i: (0, 0)),    # weights: grid-invariant
            pl.BlockSpec((K, tm), lambda i: (0, i)),       # cols: tiled along M (lanes)
            pl.BlockSpec((n_pad, 1), lambda i: (0, 0)),    # bias: grid-invariant
        ],
        out_specs=pl.BlockSpec((n_pad, tm), lambda i: (0, i)),
        compiler_params=pltpu.CompilerParams(dimension_semantics=("parallel",)),
    )(w.astype(jnp.bfloat16),
      cols.astype(jnp.bfloat16),
      b.astype(jnp.float32).reshape(n_pad, 1))
    return out[:N, :M]


# ------------------------------------------------------------------ conv lowering (glue + Pallas matmul)

def _im2col_cf(xp, ksize, out_spatial):
    # xp: (Cin, B, Dp, Hp, Wp)  ->  (Cin*kd*kh*kw, B*Do*Ho*Wo)     (no transposes)
    Cin, B = xp.shape[0], xp.shape[1]
    kd, kh, kw = ksize
    Do, Ho, Wo = out_spatial
    patches = []
    for a in range(kd):
        for bb in range(kh):
            for c in range(kw):
                patches.append(xp[:, :, a:a + Do, bb:bb + Ho, c:c + Wo])
    p = jnp.stack(patches, axis=1)                     # (Cin, taps, B, Do, Ho, Wo)
    # TODO(synk): the tap gather could move inside the Pallas kernel (VMEM-resident
    # padded activation + per-tap shifted matmuls) to remove the 27x cols expansion.
    return p.reshape(Cin * kd * kh * kw, B * Do * Ho * Wo)


def conv3d_same(x, w2d, b, ksize, act=None):
    """Conv3d, stride 1, padding='same'.  x: (Cin,B,D,H,W), w2d: (Cout, Cin*k^3)."""
    Cin, B, D, H, W = x.shape
    Cout = w2d.shape[0]
    p = ksize // 2
    xp = jnp.pad(x, ((0, 0), (0, 0), (p, p), (p, p), (p, p)))
    cols = _im2col_cf(xp, (ksize, ksize, ksize), (D, H, W))
    out = matmul_bias_act(w2d, cols, b, act=act)       # (Cout, B*D*H*W) lane-dense
    return out.reshape(Cout, B, D, H, W)


def conv_transpose_up2(x, w_comb, b_comb):
    """ConvTranspose3d(kernel=(3,4,4), stride=(1,2,2), padding=1, output_padding=0)
    via the sub-pixel (stride-phase) decomposition: one 3x3x3 matmul over the
    UN-upsampled input producing all 4 (h,w) phases, then an HxW pixel shuffle."""
    Cin, B, D, H, W = x.shape
    Cout = w_comb.shape[0] // 4
    xp = jnp.pad(x, ((0, 0), (0, 0), (1, 1), (1, 1), (1, 1)))
    cols = _im2col_cf(xp, (3, 3, 3), (D, H, W))
    out = matmul_bias_act(w_comb, cols, b_comb, act=None)   # (4*Cout, B*D*H*W)
    out = out.reshape(2, 2, Cout, B, D, H, W)                # (ph, pw, co, b, d, i, j)
    out = out.transpose(2, 3, 4, 5, 0, 6, 1)                 # (co, b, d, i, ph, j, pw)
    return out.reshape(Cout, B, D, 2 * H, 2 * W)


def avgpool_122(x):
    """AvgPool3d((1,2,2)) on a (C,B,D,H,W) tensor.  Folded into XLA glue
    (reshape + mean); a standalone pallas_call here was pure launch overhead."""
    C, B, D, H, W = x.shape
    return x.reshape(C, B, D, H // 2, 2, W // 2, 2).mean(axis=(4, 6))


# ------------------------------------------------------------------ model definition

CONFIG = {
    "EMBED": 32,
    "ACT": "swish",            # -> SiLU
    "STRIDE": 1,
    "KERNEL": 3,
    "LAYER_SIZE_AE": [8, 16],
    "DIM_RED": [2, 2],
}
DATA_SHAPE = (1, 4, 16, 16)    # (C, D, H, W), PyTorch Conv3d channel-first


def _conv_init(key, cout, cin, kd, kh, kw):
    fan_in = cin * kd * kh * kw
    bound = 1.0 / np.sqrt(fan_in)
    kw_key, kb_key = jax.random.split(key)
    w = jax.random.uniform(kw_key, (cout, cin, kd, kh, kw), jnp.float32, -bound, bound)
    b = jax.random.uniform(kb_key, (cout,), jnp.float32, -bound, bound)
    return w, b


def _convT_init(key, cin, cout, kd, kh, kw):
    fan_in = cout * kd * kh * kw
    bound = 1.0 / np.sqrt(fan_in)
    kw_key, kb_key = jax.random.split(key)
    w = jax.random.uniform(kw_key, (cin, cout, kd, kh, kw), jnp.float32, -bound, bound)
    b = jax.random.uniform(kb_key, (cout,), jnp.float32, -bound, bound)
    return w, b


def init_params(key, config=CONFIG, data_shape=DATA_SHAPE):
    k = config["KERNEL"]
    ls = config["LAYER_SIZE_AE"]
    cin = data_shape[0]
    keys = jax.random.split(key, 8)
    return {
        # encoder: conv->SiLU->pool, conv->SiLU->pool, conv(->1ch)
        "enc0": _conv_init(keys[0], ls[0], cin, k, k, k),
        "enc1": _conv_init(keys[1], ls[1], ls[0], k, k, k),
        "encf": _conv_init(keys[2], 1, ls[1], k, k, k),
        # decoder: conv->SiLU->convT, conv->SiLU->convT, conv(->C ch)
        "dec0": _conv_init(keys[3], ls[1], 1, k, k, k),
        "dec0t": _convT_init(keys[4], ls[1], ls[1], 3, 4, 4),
        "dec1": _conv_init(keys[5], ls[0], ls[1], k, k, k),
        "dec1t": _convT_init(keys[6], ls[0], ls[0], 3, 4, 4),
        "decf": _conv_init(keys[7], data_shape[0], ls[0], k, k, k),
    }


def _prep_conv(w, b):
    # (Cout, Cin, k, k, k) -> (Cout, Cin*k^3) bf16 matching the im2col K ordering.
    cout = w.shape[0]
    return w.reshape(cout, -1).astype(jnp.bfloat16), b.astype(jnp.float32)


def _prep_convT(wt, b):
    """Fold ConvTranspose3d((3,4,4), stride (1,2,2), padding 1) weights into a
    (4*Cout, Cin*27) phase-combined matrix.  For output phase (ph, pw) and 3x3x3
    tap (dz, sh, sw) over the padded UN-upsampled input, the contributing weight
    is wt[ci, co, 2-dz, 3+ph-2*sh, 3+pw-2*sw] (zero when the index is out of range).
    output_padding is 0 everywhere for this config."""
    cin, cout, kd, kh, kw = wt.shape
    assert (kd, kh, kw) == (3, 4, 4)
    w = jnp.zeros((2, 2, cout, cin, 3, 3, 3), wt.dtype)
    for ph in range(2):
        for pw in range(2):
            for dz in range(3):
                for sh in range(3):
                    khi = 3 + ph - 2 * sh
                    if not 0 <= khi < 4:
                        continue
                    for sw in range(3):
                        kwi = 3 + pw - 2 * sw
                        if not 0 <= kwi < 4:
                            continue
                        w = w.at[ph, pw, :, :, dz, sh, sw].set(wt[:, :, 2 - dz, khi, kwi].T)
    return (w.reshape(4 * cout, cin * 27).astype(jnp.bfloat16),
            jnp.tile(b, 4).astype(jnp.float32))


def prepare_params(params):
    """One-time (outside jit) conversion of PyTorch-layout params to the
    kernel-friendly lane-dense layout (bf16 matmul operands, f32 biases)."""
    return {name: (_prep_convT(w, b) if name.endswith("t") else _prep_conv(w, b))
            for name, (w, b) in params.items()}


def calo_ae_forward(x, params, act="silu"):
    """Matches CaloAE.forward with CONFIG above (nlayers=2, DIM_RED=[2,2]).
    x is NCDHW (B,C,D,H,W); activations flow channels-outermost (C,B,D,H,W) in bf16."""
    k = CONFIG["KERNEL"]
    h = x.transpose(1, 0, 2, 3, 4).astype(jnp.bfloat16)   # single layout change in
    # ---------------- encoder ----------------
    h = conv3d_same(h, *params["enc0"], k, act=act)
    h = avgpool_122(h)                                    # AvgPool3d((1, 2, 2))
    h = conv3d_same(h, *params["enc1"], k, act=act)
    h = avgpool_122(h)
    h = conv3d_same(h, *params["encf"], k, act=None)      # final encoder conv, no act
    # ---------------- decoder ----------------
    h = conv3d_same(h, *params["dec0"], k, act=act)
    h = conv_transpose_up2(h, *params["dec0t"])           # ConvTranspose3d, no act
    h = conv3d_same(h, *params["dec1"], k, act=act)
    h = conv_transpose_up2(h, *params["dec1t"])
    h = conv3d_same(h, *params["decf"], k, act=None)      # final decoder conv, no act
    return h.transpose(1, 0, 2, 3, 4).astype(jnp.float32)  # single layout change out


# ------------------------------------------------------------------ driver

if __name__ == "__main__":
    key = jax.random.PRNGKey(0)
    pkey, xkey = jax.random.split(key)
    raw_params = init_params(pkey)
    params = prepare_params(raw_params)          # outside jit: weight layout + bf16 cast

    B = 2
    x = jax.random.normal(xkey, (B,) + DATA_SHAPE, jnp.float32)   # (2, 1, 4, 16, 16)

    fwd = jax.jit(calo_ae_forward)
    out = fwd(x, params)
    jax.block_until_ready(out)

    assert out.shape == x.shape, (out.shape, x.shape)
    assert out.dtype == jnp.float32
    assert bool(jnp.all(jnp.isfinite(out)))
    print("KERNEL_OK")
</pallas_src>

<mosaic_0001>
module attributes {stable_mosaic.version = 11 : i64} {
  func.func @_matmul_bias_act_kernel(%arg0: i32, %arg1: memref<8x27xbf16, #tpu.memory_space<vmem>>, %arg2: memref<27x1024xbf16, #tpu.memory_space<vmem>>, %arg3: memref<8x1xf32, #tpu.memory_space<vmem>>, %arg4: memref<8x1024xbf16, #tpu.memory_space<vmem>>) attributes {dimension_semantics = [#tpu.dimension_semantics<parallel>], iteration_bounds = array<i64: 2>, scalar_prefetch = 0 : i64, scratch_operands = 0 : i64, tpu.core_type = #tpu.core_type<tc>, window_params = [{pipeline_mode = #tpu.pipeline_mode<synchronous>, transform_indices = @transform_0, window_bounds = array<i64: 8, 27>}, {transform_indices = @transform_1, window_bounds = array<i64: 27, 1024>}, {pipeline_mode = #tpu.pipeline_mode<synchronous>, transform_indices = @transform_2, window_bounds = array<i64: 8, 1>}, {transform_indices = @transform_3, window_bounds = array<i64: 8, 1024>}]} {
    %c0 = arith.constant 0 : index
    %c0_0 = arith.constant 0 : index
    %0 = vector.load %arg1[%c0, %c0_0] : memref<8x27xbf16, #tpu.memory_space<vmem>>, vector<8x27xbf16>
    %c0_1 = arith.constant 0 : index
    %c0_2 = arith.constant 0 : index
    %1 = vector.load %arg2[%c0_1, %c0_2] : memref<27x1024xbf16, #tpu.memory_space<vmem>>, vector<27x1024xbf16>
    %cst = arith.constant dense<0.000000e+00> : vector<8x1024xf32>
    %2 = tpu.matmul %0, %1, %cst {dimension_numbers = #tpu.dot_dimension_numbers<[1], [0], [0], [1], [0, 0, 1, 1], [], []>} : vector<8x27xbf16>, vector<27x1024xbf16>, vector<8x1024xf32> -> vector<8x1024xf32>
    %c0_3 = arith.constant 0 : index
    %c0_4 = arith.constant 0 : index
    %3 = vector.load %arg3[%c0_3, %c0_4] : memref<8x1xf32, #tpu.memory_space<vmem>>, vector<8x1xf32>
    %4 = vector.broadcast %3 : vector<8x1xf32> to vector<8x1024xf32>
    %5 = arith.addf %2, %4 : vector<8x1024xf32>
    %cst_5 = arith.constant 0.000000e+00 : f32
    %6 = vector.broadcast %cst_5 : f32 to vector<8x1024xf32>
    %7 = arith.subf %6, %5 : vector<8x1024xf32>
    %8 = math.exp %7 : vector<8x1024xf32>
    %cst_6 = arith.constant 1.000000e+00 : f32
    %9 = vector.broadcast %cst_6 : f32 to vector<8x1024xf32>
    %10 = arith.addf %9, %8 : vector<8x1024xf32>
    %cst_7 = arith.constant 1.000000e+00 : f32
    %11 = vector.broadcast %cst_7 : f32 to vector<8x1024xf32>
    %12 = arith.divf %11, %10 : vector<8x1024xf32>
    %13 = arith.mulf %5, %12 : vector<8x1024xf32>
    %14 = arith.truncf %13 : vector<8x1024xf32> to vector<8x1024xbf16>
    %c0_8 = arith.constant 0 : index
    %c0_9 = arith.constant 0 : index
    %15 = vector.load %arg4[%c0_8, %c0_9] : memref<8x1024xbf16, #tpu.memory_space<vmem>>, vector<8x1024xbf16>
    tpu.vector_store %arg4[%c0_8, %c0_9], %14 {strides = array<i32>} : memref<8x1024xbf16, #tpu.memory_space<vmem>>, vector<8x1024xbf16>,
    return
  }
  func.func @transform_0(%arg0: i32) -> (i32, i32) {
    %c0_i32 = arith.constant 0 : i32
    %c0_i32_0 = arith.constant 0 : i32
    %c0_i32_1 = arith.constant 0 : i32
    return %c0_i32, %c0_i32_0 : i32, i32
  }
  func.func @transform_1(%arg0: i32) -> (i32, i32) {
    %c0_i32 = arith.constant 0 : i32
    %c0_i32_0 = arith.constant 0 : i32
    return %c0_i32, %arg0 : i32, i32
  }
  func.func @transform_2(%arg0: i32) -> (i32, i32) {
    %c0_i32 = arith.constant 0 : i32
    %c0_i32_0 = arith.constant 0 : i32
    %c0_i32_1 = arith.constant 0 : i32
    return %c0_i32, %c0_i32_0 : i32, i32
  }
  func.func @transform_3(%arg0: i32) -> (i32, i32) {
    %c0_i32 = arith.constant 0 : i32
    %c0_i32_0 = arith.constant 0 : i32
    return %c0_i32, %arg0 : i32, i32
  }
}

module attributes {stable_mosaic.version = 11 : i64} {
  func.func @_matmul_bias_act_kernel(%arg0: i32, %arg1: memref<16x216xbf16, #tpu.memory_space<vmem>>, %arg2: memref<216x256xbf16, #tpu.memory_space<vmem>>, %arg3: memref<16x1xf32, #tpu.memory_space<vmem>>, %arg4: memref<16x256xbf16, #tpu.memory_space<vmem>>) attributes {dimension_semantics = [#tpu.dimension_semantics<parallel>], iteration_bounds = array<i64: 2>, scalar_prefetch = 0 : i64, scratch_operands = 0 : i64, tpu.core_type = #tpu.core_type<tc>, window_params = [{pipeline_mode = #tpu.pipeline_mode<synchronous>, transform_indices = @transform_0, window_bounds = array<i64: 16, 216>}, {transform_indices = @transform_1, window_bounds = array<i64: 216, 256>}, {pipeline_mode = #tpu.pipeline_mode<synchronous>, transform_indices = @transform_2, window_bounds = array<i64: 16, 1>}, {transform_indices = @transform_3, window_bounds = array<i64: 16, 256>}]} {
    %c0 = arith.constant 0 : index
    %c0_0 = arith.constant 0 : index
    %0 = vector.load %arg1[%c0, %c0_0] : memref<16x216xbf16, #tpu.memory_space<vmem>>, vector<16x216xbf16>
    %c0_1 = arith.constant 0 : index
    %c0_2 = arith.constant 0 : index
    %1 = vector.load %arg2[%c0_1, %c0_2] : memref<216x256xbf16, #tpu.memory_space<vmem>>, vector<216x256xbf16>
    %cst = arith.constant dense<0.000000e+00> : vector<16x256xf32>
    %2 = tpu.matmul %0, %1, %cst {dimension_numbers = #tpu.dot_dimension_numbers<[1], [0], [0], [1], [0, 0, 1, 1], [], []>} : vector<16x216xbf16>, vector<216x256xbf16>, vector<16x256xf32> -> vector<16x256xf32>
    %c0_3 = arith.constant 0 : index
    %c0_4 = arith.constant 0 : index
    %3 = vector.load %arg3[%c0_3, %c0_4] : memref<16x1xf32, #tpu.memory_space<vmem>>, vector<16x1xf32>
    %4 = vector.broadcast %3 : vector<16x1xf32> to vector<16x256xf32>
    %5 = arith.addf %2, %4 : vector<16x256xf32>
    %cst_5 = arith.constant 0.000000e+00 : f32
    %6 = vector.broadcast %cst_5 : f32 to vector<16x256xf32>
    %7 = arith.subf %6, %5 : vector<16x256xf32>
    %8 = math.exp %7 : vector<16x256xf32>
    %cst_6 = arith.constant 1.000000e+00 : f32
    %9 = vector.broadcast %cst_6 : f32 to vector<16x256xf32>
    %10 = arith.addf %9, %8 : vector<16x256xf32>
    %cst_7 = arith.constant 1.000000e+00 : f32
    %11 = vector.broadcast %cst_7 : f32 to vector<16x256xf32>
    %12 = arith.divf %11, %10 : vector<16x256xf32>
    %13 = arith.mulf %5, %12 : vector<16x256xf32>
    %14 = arith.truncf %13 : vector<16x256xf32> to vector<16x256xbf16>
    %c0_8 = arith.constant 0 : index
    %c0_9 = arith.constant 0 : index
    %15 = vector.load %arg4[%c0_8, %c0_9] : memref<16x256xbf16, #tpu.memory_space<vmem>>, vector<16x256xbf16>
    tpu.vector_store %arg4[%c0_8, %c0_9], %14 {strides = array<i32>} : memref<16x256xbf16, #tpu.memory_space<vmem>>, vector<16x256xbf16>,
    return
  }
  func.func @transform_0(%arg0: i32) -> (i32, i32) {
    %c0_i32 = arith.constant 0 : i32
    %c0_i32_0 = arith.constant 0 : i32
    %c0_i32_1 = arith.constant 0 : i32
    return %c0_i32, %c0_i32_0 : i32, i32
  }
  func.func @transform_1(%arg0: i32) -> (i32, i32) {
    %c0_i32 = arith.constant 0 : i32
    %c0_i32_0 = arith.constant 0 : i32
    return %c0_i32, %arg0 : i32, i32
  }
  func.func @transform_2(%arg0: i32) -> (i32, i32) {
    %c0_i32 = arith.constant 0 : i32
    %c0_i32_0 = arith.constant 0 : i32
    %c0_i32_1 = arith.constant 0 : i32
    return %c0_i32, %c0_i32_0 : i32, i32
  }
  func.func @transform_3(%arg0: i32) -> (i32, i32) {
    %c0_i32 = arith.constant 0 : i32
    %c0_i32_0 = arith.constant 0 : i32
    return %c0_i32, %arg0 : i32, i32
  }
}

module attributes {stable_mosaic.version = 11 : i64} {
  func.func @_matmul_bias_act_kernel(%arg0: i32, %arg1: memref<8x432xbf16, #tpu.memory_space<vmem>>, %arg2: memref<432x128xbf16, #tpu.memory_space<vmem>>, %arg3: memref<8x1xf32, #tpu.memory_space<vmem>>, %arg4: memref<8x128xbf16, #tpu.memory_space<vmem>>) attributes {dimension_semantics = [#tpu.dimension_semantics<parallel>], iteration_bounds = array<i64: 1>, scalar_prefetch = 0 : i64, scratch_operands = 0 : i64, tpu.core_type = #tpu.core_type<tc>, window_params = [{pipeline_mode = #tpu.pipeline_mode<synchronous>, transform_indices = @transform_0, window_bounds = array<i64: 8, 432>}, {transform_indices = @transform_1, window_bounds = array<i64: 432, 128>}, {pipeline_mode = #tpu.pipeline_mode<synchronous>, transform_indices = @transform_2, window_bounds = array<i64: 8, 1>}, {transform_indices = @transform_3, window_bounds = array<i64: 8, 128>}]} {
    %c0 = arith.constant 0 : index
    %c0_0 = arith.constant 0 : index
    %0 = vector.load %arg1[%c0, %c0_0] : memref<8x432xbf16, #tpu.memory_space<vmem>>, vector<8x432xbf16>
    %c0_1 = arith.constant 0 : index
    %c0_2 = arith.constant 0 : index
    %1 = vector.load %arg2[%c0_1, %c0_2] : memref<432x128xbf16, #tpu.memory_space<vmem>>, vector<432x128xbf16>
    %cst = arith.constant dense<0.000000e+00> : vector<8x128xf32>
    %2 = tpu.matmul %0, %1, %cst {dimension_numbers = #tpu.dot_dimension_numbers<[1], [0], [0], [1], [0, 0, 1, 1], [], []>} : vector<8x432xbf16>, vector<432x128xbf16>, vector<8x128xf32> -> vector<8x128xf32>
    %c0_3 = arith.constant 0 : index
    %c0_4 = arith.constant 0 : index
    %3 = vector.load %arg3[%c0_3, %c0_4] : memref<8x1xf32, #tpu.memory_space<vmem>>, vector<8x1xf32>
    %4 = vector.broadcast %3 : vector<8x1xf32> to vector<8x128xf32>
    %5 = arith.addf %2, %4 : vector<8x128xf32>
    %6 = arith.truncf %5 : vector<8x128xf32> to vector<8x128xbf16>
    %c0_5 = arith.constant 0 : index
    %c0_6 = arith.constant 0 : index
    %7 = vector.load %arg4[%c0_5, %c0_6] : memref<8x128xbf16, #tpu.memory_space<vmem>>, vector<8x128xbf16>
    tpu.vector_store %arg4[%c0_5, %c0_6], %6 {strides = array<i32>} : memref<8x128xbf16, #tpu.memory_space<vmem>>, vector<8x128xbf16>,
    return
  }
  func.func @transform_0(%arg0: i32) -> (i32, i32) {
    %c0_i32 = arith.constant 0 : i32
    %c0_i32_0 = arith.constant 0 : i32
    %c0_i32_1 = arith.constant 0 : i32
    return %c0_i32, %c0_i32_0 : i32, i32
  }
  func.func @transform_1(%arg0: i32) -> (i32, i32) {
    %c0_i32 = arith.constant 0 : i32
    %c0_i32_0 = arith.constant 0 : i32
    return %c0_i32, %arg0 : i32, i32
  }
  func.func @transform_2(%arg0: i32) -> (i32, i32) {
    %c0_i32 = arith.constant 0 : i32
    %c0_i32_0 = arith.constant 0 : i32
    %c0_i32_1 = arith.constant 0 : i32
    return %c0_i32, %c0_i32_0 : i32, i32
  }
  func.func @transform_3(%arg0: i32) -> (i32, i32) {
    %c0_i32 = arith.constant 0 : i32
    %c0_i32_0 = arith.constant 0 : i32
    return %c0_i32, %arg0 : i32, i32
  }
}

module attributes {stable_mosaic.version = 11 : i64} {
  func.func @_matmul_bias_act_kernel(%arg0: i32, %arg1: memref<16x27xbf16, #tpu.memory_space<vmem>>, %arg2: memref<27x128xbf16, #tpu.memory_space<vmem>>, %arg3: memref<16x1xf32, #tpu.memory_space<vmem>>, %arg4: memref<16x128xbf16, #tpu.memory_space<vmem>>) attributes {dimension_semantics = [#tpu.dimension_semantics<parallel>], iteration_bounds = array<i64: 1>, scalar_prefetch = 0 : i64, scratch_operands = 0 : i64, tpu.core_type = #tpu.core_type<tc>, window_params = [{pipeline_mode = #tpu.pipeline_mode<synchronous>, transform_indices = @transform_0, window_bounds = array<i64: 16, 27>}, {transform_indices = @transform_1, window_bounds = array<i64: 27, 128>}, {pipeline_mode = #tpu.pipeline_mode<synchronous>, transform_indices = @transform_2, window_bounds = array<i64: 16, 1>}, {transform_indices = @transform_3, window_bounds = array<i64: 16, 128>}]} {
    %c0 = arith.constant 0 : index
    %c0_0 = arith.constant 0 : index
    %0 = vector.load %arg1[%c0, %c0_0] : memref<16x27xbf16, #tpu.memory_space<vmem>>, vector<16x27xbf16>
    %c0_1 = arith.constant 0 : index
    %c0_2 = arith.constant 0 : index
    %1 = vector.load %arg2[%c0_1, %c0_2] : memref<27x128xbf16, #tpu.memory_space<vmem>>, vector<27x128xbf16>
    %cst = arith.constant dense<0.000000e+00> : vector<16x128xf32>
    %2 = tpu.matmul %0, %1, %cst {dimension_numbers = #tpu.dot_dimension_numbers<[1], [0], [0], [1], [0, 0, 1, 1], [], []>} : vector<16x27xbf16>, vector<27x128xbf16>, vector<16x128xf32> -> vector<16x128xf32>
    %c0_3 = arith.constant 0 : index
    %c0_4 = arith.constant 0 : index
    %3 = vector.load %arg3[%c0_3, %c0_4] : memref<16x1xf32, #tpu.memory_space<vmem>>, vector<16x1xf32>
    %4 = vector.broadcast %3 : vector<16x1xf32> to vector<16x128xf32>
    %5 = arith.addf %2, %4 : vector<16x128xf32>
    %cst_5 = arith.constant 0.000000e+00 : f32
    %6 = vector.broadcast %cst_5 : f32 to vector<16x128xf32>
    %7 = arith.subf %6, %5 : vector<16x128xf32>
    %8 = math.exp %7 : vector<16x128xf32>
    %cst_6 = arith.constant 1.000000e+00 : f32
    %9 = vector.broadcast %cst_6 : f32 to vector<16x128xf32>
    %10 = arith.addf %9, %8 : vector<16x128xf32>
    %cst_7 = arith.constant 1.000000e+00 : f32
    %11 = vector.broadcast %cst_7 : f32 to vector<16x128xf32>
    %12 = arith.divf %11, %10 : vector<16x128xf32>
    %13 = arith.mulf %5, %12 : vector<16x128xf32>
    %14 = arith.truncf %13 : vector<16x128xf32> to vector<16x128xbf16>
    %c0_8 = arith.constant 0 : index
    %c0_9 = arith.constant 0 : index
    %15 = vector.load %arg4[%c0_8, %c0_9] : memref<16x128xbf16, #tpu.memory_space<vmem>>, vector<16x128xbf16>
    tpu.vector_store %arg4[%c0_8, %c0_9], %14 {strides = array<i32>} : memref<16x128xbf16, #tpu.memory_space<vmem>>, vector<16x128xbf16>,
    return
  }
  func.func @transform_0(%arg0: i32) -> (i32, i32) {
    %c0_i32 = arith.constant 0 : i32
    %c0_i32_0 = arith.constant 0 : i32
    %c0_i32_1 = arith.constant 0 : i32
    return %c0_i32, %c0_i32_0 : i32, i32
  }
  func.func @transform_1(%arg0: i32) -> (i32, i32) {
    %c0_i32 = arith.constant 0 : i32
    %c0_i32_0 = arith.constant 0 : i32
    return %c0_i32, %arg0 : i32, i32
  }
  func.func @transform_2(%arg0: i32) -> (i32, i32) {
    %c0_i32 = arith.constant 0 : i32
    %c0_i32_0 = arith.constant 0 : i32
    %c0_i32_1 = arith.constant 0 : i32
    return %c0_i32, %c0_i32_0 : i32, i32
  }
  func.func @transform_3(%arg0: i32) -> (i32, i32) {
    %c0_i32 = arith.constant 0 : i32
    %c0_i32_0 = arith.constant 0 : i32
    return %c0_i32, %arg0 : i32, i32
  }
}

module attributes {stable_mosaic.version = 11 : i64} {
  func.func @_matmul_bias_act_kernel(%arg0: i32, %arg1: memref<64x432xbf16, #tpu.memory_space<vmem>>, %arg2: memref<432x128xbf16, #tpu.memory_space<vmem>>, %arg3: memref<64x1xf32, #tpu.memory_space<vmem>>, %arg4: memref<64x128xbf16, #tpu.memory_space<vmem>>) attributes {dimension_semantics = [#tpu.dimension_semantics<parallel>], iteration_bounds = array<i64: 1>, scalar_prefetch = 0 : i64, scratch_operands = 0 : i64, tpu.core_type = #tpu.core_type<tc>, window_params = [{pipeline_mode = #tpu.pipeline_mode<synchronous>, transform_indices = @transform_0, window_bounds = array<i64: 64, 432>}, {transform_indices = @transform_1, window_bounds = array<i64: 432, 128>}, {pipeline_mode = #tpu.pipeline_mode<synchronous>, transform_indices = @transform_2, window_bounds = array<i64: 64, 1>}, {transform_indices = @transform_3, window_bounds = array<i64: 64, 128>}]} {
    %c0 = arith.constant 0 : index
    %c0_0 = arith.constant 0 : index
    %0 = vector.load %arg1[%c0, %c0_0] : memref<64x432xbf16, #tpu.memory_space<vmem>>, vector<64x432xbf16>
    %c0_1 = arith.constant 0 : index
    %c0_2 = arith.constant 0 : index
    %1 = vector.load %arg2[%c0_1, %c0_2] : memref<432x128xbf16, #tpu.memory_space<vmem>>, vector<432x128xbf16>
    %cst = arith.constant dense<0.000000e+00> : vector<64x128xf32>
    %2 = tpu.matmul %0, %1, %cst {dimension_numbers = #tpu.dot_dimension_numbers<[1], [0], [0], [1], [0, 0, 1, 1], [], []>} : vector<64x432xbf16>, vector<432x128xbf16>, vector<64x128xf32> -> vector<64x128xf32>
    %c0_3 = arith.constant 0 : index
    %c0_4 = arith.constant 0 : index
    %3 = vector.load %arg3[%c0_3, %c0_4] : memref<64x1xf32, #tpu.memory_space<vmem>>, vector<64x1xf32>
    %4 = vector.broadcast %3 : vector<64x1xf32> to vector<64x128xf32>
    %5 = arith.addf %2, %4 : vector<64x128xf32>
    %6 = arith.truncf %5 : vector<64x128xf32> to vector<64x128xbf16>
    %c0_5 = arith.constant 0 : index
    %c0_6 = arith.constant 0 : index
    %7 = vector.load %arg4[%c0_5, %c0_6] : memref<64x128xbf16, #tpu.memory_space<vmem>>, vector<64x128xbf16>
    tpu.vector_store %arg4[%c0_5, %c0_6], %6 {strides = array<i32>} : memref<64x128xbf16, #tpu.memory_space<vmem>>, vector<64x128xbf16>,
    return
  }
  func.func @transform_0(%arg0: i32) -> (i32, i32) {
    %c0_i32 = arith.constant 0 : i32
    %c0_i32_0 = arith.constant 0 : i32
    %c0_i32_1 = arith.constant 0 : i32
    return %c0_i32, %c0_i32_0 : i32, i32
  }
  func.func @transform_1(%arg0: i32) -> (i32, i32) {
    %c0_i32 = arith.constant 0 : i32
    %c0_i32_0 = arith.constant 0 : i32
    return %c0_i32, %arg0 : i32, i32
  }
  func.func @transform_2(%arg0: i32) -> (i32, i32) {
    %c0_i32 = arith.constant 0 : i32
    %c0_i32_0 = arith.constant 0 : i32
    %c0_i32_1 = arith.constant 0 : i32
    return %c0_i32, %c0_i32_0 : i32, i32
  }
  func.func @transform_3(%arg0: i32) -> (i32, i32) {
    %c0_i32 = arith.constant 0 : i32
    %c0_i32_0 = arith.constant 0 : i32
    return %c0_i32, %arg0 : i32, i32
  }
}

module attributes {stable_mosaic.version = 11 : i64} {
  func.func @_matmul_bias_act_kernel(%arg0: i32, %arg1: memref<8x432xbf16, #tpu.memory_space<vmem>>, %arg2: memref<432x256xbf16, #tpu.memory_space<vmem>>, %arg3: memref<8x1xf32, #tpu.memory_space<vmem>>, %arg4: memref<8x256xbf16, #tpu.memory_space<vmem>>) attributes {dimension_semantics = [#tpu.dimension_semantics<parallel>], iteration_bounds = array<i64: 2>, scalar_prefetch = 0 : i64, scratch_operands = 0 : i64, tpu.core_type = #tpu.core_type<tc>, window_params = [{pipeline_mode = #tpu.pipeline_mode<synchronous>, transform_indices = @transform_0, window_bounds = array<i64: 8, 432>}, {transform_indices = @transform_1, window_bounds = array<i64: 432, 256>}, {pipeline_mode = #tpu.pipeline_mode<synchronous>, transform_indices = @transform_2, window_bounds = array<i64: 8, 1>}, {transform_indices = @transform_3, window_bounds = array<i64: 8, 256>}]} {
    %c0 = arith.constant 0 : index
    %c0_0 = arith.constant 0 : index
    %0 = vector.load %arg1[%c0, %c0_0] : memref<8x432xbf16, #tpu.memory_space<vmem>>, vector<8x432xbf16>
    %c0_1 = arith.constant 0 : index
    %c0_2 = arith.constant 0 : index
    %1 = vector.load %arg2[%c0_1, %c0_2] : memref<432x256xbf16, #tpu.memory_space<vmem>>, vector<432x256xbf16>
    %cst = arith.constant dense<0.000000e+00> : vector<8x256xf32>
    %2 = tpu.matmul %0, %1, %cst {dimension_numbers = #tpu.dot_dimension_numbers<[1], [0], [0], [1], [0, 0, 1, 1], [], []>} : vector<8x432xbf16>, vector<432x256xbf16>, vector<8x256xf32> -> vector<8x256xf32>
    %c0_3 = arith.constant 0 : index
    %c0_4 = arith.constant 0 : index
    %3 = vector.load %arg3[%c0_3, %c0_4] : memref<8x1xf32, #tpu.memory_space<vmem>>, vector<8x1xf32>
    %4 = vector.broadcast %3 : vector<8x1xf32> to vector<8x256xf32>
    %5 = arith.addf %2, %4 : vector<8x256xf32>
    %cst_5 = arith.constant 0.000000e+00 : f32
    %6 = vector.broadcast %cst_5 : f32 to vector<8x256xf32>
    %7 = arith.subf %6, %5 : vector<8x256xf32>
    %8 = math.exp %7 : vector<8x256xf32>
    %cst_6 = arith.constant 1.000000e+00 : f32
    %9 = vector.broadcast %cst_6 : f32 to vector<8x256xf32>
    %10 = arith.addf %9, %8 : vector<8x256xf32>
    %cst_7 = arith.constant 1.000000e+00 : f32
    %11 = vector.broadcast %cst_7 : f32 to vector<8x256xf32>
    %12 = arith.divf %11, %10 : vector<8x256xf32>
    %13 = arith.mulf %5, %12 : vector<8x256xf32>
    %14 = arith.truncf %13 : vector<8x256xf32> to vector<8x256xbf16>
    %c0_8 = arith.constant 0 : index
    %c0_9 = arith.constant 0 : index
    %15 = vector.load %arg4[%c0_8, %c0_9] : memref<8x256xbf16, #tpu.memory_space<vmem>>, vector<8x256xbf16>
    tpu.vector_store %arg4[%c0_8, %c0_9], %14 {strides = array<i32>} : memref<8x256xbf16, #tpu.memory_space<vmem>>, vector<8x256xbf16>,
    return
  }
  func.func @transform_0(%arg0: i32) -> (i32, i32) {
    %c0_i32 = arith.constant 0 : i32
    %c0_i32_0 = arith.constant 0 : i32
    %c0_i32_1 = arith.constant 0 : i32
    return %c0_i32, %c0_i32_0 : i32, i32
  }
  func.func @transform_1(%arg0: i32) -> (i32, i32) {
    %c0_i32 = arith.constant 0 : i32
    %c0_i32_0 = arith.constant 0 : i32
    return %c0_i32, %arg0 : i32, i32
  }
  func.func @transform_2(%arg0: i32) -> (i32, i32) {
    %c0_i32 = arith.constant 0 : i32
    %c0_i32_0 = arith.constant 0 : i32
    %c0_i32_1 = arith.constant 0 : i32
    return %c0_i32, %c0_i32_0 : i32, i32
  }
  func.func @transform_3(%arg0: i32) -> (i32, i32) {
    %c0_i32 = arith.constant 0 : i32
    %c0_i32_0 = arith.constant 0 : i32
    return %c0_i32, %arg0 : i32, i32
  }
}

module attributes {stable_mosaic.version = 11 : i64} {
  func.func @_matmul_bias_act_kernel(%arg0: i32, %arg1: memref<32x216xbf16, #tpu.memory_space<vmem>>, %arg2: memref<216x256xbf16, #tpu.memory_space<vmem>>, %arg3: memref<32x1xf32, #tpu.memory_space<vmem>>, %arg4: memref<32x256xbf16, #tpu.memory_space<vmem>>) attributes {dimension_semantics = [#tpu.dimension_semantics<parallel>], iteration_bounds = array<i64: 2>, scalar_prefetch = 0 : i64, scratch_operands = 0 : i64, tpu.core_type = #tpu.core_type<tc>, window_params = [{pipeline_mode = #tpu.pipeline_mode<synchronous>, transform_indices = @transform_0, window_bounds = array<i64: 32, 216>}, {transform_indices = @transform_1, window_bounds = array<i64: 216, 256>}, {pipeline_mode = #tpu.pipeline_mode<synchronous>, transform_indices = @transform_2, window_bounds = array<i64: 32, 1>}, {transform_indices = @transform_3, window_bounds = array<i64: 32, 256>}]} {
    %c0 = arith.constant 0 : index
    %c0_0 = arith.constant 0 : index
    %0 = vector.load %arg1[%c0, %c0_0] : memref<32x216xbf16, #tpu.memory_space<vmem>>, vector<32x216xbf16>
    %c0_1 = arith.constant 0 : index
    %c0_2 = arith.constant 0 : index
    %1 = vector.load %arg2[%c0_1, %c0_2] : memref<216x256xbf16, #tpu.memory_space<vmem>>, vector<216x256xbf16>
    %cst = arith.constant dense<0.000000e+00> : vector<32x256xf32>
    %2 = tpu.matmul %0, %1, %cst {dimension_numbers = #tpu.dot_dimension_numbers<[1], [0], [0], [1], [0, 0, 1, 1], [], []>} : vector<32x216xbf16>, vector<216x256xbf16>, vector<32x256xf32> -> vector<32x256xf32>
    %c0_3 = arith.constant 0 : index
    %c0_4 = arith.constant 0 : index
    %3 = vector.load %arg3[%c0_3, %c0_4] : memref<32x1xf32, #tpu.memory_space<vmem>>, vector<32x1xf32>
    %4 = vector.broadcast %3 : vector<32x1xf32> to vector<32x256xf32>
    %5 = arith.addf %2, %4 : vector<32x256xf32>
    %6 = arith.truncf %5 : vector<32x256xf32> to vector<32x256xbf16>
    %c0_5 = arith.constant 0 : index
    %c0_6 = arith.constant 0 : index
    %7 = vector.load %arg4[%c0_5, %c0_6] : memref<32x256xbf16, #tpu.memory_space<vmem>>, vector<32x256xbf16>
    tpu.vector_store %arg4[%c0_5, %c0_6], %6 {strides = array<i32>} : memref<32x256xbf16, #tpu.memory_space<vmem>>, vector<32x256xbf16>,
    return
  }
  func.func @transform_0(%arg0: i32) -> (i32, i32) {
    %c0_i32 = arith.constant 0 : i32
    %c0_i32_0 = arith.constant 0 : i32
    %c0_i32_1 = arith.constant 0 : i32
    return %c0_i32, %c0_i32_0 : i32, i32
  }
  func.func @transform_1(%arg0: i32) -> (i32, i32) {
    %c0_i32 = arith.constant 0 : i32
    %c0_i32_0 = arith.constant 0 : i32
    return %c0_i32, %arg0 : i32, i32
  }
  func.func @transform_2(%arg0: i32) -> (i32, i32) {
    %c0_i32 = arith.constant 0 : i32
    %c0_i32_0 = arith.constant 0 : i32
    %c0_i32_1 = arith.constant 0 : i32
    return %c0_i32, %c0_i32_0 : i32, i32
  }
  func.func @transform_3(%arg0: i32) -> (i32, i32) {
    %c0_i32 = arith.constant 0 : i32
    %c0_i32_0 = arith.constant 0 : i32
    return %c0_i32, %arg0 : i32, i32
  }
}

module attributes {stable_mosaic.version = 11 : i64} {
  func.func @_matmul_bias_act_kernel(%arg0: i32, %arg1: memref<8x216xbf16, #tpu.memory_space<vmem>>, %arg2: memref<216x1024xbf16, #tpu.memory_space<vmem>>, %arg3: memref<8x1xf32, #tpu.memory_space<vmem>>, %arg4: memref<8x1024xbf16, #tpu.memory_space<vmem>>) attributes {dimension_semantics = [#tpu.dimension_semantics<parallel>], iteration_bounds = array<i64: 2>, scalar_prefetch = 0 : i64, scratch_operands = 0 : i64, tpu.core_type = #tpu.core_type<tc>, window_params = [{pipeline_mode = #tpu.pipeline_mode<synchronous>, transform_indices = @transform_0, window_bounds = array<i64: 8, 216>}, {transform_indices = @transform_1, window_bounds = array<i64: 216, 1024>}, {pipeline_mode = #tpu.pipeline_mode<synchronous>, transform_indices = @transform_2, window_bounds = array<i64: 8, 1>}, {transform_indices = @transform_3, window_bounds = array<i64: 8, 1024>}]} {
    %c0 = arith.constant 0 : index
    %c0_0 = arith.constant 0 : index
    %0 = vector.load %arg1[%c0, %c0_0] : memref<8x216xbf16, #tpu.memory_space<vmem>>, vector<8x216xbf16>
    %c0_1 = arith.constant 0 : index
    %c0_2 = arith.constant 0 : index
    %1 = vector.load %arg2[%c0_1, %c0_2] : memref<216x1024xbf16, #tpu.memory_space<vmem>>, vector<216x1024xbf16>
    %cst = arith.constant dense<0.000000e+00> : vector<8x1024xf32>
    %2 = tpu.matmul %0, %1, %cst {dimension_numbers = #tpu.dot_dimension_numbers<[1], [0], [0], [1], [0, 0, 1, 1], [], []>} : vector<8x216xbf16>, vector<216x1024xbf16>, vector<8x1024xf32> -> vector<8x1024xf32>
    %c0_3 = arith.constant 0 : index
    %c0_4 = arith.constant 0 : index
    %3 = vector.load %arg3[%c0_3, %c0_4] : memref<8x1xf32, #tpu.memory_space<vmem>>, vector<8x1xf32>
    %4 = vector.broadcast %3 : vector<8x1xf32> to vector<8x1024xf32>
    %5 = arith.addf %2, %4 : vector<8x1024xf32>
    %6 = arith.truncf %5 : vector<8x1024xf32> to vector<8x1024xbf16>
    %c0_5 = arith.constant 0 : index
    %c0_6 = arith.constant 0 : index
    %7 = vector.load %arg4[%c0_5, %c0_6] : memref<8x1024xbf16, #tpu.memory_space<vmem>>, vector<8x1024xbf16>
    tpu.vector_store %arg4[%c0_5, %c0_6], %6 {strides = array<i32>} : memref<8x1024xbf16, #tpu.memory_space<vmem>>, vector<8x1024xbf16>,
    return
  }
  func.func @transform_0(%arg0: i32) -> (i32, i32) {
    %c0_i32 = arith.constant 0 : i32
    %c0_i32_0 = arith.constant 0 : i32
    %c0_i32_1 = arith.constant 0 : i32
    return %c0_i32, %c0_i32_0 : i32, i32
  }
  func.func @transform_1(%arg0: i32) -> (i32, i32) {
    %c0_i32 = arith.constant 0 : i32
    %c0_i32_0 = arith.constant 0 : i32
    return %c0_i32, %arg0 : i32, i32
  }
  func.func @transform_2(%arg0: i32) -> (i32, i32) {
    %c0_i32 = arith.constant 0 : i32
    %c0_i32_0 = arith.constant 0 : i32
    %c0_i32_1 = arith.constant 0 : i32
    return %c0_i32, %c0_i32_0 : i32, i32
  }
  func.func @transform_3(%arg0: i32) -> (i32, i32) {
    %c0_i32 = arith.constant 0 : i32
    %c0_i32_0 = arith.constant 0 : i32
    return %c0_i32, %arg0 : i32, i32
  }
}

</mosaic_0001>

<llo_original>
// kernel: calo_ae_forward.8
$region0: #{calo_ae_forward.8}
  #allocation0 [shape = 'u32[]', space=smem, size = 0x4, offset = 0x4, fixed_abs, tag = 'smem constant byte address 0x4 - core index']
  #allocation1 [shape = 'u32[72,128]{1,0:T(1,128)}', space=vmem, size = 0x9000, scoped, tag = 'internal scratch']
  %s0 = inlined_call_operand.hbm [shape: bf16[8,27], index: 0, kind: input, shape index: {}]
  %s1 = inlined_call_operand.vmem [shape: bf16[27,2048], index: 1, kind: input, shape index: {}]
  %s2 = inlined_call_operand.vmem [shape: f32[8,1], index: 2, kind: input, shape index: {}]
  %s3 = inlined_call_operand.vmem [shape: bf16[8,2048], index: 3, kind: output, shape index: {}]
  %s4 = sld [smem:[#allocation0]]
  $region72: #{calo_ae_forward.8} parent=0
    _
  %s6 = ssub.s32 1, %s4
  %s7 = scalar_select 0, %s6, %s4
  $region1: #{calo_ae_forward.8} parent=0
    #allocation2 [shape = 'u8[2048]{0}', space=vmem, size = 0x800, scoped, tag = 'input window, operand 0, single buffered']
    #allocation3 [shape = 's32[2]{0}', space=sflag, size = 0x8, scoped, tag = 'scoped memory for calo_ae_forward.8']
    #allocation4 [shape = 'u8[131072]{0}', space=vmem, size = 0x20000, scoped, tag = 'input window, operand 1']
    %8 = vsyncpa [#allocation3], 0
    loop: start=0, step=1, limit=4
    $region2: #{calo_ae_forward.8} parent=1 // loop_pre_header
      _
    $region3: #{calo_ae_forward.8} parent=1 // loop_header
      %s10 = sphi 0, %s14
      %p11 = scmp.ge.s32.totalorder %s10, 4
      %s18 = sphi 0, %s18
      %s20 = sphi 0, %s18
      %s21 = sphi 0, %s20
      %s35 = sphi 0, %s21
      %s41 = sphi 0, %s43
      %s44 = sphi 0, %s41
      %s45 = sphi 0, %s44
      %s61 = sphi 0, %s45
      %s65 = sphi 0, %s65
      %s67 = sphi 0, %s65
      %s68 = sphi 0, %s67
      %s82 = sphi 0, %s68
      %s88 = sphi 0, %s90
      %s91 = sphi 0, %s88
      %s92 = sphi 0, %s91
      %s108 = sphi 0, %s92
    $region4: #{calo_ae_forward.8} parent=1 // loop_header_branch
      %13 = sbr.rel (%p11) target = $region8
    $region5: #{calo_ae_forward.8} parent=1 // loop_body
      %s15 = ssub.s32 %s10, 1
      %s16 = ssub.s32 %s10, 2
      %s17 = sadd.s32 %s10, 1
      %s19 = sadd.s32 %s18, 1
      %p22 = scmp.eq.s32.totalorder %s10, 1
      %p23 = scmp.ne.s32.totalorder %s18, %s20
      %p24 = scmp.eq.s32.totalorder %s10, 0
      %p25 = por %p23, %p24
      %p26 = scmp.ne.s32.totalorder %s18, %s20
      %p27 = scmp.eq.s32.totalorder %s15, 1
      %p28 = por %p26, %p27
      %p29 = scmp.ne.s32.totalorder %s20, %s21
      %p30 = scmp.eq.s32.totalorder %s15, 0
      %p31 = por %p29, %p30
      %p32 = scmp.ne.s32.totalorder %s20, %s21
      %p33 = scmp.eq.s32.totalorder %s16, 1
      %p34 = por %p32, %p33
      %p36 = scmp.ne.s32.totalorder %s21, %s35
      %p37 = scmp.eq.s32.totalorder %s16, 0
      %p38 = por %p36, %p37
      %s39 = ssub.s32 %s10, %s17
      %p40 = scmp.eq.s32.totalorder %s39, 0
      %s42 = sadd.s32 %s41, 1
      %s43 = scalar_select %p40, %s41, %s42
      %p46 = pneg %p40
      %p47 = scmp.eq.s32.totalorder %s10, 1
      %p48 = por %p46, %p47
      %p49 = scmp.ne.s32.totalorder %s41, %s44
      %p50 = scmp.eq.s32.totalorder %s10, 0
      %p51 = por %p49, %p50
      %p52 = scmp.ne.s32.totalorder %s41, %s44
      %p53 = scmp.eq.s32.totalorder %s15, 1
      %p54 = por %p52, %p53
      %p55 = scmp.ne.s32.totalorder %s44, %s45
      %p56 = scmp.eq.s32.totalorder %s15, 0
      %p57 = por %p55, %p56
      %p58 = scmp.ne.s32.totalorder %s44, %s45
      %p59 = scmp.eq.s32.totalorder %s16, 1
      %p60 = por %p58, %p59
      %p62 = scmp.ne.s32.totalorder %s45, %s61
      %p63 = scmp.eq.s32.totalorder %s16, 0
      %p64 = por %p62, %p63
      %s66 = sadd.s32 %s65, 1
      %p69 = scmp.eq.s32.totalorder %s10, 1
      %p70 = scmp.ne.s32.totalorder %s65, %s67
      %p71 = scmp.eq.s32.totalorder %s10, 0
      %p72 = por %p70, %p71
      %p73 = scmp.ne.s32.totalorder %s65, %s67
      %p74 = scmp.eq.s32.totalorder %s15, 1
      %p75 = por %p73, %p74
      %p76 = scmp.ne.s32.totalorder %s67, %s68
      %p77 = scmp.eq.s32.totalorder %s15, 0
      %p78 = por %p76, %p77
      %p79 = scmp.ne.s32.totalorder %s67, %s68
      %p80 = scmp.eq.s32.totalorder %s16, 1
      %p81 = por %p79, %p80
      %p83 = scmp.ne.s32.totalorder %s68, %s82
      %p84 = scmp.eq.s32.totalorder %s16, 0
      %p85 = por %p83, %p84
      %s86 = ssub.s32 %s10, %s17
      %p87 = scmp.eq.s32.totalorder %s86, 0
      %s89 = sadd.s32 %s88, 1
      %s90 = scalar_select %p87, %s88, %s89
      %p93 = pneg %p87
      %p94 = scmp.eq.s32.totalorder %s10, 1
      %p95 = por %p93, %p94
      %p96 = scmp.ne.s32.totalorder %s88, %s91
      %p97 = scmp.eq.s32.totalorder %s10, 0
      %p98 = por %p96, %p97
      %p99 = scmp.ne.s32.totalorder %s88, %s91
      %p100 = scmp.eq.s32.totalorder %s15, 1
      %p101 = por %p99, %p100
      %p102 = scmp.ne.s32.totalorder %s91, %s92
      %p103 = scmp.eq.s32.totalorder %s15, 0
      %p104 = por %p102, %p103
      %p105 = scmp.ne.s32.totalorder %s91, %s92
      %p106 = scmp.eq.s32.totalorder %s16, 1
      %p107 = por %p105, %p106
      %p109 = scmp.ne.s32.totalorder %s92, %s108
      %p110 = scmp.eq.s32.totalorder %s16, 0
      %p111 = por %p109, %p110
      %p112 = scmp.le.s32.totalorder 1, %s10
      %p113 = scmp.lt.s32.totalorder %s10, 3
      %p114 = pnand %p112, %p113
      %p115 = pneg %p114
      // Predicated region
      $region9: #{calo_ae_forward.8} parent=5 // pred_check
        _
      $region10: #{calo_ae_forward.8} parent=5 // pred_check_branch
        %117 = sbr.rel (%p114) target = $region12
      $region11: #{calo_ae_forward.8} parent=5 // pred_region
        %s118 = ssub.s32 %s10, 1
        // Predicated region
        $region13: #{calo_ae_forward.8} parent=11 // pred_check
          %p119 = pneg %p31
        $region14: #{calo_ae_forward.8} parent=11 // pred_check_branch
          %121 = sbr.rel (%p119) target = $region16
        $region15: #{calo_ae_forward.8} parent=11 // pred_region
          %123 = vsyncadd [#allocation3], 0
          %s125 = sshll.u32 %s0, 4
          %s126 = int_to_ptr.hbm [resolvable:$true] %s125
          %s127 = sshll.u32 [#allocation2], 4
          %s128 = int_to_ptr.vmem [resolvable:$true] %s127
          %130 = dma.hbm_to_vmem [thread:$0]  %s126, 64, %s128, [#allocation3]
        $region16: #{calo_ae_forward.8} parent=11 // pred_fallthru
          _
        // Predicated region
        $region17: #{calo_ae_forward.8} parent=11 // pred_check
          %p131 = pneg %p78
        $region18: #{calo_ae_forward.8} parent=11 // pred_check_branch
          %133 = sbr.rel (%p131) target = $region20
        $region19: #{calo_ae_forward.8} parent=11 // pred_region
          _
        $region20: #{calo_ae_forward.8} parent=11 // pred_fallthru
          _
      $region12: #{calo_ae_forward.8} parent=5 // pred_fallthru
        _
      %p134 = scmp.lt.s32.totalorder %s10, 2
      // Predicated region
      $region21: #{calo_ae_forward.8} parent=5 // pred_check
        %p135 = pneg %p134
      $region22: #{calo_ae_forward.8} parent=5 // pred_check_branch
        %137 = sbr.rel (%p135) target = $region24
      $region23: #{calo_ae_forward.8} parent=5 // pred_region
        // Predicated region
        $region25: #{calo_ae_forward.8} parent=23 // pred_check
          %p138 = pneg %p51
        $region26: #{calo_ae_forward.8} parent=23 // pred_check_branch
          %140 = sbr.rel (%p138) target = $region28
        $region27: #{calo_ae_forward.8} parent=23 // pred_region
          %s141 = sand.u32 %s41, 1
          %s142 = sand.u32 %s41, 1
          %s143 = smul.addr %s142, 128
          %s144 = scalar_lea.vmem [#allocation4], %s143
          %s145 = smul.u32 8, %s10
          %s146 = smul.addr %s145, 4
          %s147 = scalar_lea.vmem %s1, %s146
          // Predicated region
          $region29: #{calo_ae_forward.8} parent=27 // pred_check
            _
          $region30: #{calo_ae_forward.8} parent=27 // pred_check_branch
            %149 = sbr.rel (0) target = $region32
          $region31: #{calo_ae_forward.8} parent=27 // pred_region
            // Predicated region
            $region33: #{calo_ae_forward.8} parent=31 // pred_check
              _
            $region34: #{calo_ae_forward.8} parent=31 // pred_check_branch
              %151 = sbr.rel (0) target = $region36
            $region35: #{calo_ae_forward.8} parent=31 // pred_region
              loop: start=0, step=1, limit=1
              $region37: #{calo_ae_forward.8} parent=35 // loop_pre_header
                _
              $region38: #{calo_ae_forward.8} parent=35 // loop_header
                %s153 = sphi 0, %s157
                %p154 = scmp.ge.s32.totalorder %s153, 1
                %s158 = sphi %s147, %s147
                %s159 = sphi %s144, %s144
              $region39: #{calo_ae_forward.8} parent=35 // loop_header_branch
                %156 = sbr.rel (%p154) target = $region43
              $region40: #{calo_ae_forward.8} parent=35 // loop_body
                %v160 = vld [vmem:[%s158] sm:$0xff]
                %161 = vst [vmem:[%s159] sm:$0xff] %v160
                %v162 = vld [vmem:[%s158 + $0x8] sm:$0xff]
                %163 = vst [vmem:[%s159 + $0x8] sm:$0xff] %v162
                %v164 = vld [vmem:[%s158 + $0x10] sm:$0xff]
                %165 = vst [vmem:[%s159 + $0x10] sm:$0xff] %v164
                %v166 = vld [vmem:[%s158 + $0x18] sm:$0xff]
                %167 = vst [vmem:[%s159 + $0x18] sm:$0xff] %v166
                %v168 = vld [vmem:[%s158 + $0x40] sm:$0xff]
                %169 = vst [vmem:[%s159 + $0x20] sm:$0xff] %v168
                %v170 = vld [vmem:[%s158 + $0x48] sm:$0xff]
                %171 = vst [vmem:[%s159 + $0x28] sm:$0xff] %v170
                %v172 = vld [vmem:[%s158 + $0x50] sm:$0xff]
                %173 = vst [vmem:[%s159 + $0x30] sm:$0xff] %v172
                %v174 = vld [vmem:[%s158 + $0x58] sm:$0xff]
                %175 = vst [vmem:[%s159 + $0x38] sm:$0xff] %v174
                %v176 = vld [vmem:[%s158 + $0x80] sm:$0xff]
                %177 = vst [vmem:[%s159 + $0x40] sm:$0xff] %v176
                %v178 = vld [vmem:[%s158 + $0x88] sm:$0xff]
                %179 = vst [vmem:[%s159 + $0x48] sm:$0xff] %v178
                %v180 = vld [vmem:[%s158 + $0x90] sm:$0xff]
                %181 = vst [vmem:[%s159 + $0x50] sm:$0xff] %v180
                %v182 = vld [vmem:[%s158 + $0x98] sm:$0xff]
                %183 = vst [vmem:[%s159 + $0x58] sm:$0xff] %v182
                %v184 = vld [vmem:[%s158 + $0xc0] sm:$0xff]
                %185 = vst [vmem:[%s159 + $0x60] sm:$0xff] %v184
                %v186 = vld [vmem:[%s158 + $0xc8] sm:$0xff]
                %187 = vst [vmem:[%s159 + $0x68] sm:$0xff] %v186
                %v188 = vld [vmem:[%s158 + $0xd0] sm:$0xff]
                %189 = vst [vmem:[%s159 + $0x70] sm:$0xff] %v188
                %v190 = vld [vmem:[%s158 + $0xd8] sm:$0xff]
                %191 = vst [vmem:[%s159 + $0x78] sm:$0xff] %v190
              $region41: #{calo_ae_forward.8} parent=35 // loop_footer
                %s157 = sadd.s32 1, %s153
              $region42: #{calo_ae_forward.8} parent=35 // loop_footer_branch
                %152 = sbr.rel target = $region38
              $region43: #{calo_ae_forward.8} parent=35 // loop_exit
                _
            $region36: #{calo_ae_forward.8} parent=31 // pred_fallthru
              _
            // Predicated region
            $region44: #{calo_ae_forward.8} parent=31 // pred_check
              _
            $region45: #{calo_ae_forward.8} parent=31 // pred_check_branch
              %193 = sbr.rel target = $region47
            $region46: #{calo_ae_forward.8} parent=31 // pred_region
              _
            $region47: #{calo_ae_forward.8} parent=31 // pred_fallthru
              _
          $region32: #{calo_ae_forward.8} parent=27 // pred_fallthru
            _
          %194 = vnop
        $region28: #{calo_ae_forward.8} parent=23 // pred_fallthru
          _
      $region24: #{calo_ae_forward.8} parent=5 // pred_fallthru
        _
      %p195 = scmp.le.s32.totalorder 1, %s10
      %p196 = scmp.lt.s32.totalorder %s10, 3
      %p197 = pnand %p195, %p196
      %p198 = pneg %p197
      // Predicated region
      $region48: #{calo_ae_forward.8} parent=5 // pred_check
        _
      $region49: #{calo_ae_forward.8} parent=5 // pred_check_branch
        %200 = sbr.rel (%p197) target = $region51
      $region50: #{calo_ae_forward.8} parent=5 // pred_region
        %s201 = ssub.s32 %s10, 1
        // Predicated region
        $region52: #{calo_ae_forward.8} parent=50 // pred_check
          %p202 = pneg %p31
        $region53: #{calo_ae_forward.8} parent=50 // pred_check_branch
          %204 = sbr.rel (%p202) target = $region55
        $region54: #{calo_ae_forward.8} parent=50 // pred_region
          %206 = dma.done [#allocation3], 64
        $region55: #{calo_ae_forward.8} parent=50 // pred_fallthru
          _
        %s207 = sand.u32 %s44, 1
        %s208 = sand.u32 %s44, 1
        %s209 = smul.addr %s208, 128
        %s210 = scalar_lea.vmem [#allocation4], %s209
        // Predicated region
        $region56: #{calo_ae_forward.8} parent=50 // pred_check
          %p211 = pneg %p57
        $region57: #{calo_ae_forward.8} parent=50 // pred_check_branch
          %213 = sbr.rel (%p211) target = $region59
        $region58: #{calo_ae_forward.8} parent=50 // pred_region
          _
        $region59: #{calo_ae_forward.8} parent=50 // pred_fallthru
          _
        %p214 = pneg %p31
        %p215 = pneg %p28
        %s216 = sand.u32 %s44, 1
        %s217 = sand.u32 %s44, 1
        %s218 = smul.addr %s217, 128
        %s219 = scalar_lea.vmem [#allocation4], %s218
        %p220 = pneg %p57
        %p221 = pneg %p54
        %p222 = pneg %p78
        %p223 = pneg %p75
        %p224 = pneg %p104
        %p225 = pneg %p101
        %s226 = smul.u32 8, %s15
        %p227 = scmp.lt.s32.totalorder %s226, 15
        %s228 = scalar_select %p227, %s226, 15
        %s229 = smul.addr %s228, 4
        %s230 = scalar_lea.vmem %s3, %s229
        %s231 = smul.u32 8, %s15
        %s232 = smul.u32 8, %s15
        %p233 = scmp.lt.s32.totalorder %s232, 15
        %s234 = scalar_select %p233, %s232, 15
        %s235 = smul.addr %s234, 4
        %s236 = scalar_lea.vmem %s3, %s235
        %s237 = smul.u32 8, %s15
        %v239 = vld [vmem:[#allocation2] sm:$0xf]
        %v240 = vld [vmem:[%s210] sm:$0xff]
        %v241 = vld [vmem:[%s210 + $0x8] sm:$0xff]
        %v242 = vld [vmem:[%s210 + $0x10] sm:$0xff]
        %v243 = vld [vmem:[%s210 + $0x18] sm:$0xff]
        %v244 = vld [vmem:[%s210 + $0x20] sm:$0xff]
        %v245 = vld [vmem:[%s210 + $0x28] sm:$0xff]
        %v246 = vld [vmem:[%s210 + $0x30] sm:$0xff]
        %v247 = vld [vmem:[%s210 + $0x38] sm:$0xff]
        %v248 = vld [vmem:[%s210 + $0x40] sm:$0xff]
        %v249 = vld [vmem:[%s210 + $0x48] sm:$0xff]
        %v250 = vld [vmem:[%s210 + $0x50] sm:$0xff]
        %v251 = vld [vmem:[%s210 + $0x58] sm:$0xff]
        %v252 = vld [vmem:[%s210 + $0x60] sm:$0x33]
        %v253 = vld [vmem:[%s210 + $0x68] sm:$0x33]
        %v254 = vld [vmem:[%s210 + $0x70] sm:$0x33]
        %v255 = vld [vmem:[%s210 + $0x78] sm:$0x33]
        %v256 = vld [vmem:[%s2] sm:$0xff]
        %258 = vset.pattern.permute.xlu0 0
        %259 = vperm.xlu0 %258, %v256
        %v260 = vpop.permute.xlu0 %259
        %v278 = vunpack.c.l.b16 %v240
        %v279 = vunpack.c.h.b16 %v240
        %v280 = vunpack.c.l.b16 %v241
        %v281 = vunpack.c.h.b16 %v241
        %v282 = vunpack.c.l.b16 %v242
        %v283 = vunpack.c.h.b16 %v242
        %v284 = vunpack.c.l.b16 %v243
        %v285 = vunpack.c.h.b16 %v243
        %v286 = vunpack.c.l.b16 %v244
        %v287 = vunpack.c.h.b16 %v244
        %v288 = vunpack.c.l.b16 %v245
        %v289 = vunpack.c.h.b16 %v245
        %v290 = vunpack.c.l.b16 %v246
        %v291 = vunpack.c.h.b16 %v246
        %v292 = vunpack.c.l.b16 %v247
        %v293 = vunpack.c.h.b16 %v247
        %v294 = vunpack.c.l.b16 %v248
        %v295 = vunpack.c.h.b16 %v248
        %v296 = vunpack.c.l.b16 %v249
        %v297 = vunpack.c.h.b16 %v249
        %v298 = vunpack.c.l.b16 %v250
        %v299 = vunpack.c.h.b16 %v250
        %v300 = vunpack.c.l.b16 %v251
        %v301 = vunpack.c.h.b16 %v251
        %v302 = vunpack.c.l.b16 %v252
        %v303 = vunpack.c.h.b16 %v252
        %v304 = vunpack.c.l.b16 %v253
        %v305 = vunpack.c.h.b16 %v253
        %v306 = vunpack.c.l.b16 %v254
        %v307 = vunpack.c.h.b16 %v254
        %v308 = vunpack.c.l.b16 %v255
        %v309 = vunpack.c.h.b16 %v255
        %v310 = vpack.c.b16 %v286, %v278
        %v311 = vpack.c.b16 %v287, %v279
        %v312 = vpack.c.b16 %v288, %v280
        %v313 = vpack.c.b16 %v289, %v281
        %v314 = vpack.c.b16 %v290, %v282
        %v315 = vpack.c.b16 %v291, %v283
        %v316 = vpack.c.b16 %v292, %v284
        %v317 = vpack.c.b16 %v293, %v285
        %v318 = vpack.c.b16 %v302, %v294
        %v319 = vpack.c.b16 %v303, %v295
        %v320 = vpack.c.b16 %v304, %v296
        %v321 = vpack.c.b16 %v305, %v297
        %v322 = vpack.c.b16 %v306, %v298
        %v323 = vpack.c.b16 %v307, %v299
        %v324 = vpack.c.b16 %v308, %v300
        %v325 = vpack.c.b16 %v309, %v301
        %vm334 = vcmask 220160
        %v336 = vsel %vm334, %v239, 0
        %vm338 = vcmask 1044480
        %vm339 = vcmask 1045504
        %v340 = vsel %vm338, 4294967295, 65535
        %v341 = vsel %vm339, %v340, 0
        %v343 = vand.u32 %v318, %v341
        %v346 = vand.u32 %v319, %v341
        %v349 = vand.u32 %v320, %v341
        %v352 = vand.u32 %v321, %v341
        %v355 = vand.u32 %v322, %v341
        %v358 = vand.u32 %v323, %v341
        %v361 = vand.u32 %v324, %v341
        %v364 = vand.u32 %v325, %v341
        %366 = vmatpush.bf16.msra.mxu0 0
        %367 = vmatpush.bf16.msra.mxu0 0
        %368 = vmatpush.bf16.msra.mxu0 0
        %369 = vmatpush.bf16.msra.mxu0 0
        %370 = vmatpush.bf16.msra.mxu0 0
        %371 = vmatpush.bf16.msra.mxu0 0
        %372 = vmatpush.bf16.msra.mxu0 %v343
        %373 = vmatpush.bf16.msra.mxu0 %v310
        %374 = vmatmul.bf16.gmra.mxu0 %v336
        %v375 = vpop.f32.mrf.mxu0
        %v376 = vadd.f32 %v260, %v375
        %v377 = vpop.f32.mrf.mxu0
        %378 = vdwg.mxu0
        %379 = vmatpush.bf16.msra.mxu0 0
        %380 = vmatpush.bf16.msra.mxu0 0
        %381 = vmatpush.bf16.msra.mxu0 0
        %382 = vmatpush.bf16.msra.mxu0 0
        %383 = vmatpush.bf16.msra.mxu0 0
        %384 = vmatpush.bf16.msra.mxu0 0
        %385 = vmatpush.bf16.msra.mxu0 %v346
        %386 = vmatpush.bf16.msra.mxu0 %v311
        %387 = vmatmul.bf16.gmra.mxu0 %v336
        %v388 = vpop.f32.mrf.mxu0
        %v389 = vadd.f32 %v260, %v388
        %v390 = vpop.f32.mrf.mxu0
        %391 = vdwg.mxu0
        %392 = vmatpush.bf16.msra.mxu0 0
        %393 = vmatpush.bf16.msra.mxu0 0
        %394 = vmatpush.bf16.msra.mxu0 0
        %395 = vmatpush.bf16.msra.mxu0 0
        %396 = vmatpush.bf16.msra.mxu0 0
        %397 = vmatpush.bf16.msra.mxu0 0
        %398 = vmatpush.bf16.msra.mxu0 %v349
        %399 = vmatpush.bf16.msra.mxu0 %v312
        %400 = vmatmul.bf16.gmra.mxu0 %v336
        %v401 = vpop.f32.mrf.mxu0
        %v402 = vadd.f32 %v260, %v401
        %v403 = vpop.f32.mrf.mxu0
        %404 = vdwg.mxu0
        %405 = vmatpush.bf16.msra.mxu0 0
        %406 = vmatpush.bf16.msra.mxu0 0
        %407 = vmatpush.bf16.msra.mxu0 0
        %408 = vmatpush.bf16.msra.mxu0 0
        %409 = vmatpush.bf16.msra.mxu0 0
        %410 = vmatpush.bf16.msra.mxu0 0
        %411 = vmatpush.bf16.msra.mxu0 %v352
        %412 = vmatpush.bf16.msra.mxu0 %v313
        %413 = vmatmul.bf16.gmra.mxu0 %v336
        %v414 = vpop.f32.mrf.mxu0
        %v415 = vadd.f32 %v260, %v414
        %v416 = vpop.f32.mrf.mxu0
        %417 = vdwg.mxu0
        %418 = vmatpush.bf16.msra.mxu0 0
        %419 = vmatpush.bf16.msra.mxu0 0
        %420 = vmatpush.bf16.msra.mxu0 0
        %421 = vmatpush.bf16.msra.mxu0 0
        %422 = vmatpush.bf16.msra.mxu0 0
        %423 = vmatpush.bf16.msra.mxu0 0
        %424 = vmatpush.bf16.msra.mxu0 %v355
        %425 = vmatpush.bf16.msra.mxu0 %v314
        %426 = vmatmul.bf16.gmra.mxu0 %v336
        %v427 = vpop.f32.mrf.mxu0
        %v428 = vadd.f32 %v260, %v427
        %v429 = vpop.f32.mrf.mxu0
        %430 = vdwg.mxu0
        %431 = vmatpush.bf16.msra.mxu0 0
        %432 = vmatpush.bf16.msra.mxu0 0
        %433 = vmatpush.bf16.msra.mxu0 0
        %434 = vmatpush.bf16.msra.mxu0 0
        %435 = vmatpush.bf16.msra.mxu0 0
        %436 = vmatpush.bf16.msra.mxu0 0
        %437 = vmatpush.bf16.msra.mxu0 %v358
        %438 = vmatpush.bf16.msra.mxu0 %v315
        %439 = vmatmul.bf16.gmra.mxu0 %v336
        %v440 = vpop.f32.mrf.mxu0
        %v441 = vadd.f32 %v260, %v440
        %v442 = vpop.f32.mrf.mxu0
        %443 = vdwg.mxu0
        %444 = vmatpush.bf16.msra.mxu0 0
        %445 = vmatpush.bf16.msra.mxu0 0
        %446 = vmatpush.bf16.msra.mxu0 0
        %447 = vmatpush.bf16.msra.mxu0 0
        %448 = vmatpush.bf16.msra.mxu0 0
        %449 = vmatpush.bf16.msra.mxu0 0
        %450 = vmatpush.bf16.msra.mxu0 %v361
        %451 = vmatpush.bf16.msra.mxu0 %v316
        %452 = vmatmul.bf16.gmra.mxu0 %v336
        %v453 = vpop.f32.mrf.mxu0
        %v454 = vadd.f32 %v260, %v453
        %v455 = vpop.f32.mrf.mxu0
        %456 = vdwg.mxu0
        %457 = vmatpush.bf16.msra.mxu0 0
        %458 = vmatpush.bf16.msra.mxu0 0
        %459 = vmatpush.bf16.msra.mxu0 0
        %460 = vmatpush.bf16.msra.mxu0 0
        %461 = vmatpush.bf16.msra.mxu0 0
        %462 = vmatpush.bf16.msra.mxu0 0
        %463 = vmatpush.bf16.msra.mxu0 %v364
        %464 = vmatpush.bf16.msra.mxu0 %v317
        %465 = vmatmul.bf16.gmra.mxu0 %v336
        %v466 = vpop.f32.mrf.mxu0
        %v467 = vadd.f32 %v260, %v466
        %v468 = vpop.f32.mrf.mxu0
        %469 = vdwg.mxu0
        %v470 = vsub.f32 0.0, %v376
        %v471 = vsub.f32 0.0, %v389
        %v472 = vsub.f32 0.0, %v402
        %v473 = vsub.f32 0.0, %v415
        %v474 = vsub.f32 0.0, %v428
        %v475 = vsub.f32 0.0, %v441
        %v476 = vsub.f32 0.0, %v454
        %v477 = vsub.f32 0.0, %v467
        %v478 = vmul.f32 %v470, 1.442695
        %v479 = vpow.pop %v478
        %v480 = vmul.f32 %v471, 1.442695
        %v481 = vpow.pop %v480
        %v482 = vmul.f32 %v472, 1.442695
        %v483 = vpow.pop %v482
        %v484 = vmul.f32 %v473, 1.442695
        %v485 = vpow.pop %v484
        %v486 = vmul.f32 %v474, 1.442695
        %v487 = vpow.pop %v486
        %v488 = vmul.f32 %v475, 1.442695
        %v489 = vpow.pop %v488
        %v490 = vmul.f32 %v476, 1.442695
        %v491 = vpow.pop %v490
        %v492 = vmul.f32 %v477, 1.442695
        %v493 = vpow.pop %v492
        %v494 = vadd.f32 %v479, 1.0
        %v495 = vadd.f32 %v481, 1.0
        %v496 = vadd.f32 %v483, 1.0
        %v497 = vadd.f32 %v485, 1.0
        %v498 = vadd.f32 %v487, 1.0
        %v499 = vadd.f32 %v489, 1.0
        %v500 = vadd.f32 %v491, 1.0
        %v501 = vadd.f32 %v493, 1.0
        %v502 = vrcp.pop %v494
        %v503 = vmul.f32 %v494, %v502
        %v504 = vsub.f32 1.0, %v503
        %v505 = vmul.f32 %v502, %v504
        %v506 = vadd.f32 %v502, %v505
        %vm507 = vweird.f32 %v494
        %vm508 = vweird.f32 %v502
        %vm509 = vmor %vm507, %vm508
        %v510 = vsel %vm509, %v502, %v506
        %v511 = vand.u32 2147483647, %v494
        %vm512 = vcmp.eq.f32.partialorder %v511, 8.507059e+37
        %v513 = vand.u32 %v494, 2147483648
        %v514 = vor.u32 1.1754944e-38, %v513
        %v515 = vsel %vm512, %v514, %v510
        %v516 = vmul.f32 1.0, %v515
        %v517 = vrcp.pop %v495
        %v518 = vmul.f32 %v495, %v517
        %v519 = vsub.f32 1.0, %v518
        %v520 = vmul.f32 %v517, %v519
        %v521 = vadd.f32 %v517, %v520
        %vm522 = vweird.f32 %v495
        %vm523 = vweird.f32 %v517
        %vm524 = vmor %vm522, %vm523
        %v525 = vsel %vm524, %v517, %v521
        %v526 = vand.u32 2147483647, %v495
        %vm527 = vcmp.eq.f32.partialorder %v526, 8.507059e+37
        %v528 = vand.u32 %v495, 2147483648
        %v529 = vor.u32 1.1754944e-38, %v528
        %v530 = vsel %vm527, %v529, %v525
        %v531 = vmul.f32 1.0, %v530
        %v532 = vrcp.pop %v496
        %v533 = vmul.f32 %v496, %v532
        %v534 = vsub.f32 1.0, %v533
        %v535 = vmul.f32 %v532, %v534
        %v536 = vadd.f32 %v532, %v535
        %vm537 = vweird.f32 %v496
        %vm538 = vweird.f32 %v532
        %vm539 = vmor %vm537, %vm538
        %v540 = vsel %vm539, %v532, %v536
        %v541 = vand.u32 2147483647, %v496
        %vm542 = vcmp.eq.f32.partialorder %v541, 8.507059e+37
        %v543 = vand.u32 %v496, 2147483648
        %v544 = vor.u32 1.1754944e-38, %v543
        %v545 = vsel %vm542, %v544, %v540
        %v546 = vmul.f32 1.0, %v545
        %v547 = vrcp.pop %v497
        %v548 = vmul.f32 %v497, %v547
        %v549 = vsub.f32 1.0, %v548
        %v550 = vmul.f32 %v547, %v549
        %v551 = vadd.f32 %v547, %v550
        %vm552 = vweird.f32 %v497
        %vm553 = vweird.f32 %v547
        %vm554 = vmor %vm552, %vm553
        %v555 = vsel %vm554, %v547, %v551
        %v556 = vand.u32 2147483647, %v497
        %vm557 = vcmp.eq.f32.partialorder %v556, 8.507059e+37
        %v558 = vand.u32 %v497, 2147483648
        %v559 = vor.u32 1.1754944e-38, %v558
        %v560 = vsel %vm557, %v559, %v555
        %v561 = vmul.f32 1.0, %v560
        %v562 = vrcp.pop %v498
        %v563 = vmul.f32 %v498, %v562
        %v564 = vsub.f32 1.0, %v563
        %v565 = vmul.f32 %v562, %v564
        %v566 = vadd.f32 %v562, %v565
        %vm567 = vweird.f32 %v498
        %vm568 = vweird.f32 %v562
        %vm569 = vmor %vm567, %vm568
        %v570 = vsel %vm569, %v562, %v566
        %v571 = vand.u32 2147483647, %v498
        %vm572 = vcmp.eq.f32.partialorder %v571, 8.507059e+37
        %v573 = vand.u32 %v498, 2147483648
        %v574 = vor.u32 1.1754944e-38, %v573
        %v575 = vsel %vm572, %v574, %v570
        %v576 = vmul.f32 1.0, %v575
        %v577 = vrcp.pop %v499
        %v578 = vmul.f32 %v499, %v577
        %v579 = vsub.f32 1.0, %v578
        %v580 = vmul.f32 %v577, %v579
        %v581 = vadd.f32 %v577, %v580
        %vm582 = vweird.f32 %v499
        %vm583 = vweird.f32 %v577
        %vm584 = vmor %vm582, %vm583
        %v585 = vsel %vm584, %v577, %v581
        %v586 = vand.u32 2147483647, %v499
        %vm587 = vcmp.eq.f32.partialorder %v586, 8.507059e+37
        %v588 = vand.u32 %v499, 2147483648
        %v589 = vor.u32 1.1754944e-38, %v588
        %v590 = vsel %vm587, %v589, %v585
        %v591 = vmul.f32 1.0, %v590
        %v592 = vrcp.pop %v500
        %v593 = vmul.f32 %v500, %v592
        %v594 = vsub.f32 1.0, %v593
        %v595 = vmul.f32 %v592, %v594
        %v596 = vadd.f32 %v592, %v595
        %vm597 = vweird.f32 %v500
        %vm598 = vweird.f32 %v592
        %vm599 = vmor %vm597, %vm598
        %v600 = vsel %vm599, %v592, %v596
        %v601 = vand.u32 2147483647, %v500
        %vm602 = vcmp.eq.f32.partialorder %v601, 8.507059e+37
        %v603 = vand.u32 %v500, 2147483648
        %v604 = vor.u32 1.1754944e-38, %v603
        %v605 = vsel %vm602, %v604, %v600
        %v606 = vmul.f32 1.0, %v605
        %v607 = vrcp.pop %v501
        %v608 = vmul.f32 %v501, %v607
        %v609 = vsub.f32 1.0, %v608
        %v610 = vmul.f32 %v607, %v609
        %v611 = vadd.f32 %v607, %v610
        %vm612 = vweird.f32 %v501
        %vm613 = vweird.f32 %v607
        %vm614 = vmor %vm612, %vm613
        %v615 = vsel %vm614, %v607, %v611
        %v616 = vand.u32 2147483647, %v501
        %vm617 = vcmp.eq.f32.partialorder %v616, 8.507059e+37
        %v618 = vand.u32 %v501, 2147483648
        %v619 = vor.u32 1.1754944e-38, %v618
        %v620 = vsel %vm617, %v619, %v615
        %v621 = vmul.f32 1.0, %v620
        %v622 = vmul.f32 %v376, %v516
        %v623 = vmul.f32 %v389, %v531
        %v624 = vmul.f32 %v402, %v546
        %v625 = vmul.f32 %v415, %v561
        %v626 = vmul.f32 %v428, %v576
        %v627 = vmul.f32 %v441, %v591
        %v628 = vmul.f32 %v454, %v606
        %v629 = vmul.f32 %v467, %v621
        %v630 = vpack.c.bf16 %v623, %v622
        %v631 = vpack.c.bf16 %v625, %v624
        %v632 = vpack.c.bf16 %v627, %v626
        %v633 = vpack.c.bf16 %v629, %v628
        %634 = vst [vmem:[%s236] sm:$0xff] %v630
        %635 = vst [vmem:[%s236 + $0x8] sm:$0xff] %v631
        %636 = vst [vmem:[%s236 + $0x10] sm:$0xff] %v632
        %637 = vst [vmem:[%s236 + $0x18] sm:$0xff] %v633
        %s638 = smul.u32 8, %s15
        %p639 = scmp.lt.s32.totalorder %s638, 15
        %s640 = scalar_select %p639, %s638, 15
        %s641 = smul.addr %s640, 4
        %s642 = scalar_lea.vmem %s3, %s641
        // Predicated region
        $region60: #{calo_ae_forward.8} parent=50 // pred_check
          %p643 = pneg %p101
        $region61: #{calo_ae_forward.8} parent=50 // pred_check_branch
          %645 = sbr.rel (%p643) target = $region63
        $region62: #{calo_ae_forward.8} parent=50 // pred_region
          %s646 = smul.u32 8, %s15
        $region63: #{calo_ae_forward.8} parent=50 // pred_fallthru
          _
      $region51: #{calo_ae_forward.8} parent=5 // pred_fallthru
        _
      %p647 = scmp.le.s32.totalorder 2, %s10
      // Predicated region
      $region64: #{calo_ae_forward.8} parent=5 // pred_check
        %p648 = pneg %p647
      $region65: #{calo_ae_forward.8} parent=5 // pred_check_branch
        %650 = sbr.rel (%p648) target = $region67
      $region66: #{calo_ae_forward.8} parent=5 // pred_region
        %s651 = ssub.s32 %s10, 2
        // Predicated region
        $region68: #{calo_ae_forward.8} parent=66 // pred_check
          %p652 = pneg %p107
        $region69: #{calo_ae_forward.8} parent=66 // pred_check_branch
          %654 = sbr.rel (%p652) target = $region71
        $region70: #{calo_ae_forward.8} parent=66 // pred_region
          %s655 = smul.u32 8, %s16
          %p656 = scmp.lt.s32.totalorder %s655, 15
          %s657 = scalar_select %p656, %s655, 15
          %s658 = smul.addr %s657, 4
          %s659 = scalar_lea.vmem %s3, %s658
        $region71: #{calo_ae_forward.8} parent=66 // pred_fallthru
          _
      $region67: #{calo_ae_forward.8} parent=5 // pred_fallthru
        _
    $region6: #{calo_ae_forward.8} parent=1 // loop_footer
      %s14 = sadd.s32 1, %s10
    $region7: #{calo_ae_forward.8} parent=1 // loop_footer_branch
      %9 = sbr.rel target = $region3
    $region8: #{calo_ae_forward.8} parent=1 // loop_exit
      _
    %660 = vsyncpa [#allocation3], 1
    %s661 = scalar_lea.sflag [#allocation3], 1
    %662 = vsyncpa %s661, 1

// kernel: calo_ae_forward.9
$region0: #{calo_ae_forward.9}
  #allocation0 [shape = 'u32[]', space=smem, size = 0x4, offset = 0x4, fixed_abs, tag = 'smem constant byte address 0x4 - core index']
  #allocation1 [shape = 'u32[72,128]{1,0:T(1,128)}', space=vmem, size = 0x9000, scoped, tag = 'internal scratch']
  %s0 = inlined_call_operand.vmem [shape: bf16[16,216], index: 0, kind: input, shape index: {}]
  %s1 = inlined_call_operand.vmem [shape: bf16[216,512], index: 1, kind: input, shape index: {}]
  %s2 = inlined_call_operand.vmem [shape: f32[16,1], index: 2, kind: input, shape index: {}]
  %s3 = inlined_call_operand.vmem [shape: bf16[16,512], index: 3, kind: output, shape index: {}]
  %s4 = sld [smem:[#allocation0]]
  $region117: #{calo_ae_forward.9} parent=0
    _
  %s6 = ssub.s32 1, %s4
  %s7 = scalar_select 0, %s6, %s4
  $region1: #{calo_ae_forward.9} parent=0
    #allocation2 [shape = 'u8[221184]{0}', space=vmem, size = 0x36000, scoped, tag = 'input window, operand 1']
    #allocation3 [shape = 'u8[16384]{0}', space=vmem, size = 0x4000, scoped, tag = 'output window, operand 0']
    loop: start=0, step=1, limit=4
    $region2: #{calo_ae_forward.9} parent=1 // loop_pre_header
      _
    $region3: #{calo_ae_forward.9} parent=1 // loop_header
      %s9 = sphi 0, %s13
      %p10 = scmp.ge.s32.totalorder %s9, 4
      %s17 = sphi 0, %s17
      %s19 = sphi 0, %s17
      %s20 = sphi 0, %s19
      %s34 = sphi 0, %s20
      %s40 = sphi 0, %s42
      %s43 = sphi 0, %s40
      %s44 = sphi 0, %s43
      %s60 = sphi 0, %s44
      %s64 = sphi 0, %s64
      %s66 = sphi 0, %s64
      %s67 = sphi 0, %s66
      %s81 = sphi 0, %s67
      %s87 = sphi 0, %s89
      %s90 = sphi 0, %s87
      %s91 = sphi 0, %s90
      %s107 = sphi 0, %s91
    $region4: #{calo_ae_forward.9} parent=1 // loop_header_branch
      %12 = sbr.rel (%p10) target = $region8
    $region5: #{calo_ae_forward.9} parent=1 // loop_body
      %s14 = ssub.s32 %s9, 1
      %s15 = ssub.s32 %s9, 2
      %s16 = sadd.s32 %s9, 1
      %s18 = sadd.s32 %s17, 1
      %p21 = scmp.eq.s32.totalorder %s9, 1
      %p22 = scmp.ne.s32.totalorder %s17, %s19
      %p23 = scmp.eq.s32.totalorder %s9, 0
      %p24 = por %p22, %p23
      %p25 = scmp.ne.s32.totalorder %s17, %s19
      %p26 = scmp.eq.s32.totalorder %s14, 1
      %p27 = por %p25, %p26
      %p28 = scmp.ne.s32.totalorder %s19, %s20
      %p29 = scmp.eq.s32.totalorder %s14, 0
      %p30 = por %p28, %p29
      %p31 = scmp.ne.s32.totalorder %s19, %s20
      %p32 = scmp.eq.s32.totalorder %s15, 1
      %p33 = por %p31, %p32
      %p35 = scmp.ne.s32.totalorder %s20, %s34
      %p36 = scmp.eq.s32.totalorder %s15, 0
      %p37 = por %p35, %p36
      %s38 = ssub.s32 %s9, %s16
      %p39 = scmp.eq.s32.totalorder %s38, 0
      %s41 = sadd.s32 %s40, 1
      %s42 = scalar_select %p39, %s40, %s41
      %p45 = pneg %p39
      %p46 = scmp.eq.s32.totalorder %s9, 1
      %p47 = por %p45, %p46
      %p48 = scmp.ne.s32.totalorder %s40, %s43
      %p49 = scmp.eq.s32.totalorder %s9, 0
      %p50 = por %p48, %p49
      %p51 = scmp.ne.s32.totalorder %s40, %s43
      %p52 = scmp.eq.s32.totalorder %s14, 1
      %p53 = por %p51, %p52
      %p54 = scmp.ne.s32.totalorder %s43, %s44
      %p55 = scmp.eq.s32.totalorder %s14, 0
      %p56 = por %p54, %p55
      %p57 = scmp.ne.s32.totalorder %s43, %s44
      %p58 = scmp.eq.s32.totalorder %s15, 1
      %p59 = por %p57, %p58
      %p61 = scmp.ne.s32.totalorder %s44, %s60
      %p62 = scmp.eq.s32.totalorder %s15, 0
      %p63 = por %p61, %p62
      %s65 = sadd.s32 %s64, 1
      %p68 = scmp.eq.s32.totalorder %s9, 1
      %p69 = scmp.ne.s32.totalorder %s64, %s66
      %p70 = scmp.eq.s32.totalorder %s9, 0
      %p71 = por %p69, %p70
      %p72 = scmp.ne.s32.totalorder %s64, %s66
      %p73 = scmp.eq.s32.totalorder %s14, 1
      %p74 = por %p72, %p73
      %p75 = scmp.ne.s32.totalorder %s66, %s67
      %p76 = scmp.eq.s32.totalorder %s14, 0
      %p77 = por %p75, %p76
      %p78 = scmp.ne.s32.totalorder %s66, %s67
      %p79 = scmp.eq.s32.totalorder %s15, 1
      %p80 = por %p78, %p79
      %p82 = scmp.ne.s32.totalorder %s67, %s81
      %p83 = scmp.eq.s32.totalorder %s15, 0
      %p84 = por %p82, %p83
      %s85 = ssub.s32 %s9, %s16
      %p86 = scmp.eq.s32.totalorder %s85, 0
      %s88 = sadd.s32 %s87, 1
      %s89 = scalar_select %p86, %s87, %s88
      %p92 = pneg %p86
      %p93 = scmp.eq.s32.totalorder %s9, 1
      %p94 = por %p92, %p93
      %p95 = scmp.ne.s32.totalorder %s87, %s90
      %p96 = scmp.eq.s32.totalorder %s9, 0
      %p97 = por %p95, %p96
      %p98 = scmp.ne.s32.totalorder %s87, %s90
      %p99 = scmp.eq.s32.totalorder %s14, 1
      %p100 = por %p98, %p99
      %p101 = scmp.ne.s32.totalorder %s90, %s91
      %p102 = scmp.eq.s32.totalorder %s14, 0
      %p103 = por %p101, %p102
      %p104 = scmp.ne.s32.totalorder %s90, %s91
      %p105 = scmp.eq.s32.totalorder %s15, 1
      %p106 = por %p104, %p105
      %p108 = scmp.ne.s32.totalorder %s91, %s107
      %p109 = scmp.eq.s32.totalorder %s15, 0
      %p110 = por %p108, %p109
      %p111 = scmp.le.s32.totalorder 1, %s9
      %p112 = scmp.lt.s32.totalorder %s9, 3
      %p113 = pnand %p111, %p112
      %p114 = pneg %p113
      // Predicated region
      $region9: #{calo_ae_forward.9} parent=5 // pred_check
        _
      $region10: #{calo_ae_forward.9} parent=5 // pred_check_branch
        %116 = sbr.rel (%p113) target = $region12
      $region11: #{calo_ae_forward.9} parent=5 // pred_region
        %s117 = ssub.s32 %s9, 1
        // Predicated region
        $region13: #{calo_ae_forward.9} parent=11 // pred_check
          %p118 = pneg %p30
        $region14: #{calo_ae_forward.9} parent=11 // pred_check_branch
          %120 = sbr.rel (%p118) target = $region16
        $region15: #{calo_ae_forward.9} parent=11 // pred_region
          _
        $region16: #{calo_ae_forward.9} parent=11 // pred_fallthru
          _
        // Predicated region
        $region17: #{calo_ae_forward.9} parent=11 // pred_check
          %p121 = pneg %p77
        $region18: #{calo_ae_forward.9} parent=11 // pred_check_branch
          %123 = sbr.rel (%p121) target = $region20
        $region19: #{calo_ae_forward.9} parent=11 // pred_region
          _
        $region20: #{calo_ae_forward.9} parent=11 // pred_fallthru
          _
      $region12: #{calo_ae_forward.9} parent=5 // pred_fallthru
        _
      %p124 = scmp.lt.s32.totalorder %s9, 2
      // Predicated region
      $region21: #{calo_ae_forward.9} parent=5 // pred_check
        %p125 = pneg %p124
      $region22: #{calo_ae_forward.9} parent=5 // pred_check_branch
        %127 = sbr.rel (%p125) target = $region24
      $region23: #{calo_ae_forward.9} parent=5 // pred_region
        // Predicated region
        $region25: #{calo_ae_forward.9} parent=23 // pred_check
          %p128 = pneg %p50
        $region26: #{calo_ae_forward.9} parent=23 // pred_check_branch
          %130 = sbr.rel (%p128) target = $region28
        $region27: #{calo_ae_forward.9} parent=23 // pred_region
          %s131 = sand.u32 %s40, 1
          %s132 = sand.u32 %s40, 1
          %s133 = smul.addr %s132, 216
          %s134 = scalar_lea.vmem [#allocation2], %s133
          %s135 = smul.u32 2, %s9
          %s136 = smul.addr %s135, 4
          %s137 = scalar_lea.vmem %s1, %s136
          // Predicated region
          $region29: #{calo_ae_forward.9} parent=27 // pred_check
            _
          $region30: #{calo_ae_forward.9} parent=27 // pred_check_branch
            %139 = sbr.rel (0) target = $region32
          $region31: #{calo_ae_forward.9} parent=27 // pred_region
            // Predicated region
            $region33: #{calo_ae_forward.9} parent=31 // pred_check
              _
            $region34: #{calo_ae_forward.9} parent=31 // pred_check_branch
              %141 = sbr.rel (0) target = $region36
            $region35: #{calo_ae_forward.9} parent=31 // pred_region
              // Predicated region
              $region48: #{calo_ae_forward.9} parent=35 // pred_check
                _
              $region49: #{calo_ae_forward.9} parent=35 // pred_check_branch
                %209 = sbr.rel (0) target = $region51
              $region50: #{calo_ae_forward.9} parent=35 // pred_region
                loop: start=0, step=1, limit=1
                $region52: #{calo_ae_forward.9} parent=50 // loop_pre_header
                  _
                $region53: #{calo_ae_forward.9} parent=50 // loop_header
                  %s211 = sphi 0, %s215
                  %p212 = scmp.ge.s32.totalorder %s211, 1
                  %s216 = sphi %s137, %s137
                  %s217 = sphi %s134, %s134
                $region54: #{calo_ae_forward.9} parent=50 // loop_header_branch
                  %214 = sbr.rel (%p212) target = $region58
                $region55: #{calo_ae_forward.9} parent=50 // loop_body
                  %v218 = vld [vmem:[%s216] sm:$0xff]
                  %219 = vst [vmem:[%s217] sm:$0xff] %v218
                  %v220 = vld [vmem:[%s216 + $0x10] sm:$0xff]
                  %221 = vst [vmem:[%s217 + $0x8] sm:$0xff] %v220
                  %v222 = vld [vmem:[%s216 + $0x20] sm:$0xff]
                  %223 = vst [vmem:[%s217 + $0x10] sm:$0xff] %v222
                  %v224 = vld [vmem:[%s216 + $0x30] sm:$0xff]
                  %225 = vst [vmem:[%s217 + $0x18] sm:$0xff] %v224
                  %v226 = vld [vmem:[%s216 + $0x40] sm:$0xff]
                  %227 = vst [vmem:[%s217 + $0x20] sm:$0xff] %v226
                  %v228 = vld [vmem:[%s216 + $0x50] sm:$0xff]
                  %229 = vst [vmem:[%s217 + $0x28] sm:$0xff] %v228
                  %v230 = vld [vmem:[%s216 + $0x60] sm:$0xff]
                  %231 = vst [vmem:[%s217 + $0x30] sm:$0xff] %v230
                  %v232 = vld [vmem:[%s216 + $0x70] sm:$0xff]
                  %233 = vst [vmem:[%s217 + $0x38] sm:$0xff] %v232
                  %v234 = vld [vmem:[%s216 + $0x80] sm:$0xff]
                  %235 = vst [vmem:[%s217 + $0x40] sm:$0xff] %v234
                  %v236 = vld [vmem:[%s216 + $0x90] sm:$0xff]
                  %237 = vst [vmem:[%s217 + $0x48] sm:$0xff] %v236
                  %v238 = vld [vmem:[%s216 + $0xa0] sm:$0xff]
                  %239 = vst [vmem:[%s217 + $0x50] sm:$0xff] %v238
                  %v240 = vld [vmem:[%s216 + $0xb0] sm:$0xff]
                  %241 = vst [vmem:[%s217 + $0x58] sm:$0xff] %v240
                  %v242 = vld [vmem:[%s216 + $0xc0] sm:$0xff]
                  %243 = vst [vmem:[%s217 + $0x60] sm:$0xff] %v242
                  %v244 = vld [vmem:[%s216 + $0xd0] sm:$0xff]
                  %245 = vst [vmem:[%s217 + $0x68] sm:$0xff] %v244
                  %v246 = vld [vmem:[%s216 + $0xe0] sm:$0xff]
                  %247 = vst [vmem:[%s217 + $0x70] sm:$0xff] %v246
                  %v248 = vld [vmem:[%s216 + $0xf0] sm:$0xff]
                  %249 = vst [vmem:[%s217 + $0x78] sm:$0xff] %v248
                  %v250 = vld [vmem:[%s216 + $0x100] sm:$0xff]
                  %251 = vst [vmem:[%s217 + $0x80] sm:$0xff] %v250
                  %v252 = vld [vmem:[%s216 + $0x110] sm:$0xff]
                  %253 = vst [vmem:[%s217 + $0x88] sm:$0xff] %v252
                  %v254 = vld [vmem:[%s216 + $0x120] sm:$0xff]
                  %255 = vst [vmem:[%s217 + $0x90] sm:$0xff] %v254
                  %v256 = vld [vmem:[%s216 + $0x130] sm:$0xff]
                  %257 = vst [vmem:[%s217 + $0x98] sm:$0xff] %v256
                  %v258 = vld [vmem:[%s216 + $0x140] sm:$0xff]
                  %259 = vst [vmem:[%s217 + $0xa0] sm:$0xff] %v258
                  %v260 = vld [vmem:[%s216 + $0x150] sm:$0xff]
                  %261 = vst [vmem:[%s217 + $0xa8] sm:$0xff] %v260
                  %v262 = vld [vmem:[%s216 + $0x160] sm:$0xff]
                  %263 = vst [vmem:[%s217 + $0xb0] sm:$0xff] %v262
                  %v264 = vld [vmem:[%s216 + $0x170] sm:$0xff]
                  %265 = vst [vmem:[%s217 + $0xb8] sm:$0xff] %v264
                  %v266 = vld [vmem:[%s216 + $0x180] sm:$0xff]
                  %267 = vst [vmem:[%s217 + $0xc0] sm:$0xff] %v266
                  %v268 = vld [vmem:[%s216 + $0x190] sm:$0xff]
                  %269 = vst [vmem:[%s217 + $0xc8] sm:$0xff] %v268
                  %v270 = vld [vmem:[%s216 + $0x1a0] sm:$0xff]
                  %271 = vst [vmem:[%s217 + $0xd0] sm:$0xff] %v270
                $region56: #{calo_ae_forward.9} parent=50 // loop_footer
                  %s215 = sadd.s32 1, %s211
                $region57: #{calo_ae_forward.9} parent=50 // loop_footer_branch
                  %210 = sbr.rel target = $region53
                $region58: #{calo_ae_forward.9} parent=50 // loop_exit
                  _
              $region51: #{calo_ae_forward.9} parent=35 // pred_fallthru
                _
              // Predicated region
              $region59: #{calo_ae_forward.9} parent=35 // pred_check
                _
              $region60: #{calo_ae_forward.9} parent=35 // pred_check_branch
                %273 = sbr.rel target = $region62
              $region61: #{calo_ae_forward.9} parent=35 // pred_region
                _
              $region62: #{calo_ae_forward.9} parent=35 // pred_fallthru
                _
            $region36: #{calo_ae_forward.9} parent=31 // pred_fallthru
              _
            // Predicated region
            $region37: #{calo_ae_forward.9} parent=31 // pred_check
              _
            $region38: #{calo_ae_forward.9} parent=31 // pred_check_branch
              %143 = sbr.rel target = $region40
            $region39: #{calo_ae_forward.9} parent=31 // pred_region
              %s145 = ssub.s32 256, 1
              loop: start=0, step=1, limit=1
              $region41: #{calo_ae_forward.9} parent=39 // loop_pre_header
                _
              $region42: #{calo_ae_forward.9} parent=39 // loop_header
                %s147 = sphi 0, %s151
                %p148 = scmp.ge.s32.totalorder %s147, 1
                %s152 = sphi %s137, %s137
                %s153 = sphi %s134, %s134
              $region43: #{calo_ae_forward.9} parent=39 // loop_header_branch
                %150 = sbr.rel (%p148) target = $region47
              $region44: #{calo_ae_forward.9} parent=39 // loop_body
                %v154 = vld [vmem:[%s152] sm:%s145]
                %155 = vst [vmem:[%s153] sm:%s145] %v154
                %v156 = vld [vmem:[%s152 + $0x10] sm:%s145]
                %157 = vst [vmem:[%s153 + $0x8] sm:%s145] %v156
                %v158 = vld [vmem:[%s152 + $0x20] sm:%s145]
                %159 = vst [vmem:[%s153 + $0x10] sm:%s145] %v158
                %v160 = vld [vmem:[%s152 + $0x30] sm:%s145]
                %161 = vst [vmem:[%s153 + $0x18] sm:%s145] %v160
                %v162 = vld [vmem:[%s152 + $0x40] sm:%s145]
                %163 = vst [vmem:[%s153 + $0x20] sm:%s145] %v162
                %v164 = vld [vmem:[%s152 + $0x50] sm:%s145]
                %165 = vst [vmem:[%s153 + $0x28] sm:%s145] %v164
                %v166 = vld [vmem:[%s152 + $0x60] sm:%s145]
                %167 = vst [vmem:[%s153 + $0x30] sm:%s145] %v166
                %v168 = vld [vmem:[%s152 + $0x70] sm:%s145]
                %169 = vst [vmem:[%s153 + $0x38] sm:%s145] %v168
                %v170 = vld [vmem:[%s152 + $0x80] sm:%s145]
                %171 = vst [vmem:[%s153 + $0x40] sm:%s145] %v170
                %v172 = vld [vmem:[%s152 + $0x90] sm:%s145]
                %173 = vst [vmem:[%s153 + $0x48] sm:%s145] %v172
                %v174 = vld [vmem:[%s152 + $0xa0] sm:%s145]
                %175 = vst [vmem:[%s153 + $0x50] sm:%s145] %v174
                %v176 = vld [vmem:[%s152 + $0xb0] sm:%s145]
                %177 = vst [vmem:[%s153 + $0x58] sm:%s145] %v176
                %v178 = vld [vmem:[%s152 + $0xc0] sm:%s145]
                %179 = vst [vmem:[%s153 + $0x60] sm:%s145] %v178
                %v180 = vld [vmem:[%s152 + $0xd0] sm:%s145]
                %181 = vst [vmem:[%s153 + $0x68] sm:%s145] %v180
                %v182 = vld [vmem:[%s152 + $0xe0] sm:%s145]
                %183 = vst [vmem:[%s153 + $0x70] sm:%s145] %v182
                %v184 = vld [vmem:[%s152 + $0xf0] sm:%s145]
                %185 = vst [vmem:[%s153 + $0x78] sm:%s145] %v184
                %v186 = vld [vmem:[%s152 + $0x100] sm:%s145]
                %187 = vst [vmem:[%s153 + $0x80] sm:%s145] %v186
                %v188 = vld [vmem:[%s152 + $0x110] sm:%s145]
                %189 = vst [vmem:[%s153 + $0x88] sm:%s145] %v188
                %v190 = vld [vmem:[%s152 + $0x120] sm:%s145]
                %191 = vst [vmem:[%s153 + $0x90] sm:%s145] %v190
                %v192 = vld [vmem:[%s152 + $0x130] sm:%s145]
                %193 = vst [vmem:[%s153 + $0x98] sm:%s145] %v192
                %v194 = vld [vmem:[%s152 + $0x140] sm:%s145]
                %195 = vst [vmem:[%s153 + $0xa0] sm:%s145] %v194
                %v196 = vld [vmem:[%s152 + $0x150] sm:%s145]
                %197 = vst [vmem:[%s153 + $0xa8] sm:%s145] %v196
                %v198 = vld [vmem:[%s152 + $0x160] sm:%s145]
                %199 = vst [vmem:[%s153 + $0xb0] sm:%s145] %v198
                %v200 = vld [vmem:[%s152 + $0x170] sm:%s145]
                %201 = vst [vmem:[%s153 + $0xb8] sm:%s145] %v200
                %v202 = vld [vmem:[%s152 + $0x180] sm:%s145]
                %203 = vst [vmem:[%s153 + $0xc0] sm:%s145] %v202
                %v204 = vld [vmem:[%s152 + $0x190] sm:%s145]
                %205 = vst [vmem:[%s153 + $0xc8] sm:%s145] %v204
                %v206 = vld [vmem:[%s152 + $0x1a0] sm:%s145]
                %207 = vst [vmem:[%s153 + $0xd0] sm:%s145] %v206
              $region45: #{calo_ae_forward.9} parent=39 // loop_footer
                %s151 = sadd.s32 1, %s147
              $region46: #{calo_ae_forward.9} parent=39 // loop_footer_branch
                %146 = sbr.rel target = $region42
              $region47: #{calo_ae_forward.9} parent=39 // loop_exit
                _
            $region40: #{calo_ae_forward.9} parent=31 // pred_fallthru
              _
          $region32: #{calo_ae_forward.9} parent=27 // pred_fallthru
            _
          %274 = vnop
        $region28: #{calo_ae_forward.9} parent=23 // pred_fallthru
          _
      $region24: #{calo_ae_forward.9} parent=5 // pred_fallthru
        _
      %p275 = scmp.le.s32.totalorder 1, %s9
      %p276 = scmp.lt.s32.totalorder %s9, 3
      %p277 = pnand %p275, %p276
      %p278 = pneg %p277
      // Predicated region
      $region63: #{calo_ae_forward.9} parent=5 // pred_check
        _
      $region64: #{calo_ae_forward.9} parent=5 // pred_check_branch
        %280 = sbr.rel (%p277) target = $region66
      $region65: #{calo_ae_forward.9} parent=5 // pred_region
        %s281 = ssub.s32 %s9, 1
        %s282 = sand.u32 %s43, 1
        %s283 = sand.u32 %s43, 1
        %s284 = smul.addr %s283, 216
        %s285 = scalar_lea.vmem [#allocation2], %s284
        // Predicated region
        $region67: #{calo_ae_forward.9} parent=65 // pred_check
          %p286 = pneg %p56
        $region68: #{calo_ae_forward.9} parent=65 // pred_check_branch
          %288 = sbr.rel (%p286) target = $region70
        $region69: #{calo_ae_forward.9} parent=65 // pred_region
          _
        $region70: #{calo_ae_forward.9} parent=65 // pred_fallthru
          _
        %p289 = pneg %p30
        %p290 = pneg %p27
        %s291 = sand.u32 %s43, 1
        %s292 = sand.u32 %s43, 1
        %s293 = smul.addr %s292, 216
        %s294 = scalar_lea.vmem [#allocation2], %s293
        %p295 = pneg %p56
        %p296 = pneg %p53
        %p297 = pneg %p77
        %p298 = pneg %p74
        %p299 = pneg %p103
        %p300 = pneg %p100
        %s301 = sand.u32 %s90, 1
        %s302 = sand.u32 %s90, 1
        %s303 = smul.addr %s302, 16
        %s304 = scalar_lea.vmem [#allocation3], %s303
        %s305 = smul.u32 2, %s14
        %s306 = smul.u32 2, %s14
        %v308 = vld [vmem:[%s0] sm:$0xff]
        %v309 = vld [vmem:[%s0 + $0x8] sm:$0xff]
        %v310 = vld [vmem:[%s285] sm:$0xff]
        %v311 = vld [vmem:[%s285 + $0x8] sm:$0xff]
        %v312 = vld [vmem:[%s285 + $0x10] sm:$0xff]
        %v313 = vld [vmem:[%s285 + $0x18] sm:$0xff]
        %v314 = vld [vmem:[%s285 + $0x20] sm:$0xff]
        %v315 = vld [vmem:[%s285 + $0x28] sm:$0xff]
        %v316 = vld [vmem:[%s285 + $0x30] sm:$0xff]
        %v317 = vld [vmem:[%s285 + $0x38] sm:$0xff]
        %v318 = vld [vmem:[%s285 + $0x40] sm:$0xff]
        %v319 = vld [vmem:[%s285 + $0x48] sm:$0xff]
        %v320 = vld [vmem:[%s285 + $0x50] sm:$0xff]
        %v321 = vld [vmem:[%s285 + $0x58] sm:$0xff]
        %v322 = vld [vmem:[%s285 + $0x60] sm:$0xff]
        %v323 = vld [vmem:[%s285 + $0x68] sm:$0xff]
        %v324 = vld [vmem:[%s285 + $0x70] sm:$0xff]
        %v325 = vld [vmem:[%s285 + $0x78] sm:$0xff]
        %v326 = vld [vmem:[%s285 + $0x80] sm:$0xff]
        %v327 = vld [vmem:[%s285 + $0x88] sm:$0xff]
        %v328 = vld [vmem:[%s285 + $0x90] sm:$0xff]
        %v329 = vld [vmem:[%s285 + $0x98] sm:$0xff]
        %v330 = vld [vmem:[%s285 + $0xa0] sm:$0xff]
        %v331 = vld [vmem:[%s285 + $0xa8] sm:$0xff]
        %v332 = vld [vmem:[%s285 + $0xb0] sm:$0xff]
        %v333 = vld [vmem:[%s285 + $0xb8] sm:$0xff]
        %v334 = vld [vmem:[%s285 + $0xc0] sm:$0xff]
        %v335 = vld [vmem:[%s285 + $0xc8] sm:$0xff]
        %v336 = vld [vmem:[%s285 + $0xd0] sm:$0xff]
        %v337 = vld [vmem:[%s2] sm:$0xff]
        %v338 = vld [vmem:[%s2 + $0x8] sm:$0xff]
        %340 = vset.pattern.permute.xlu0 0
        %341 = vperm.xlu0 %340, %v337
        %v342 = vpop.permute.xlu0 %341
        %345 = vset.pattern.permute.xlu0 0
        %346 = vperm.xlu0 %345, %v338
        %v347 = vpop.permute.xlu0 %346
        %v351 = vunpack.c.l.b16 %v308
        %v352 = vunpack.c.h.b16 %v308
        %v353 = vunpack.c.l.b16 %v309
        %v354 = vunpack.c.h.b16 %v309
        %v355 = vpack.c.b16 %v353, %v351
        %v356 = vpack.c.b16 %v354, %v352
        %v385 = vunpack.c.l.b16 %v310
        %v386 = vunpack.c.h.b16 %v310
        %v387 = vunpack.c.l.b16 %v311
        %v388 = vunpack.c.h.b16 %v311
        %v389 = vunpack.c.l.b16 %v312
        %v390 = vunpack.c.h.b16 %v312
        %v391 = vunpack.c.l.b16 %v313
        %v392 = vunpack.c.h.b16 %v313
        %v393 = vunpack.c.l.b16 %v314
        %v394 = vunpack.c.h.b16 %v314
        %v395 = vunpack.c.l.b16 %v315
        %v396 = vunpack.c.h.b16 %v315
        %v397 = vunpack.c.l.b16 %v316
        %v398 = vunpack.c.h.b16 %v316
        %v399 = vunpack.c.l.b16 %v317
        %v400 = vunpack.c.h.b16 %v317
        %v401 = vunpack.c.l.b16 %v318
        %v402 = vunpack.c.h.b16 %v318
        %v403 = vunpack.c.l.b16 %v319
        %v404 = vunpack.c.h.b16 %v319
        %v405 = vunpack.c.l.b16 %v320
        %v406 = vunpack.c.h.b16 %v320
        %v407 = vunpack.c.l.b16 %v321
        %v408 = vunpack.c.h.b16 %v321
        %v409 = vunpack.c.l.b16 %v322
        %v410 = vunpack.c.h.b16 %v322
        %v411 = vunpack.c.l.b16 %v323
        %v412 = vunpack.c.h.b16 %v323
        %v413 = vunpack.c.l.b16 %v324
        %v414 = vunpack.c.h.b16 %v324
        %v415 = vunpack.c.l.b16 %v325
        %v416 = vunpack.c.h.b16 %v325
        %v417 = vunpack.c.l.b16 %v326
        %v418 = vunpack.c.h.b16 %v326
        %v419 = vunpack.c.l.b16 %v327
        %v420 = vunpack.c.h.b16 %v327
        %v421 = vunpack.c.l.b16 %v328
        %v422 = vunpack.c.h.b16 %v328
        %v423 = vunpack.c.l.b16 %v329
        %v424 = vunpack.c.h.b16 %v329
        %v425 = vunpack.c.l.b16 %v330
        %v426 = vunpack.c.h.b16 %v330
        %v427 = vunpack.c.l.b16 %v331
        %v428 = vunpack.c.h.b16 %v331
        %v429 = vunpack.c.l.b16 %v332
        %v430 = vunpack.c.h.b16 %v332
        %v431 = vunpack.c.l.b16 %v333
        %v432 = vunpack.c.h.b16 %v333
        %v433 = vunpack.c.l.b16 %v334
        %v434 = vunpack.c.h.b16 %v334
        %v435 = vunpack.c.l.b16 %v335
        %v436 = vunpack.c.h.b16 %v335
        %v437 = vunpack.c.l.b16 %v336
        %v438 = vunpack.c.h.b16 %v336
        %v439 = vpack.c.b16 %v387, %v385
        %v440 = vpack.c.b16 %v388, %v386
        %v441 = vpack.c.b16 %v391, %v389
        %v442 = vpack.c.b16 %v392, %v390
        %v443 = vpack.c.b16 %v395, %v393
        %v444 = vpack.c.b16 %v396, %v394
        %v445 = vpack.c.b16 %v399, %v397
        %v446 = vpack.c.b16 %v400, %v398
        %v447 = vpack.c.b16 %v403, %v401
        %v448 = vpack.c.b16 %v404, %v402
        %v449 = vpack.c.b16 %v407, %v405
        %v450 = vpack.c.b16 %v408, %v406
        %v451 = vpack.c.b16 %v411, %v409
        %v452 = vpack.c.b16 %v412, %v410
        %v453 = vpack.c.b16 %v415, %v413
        %v454 = vpack.c.b16 %v416, %v414
        %v455 = vpack.c.b16 %v419, %v417
        %v456 = vpack.c.b16 %v420, %v418
        %v457 = vpack.c.b16 %v423, %v421
        %v458 = vpack.c.b16 %v424, %v422
        %v459 = vpack.c.b16 %v427, %v425
        %v460 = vpack.c.b16 %v428, %v426
        %v461 = vpack.c.b16 %v431, %v429
        %v462 = vpack.c.b16 %v432, %v430
        %v463 = vpack.c.b16 %v435, %v433
        %v464 = vpack.c.b16 %v436, %v434
        %v465 = vpack.c.b16 %v437, %v437
        %v466 = vpack.c.b16 %v438, %v438
        %vm493 = vcmask 719872
        %v495 = vsel %vm493, %v356, 0
        %vm497 = vcmask 1043456
        %v499 = vsel %vm497, %v465, 0
        %v502 = vsel %vm497, %v466, 0
        %504 = vmatpush.bf16.msra.mxu0 %v453
        %505 = vmatpush.bf16.msra.mxu0 %v451
        %506 = vmatpush.bf16.msra.mxu0 %v449
        %507 = vmatpush.bf16.msra.mxu0 %v447
        %508 = vmatpush.bf16.msra.mxu0 %v445
        %509 = vmatpush.bf16.msra.mxu0 %v443
        %510 = vmatpush.bf16.msra.mxu0 %v441
        %511 = vmatpush.bf16.msra.mxu0 %v439
        %512 = vmatmul.bf16.gmra.mxu0 %v355
        %v513 = vpop.f32.mrf.mxu0
        %v514 = vadd.f32 %v342, %v513
        %v515 = vpop.f32.mrf.mxu0
        %v516 = vadd.f32 %v347, %v515
        %517 = vdwg.mxu0
        %518 = vmatpush.bf16.msra.mxu0 0
        %519 = vmatpush.bf16.msra.mxu0 0
        %520 = vmatpush.bf16.msra.mxu0 %v499
        %521 = vmatpush.bf16.msra.mxu0 %v463
        %522 = vmatpush.bf16.msra.mxu0 %v461
        %523 = vmatpush.bf16.msra.mxu0 %v459
        %524 = vmatpush.bf16.msra.mxu0 %v457
        %525 = vmatpush.bf16.msra.mxu0 %v455
        %526 = vmatmul.bf16.gmra.mxu0 %v495
        %v527 = vpop.f32.mrf.mxu0
        %v528 = vadd.f32 %v514, %v527
        %v529 = vpop.f32.mrf.mxu0
        %v530 = vadd.f32 %v516, %v529
        %531 = vdwg.mxu0
        %532 = vmatpush.bf16.msra.mxu0 %v454
        %533 = vmatpush.bf16.msra.mxu0 %v452
        %534 = vmatpush.bf16.msra.mxu0 %v450
        %535 = vmatpush.bf16.msra.mxu0 %v448
        %536 = vmatpush.bf16.msra.mxu0 %v446
        %537 = vmatpush.bf16.msra.mxu0 %v444
        %538 = vmatpush.bf16.msra.mxu0 %v442
        %539 = vmatpush.bf16.msra.mxu0 %v440
        %540 = vmatmul.bf16.gmra.mxu0 %v355
        %v541 = vpop.f32.mrf.mxu0
        %v542 = vadd.f32 %v342, %v541
        %v543 = vpop.f32.mrf.mxu0
        %v544 = vadd.f32 %v347, %v543
        %545 = vdwg.mxu0
        %546 = vmatpush.bf16.msra.mxu0 0
        %547 = vmatpush.bf16.msra.mxu0 0
        %548 = vmatpush.bf16.msra.mxu0 %v502
        %549 = vmatpush.bf16.msra.mxu0 %v464
        %550 = vmatpush.bf16.msra.mxu0 %v462
        %551 = vmatpush.bf16.msra.mxu0 %v460
        %552 = vmatpush.bf16.msra.mxu0 %v458
        %553 = vmatpush.bf16.msra.mxu0 %v456
        %554 = vmatmul.bf16.gmra.mxu0 %v495
        %v555 = vpop.f32.mrf.mxu0
        %v556 = vadd.f32 %v542, %v555
        %v557 = vpop.f32.mrf.mxu0
        %v558 = vadd.f32 %v544, %v557
        %559 = vdwg.mxu0
        %v560 = vsub.f32 0.0, %v528
        %v561 = vsub.f32 0.0, %v556
        %v562 = vsub.f32 0.0, %v530
        %v563 = vsub.f32 0.0, %v558
        %v564 = vmul.f32 %v560, 1.442695
        %v565 = vpow.pop %v564
        %v566 = vmul.f32 %v561, 1.442695
        %v567 = vpow.pop %v566
        %v568 = vmul.f32 %v562, 1.442695
        %v569 = vpow.pop %v568
        %v570 = vmul.f32 %v563, 1.442695
        %v571 = vpow.pop %v570
        %v572 = vadd.f32 %v565, 1.0
        %v573 = vadd.f32 %v567, 1.0
        %v574 = vadd.f32 %v569, 1.0
        %v575 = vadd.f32 %v571, 1.0
        %v576 = vrcp.pop %v572
        %v577 = vmul.f32 %v572, %v576
        %v578 = vsub.f32 1.0, %v577
        %v579 = vmul.f32 %v576, %v578
        %v580 = vadd.f32 %v576, %v579
        %vm581 = vweird.f32 %v572
        %vm582 = vweird.f32 %v576
        %vm583 = vmor %vm581, %vm582
        %v584 = vsel %vm583, %v576, %v580
        %v585 = vand.u32 2147483647, %v572
        %vm586 = vcmp.eq.f32.partialorder %v585, 8.507059e+37
        %v587 = vand.u32 %v572, 2147483648
        %v588 = vor.u32 1.1754944e-38, %v587
        %v589 = vsel %vm586, %v588, %v584
        %v590 = vmul.f32 1.0, %v589
        %v591 = vrcp.pop %v573
        %v592 = vmul.f32 %v573, %v591
        %v593 = vsub.f32 1.0, %v592
        %v594 = vmul.f32 %v591, %v593
        %v595 = vadd.f32 %v591, %v594
        %vm596 = vweird.f32 %v573
        %vm597 = vweird.f32 %v591
        %vm598 = vmor %vm596, %vm597
        %v599 = vsel %vm598, %v591, %v595
        %v600 = vand.u32 2147483647, %v573
        %vm601 = vcmp.eq.f32.partialorder %v600, 8.507059e+37
        %v602 = vand.u32 %v573, 2147483648
        %v603 = vor.u32 1.1754944e-38, %v602
        %v604 = vsel %vm601, %v603, %v599
        %v605 = vmul.f32 1.0, %v604
        %v606 = vrcp.pop %v574
        %v607 = vmul.f32 %v574, %v606
        %v608 = vsub.f32 1.0, %v607
        %v609 = vmul.f32 %v606, %v608
        %v610 = vadd.f32 %v606, %v609
        %vm611 = vweird.f32 %v574
        %vm612 = vweird.f32 %v606
        %vm613 = vmor %vm611, %vm612
        %v614 = vsel %vm613, %v606, %v610
        %v615 = vand.u32 2147483647, %v574
        %vm616 = vcmp.eq.f32.partialorder %v615, 8.507059e+37
        %v617 = vand.u32 %v574, 2147483648
        %v618 = vor.u32 1.1754944e-38, %v617
        %v619 = vsel %vm616, %v618, %v614
        %v620 = vmul.f32 1.0, %v619
        %v621 = vrcp.pop %v575
        %v622 = vmul.f32 %v575, %v621
        %v623 = vsub.f32 1.0, %v622
        %v624 = vmul.f32 %v621, %v623
        %v625 = vadd.f32 %v621, %v624
        %vm626 = vweird.f32 %v575
        %vm627 = vweird.f32 %v621
        %vm628 = vmor %vm626, %vm627
        %v629 = vsel %vm628, %v621, %v625
        %v630 = vand.u32 2147483647, %v575
        %vm631 = vcmp.eq.f32.partialorder %v630, 8.507059e+37
        %v632 = vand.u32 %v575, 2147483648
        %v633 = vor.u32 1.1754944e-38, %v632
        %v634 = vsel %vm631, %v633, %v629
        %v635 = vmul.f32 1.0, %v634
        %v636 = vmul.f32 %v528, %v590
        %v637 = vmul.f32 %v556, %v605
        %v638 = vmul.f32 %v530, %v620
        %v639 = vmul.f32 %v558, %v635
        %v640 = vpack.c.bf16 %v637, %v636
        %v641 = vpack.c.bf16 %v639, %v638
        %642 = vst [vmem:[%s304] sm:$0xff] %v640
        %643 = vst [vmem:[%s304 + $0x8] sm:$0xff] %v641
        %s644 = sand.u32 %s90, 1
        %s645 = sand.u32 %s90, 1
        %s646 = smul.addr %s645, 16
        %s647 = scalar_lea.vmem [#allocation3], %s646
        // Predicated region
        $region71: #{calo_ae_forward.9} parent=65 // pred_check
          %p648 = pneg %p100
        $region72: #{calo_ae_forward.9} parent=65 // pred_check_branch
          %650 = sbr.rel (%p648) target = $region74
        $region73: #{calo_ae_forward.9} parent=65 // pred_region
          %s651 = smul.u32 2, %s14
          %s652 = smul.addr %s651, 4
          %s653 = scalar_lea.vmem %s3, %s652
          // Predicated region
          $region75: #{calo_ae_forward.9} parent=73 // pred_check
            _
          $region76: #{calo_ae_forward.9} parent=73 // pred_check_branch
            %655 = sbr.rel (0) target = $region78
          $region77: #{calo_ae_forward.9} parent=73 // pred_region
            // Predicated region
            $region79: #{calo_ae_forward.9} parent=77 // pred_check
              _
            $region80: #{calo_ae_forward.9} parent=77 // pred_check_branch
              %657 = sbr.rel (0) target = $region82
            $region81: #{calo_ae_forward.9} parent=77 // pred_region
              // Predicated region
              $region94: #{calo_ae_forward.9} parent=81 // pred_check
                _
              $region95: #{calo_ae_forward.9} parent=81 // pred_check_branch
                %675 = sbr.rel (0) target = $region97
              $region96: #{calo_ae_forward.9} parent=81 // pred_region
                loop: start=0, step=1, limit=1
                $region98: #{calo_ae_forward.9} parent=96 // loop_pre_header
                  _
                $region99: #{calo_ae_forward.9} parent=96 // loop_header
                  %s677 = sphi 0, %s681
                  %p678 = scmp.ge.s32.totalorder %s677, 1
                  %s682 = sphi %s647, %s647
                  %s683 = sphi %s653, %s653
                $region100: #{calo_ae_forward.9} parent=96 // loop_header_branch
                  %680 = sbr.rel (%p678) target = $region104
                $region101: #{calo_ae_forward.9} parent=96 // loop_body
                  %v684 = vld [vmem:[%s682] sm:$0xff]
                  %685 = vst [vmem:[%s683] sm:$0xff] %v684
                  %v686 = vld [vmem:[%s682 + $0x8] sm:$0xff]
                  %687 = vst [vmem:[%s683 + $0x10] sm:$0xff] %v686
                $region102: #{calo_ae_forward.9} parent=96 // loop_footer
                  %s681 = sadd.s32 1, %s677
                $region103: #{calo_ae_forward.9} parent=96 // loop_footer_branch
                  %676 = sbr.rel target = $region99
                $region104: #{calo_ae_forward.9} parent=96 // loop_exit
                  _
              $region97: #{calo_ae_forward.9} parent=81 // pred_fallthru
                _
              // Predicated region
              $region105: #{calo_ae_forward.9} parent=81 // pred_check
                _
              $region106: #{calo_ae_forward.9} parent=81 // pred_check_branch
                %689 = sbr.rel target = $region108
              $region107: #{calo_ae_forward.9} parent=81 // pred_region
                _
              $region108: #{calo_ae_forward.9} parent=81 // pred_fallthru
                _
            $region82: #{calo_ae_forward.9} parent=77 // pred_fallthru
              _
            // Predicated region
            $region83: #{calo_ae_forward.9} parent=77 // pred_check
              _
            $region84: #{calo_ae_forward.9} parent=77 // pred_check_branch
              %659 = sbr.rel target = $region86
            $region85: #{calo_ae_forward.9} parent=77 // pred_region
              %s661 = ssub.s32 256, 1
              loop: start=0, step=1, limit=1
              $region87: #{calo_ae_forward.9} parent=85 // loop_pre_header
                _
              $region88: #{calo_ae_forward.9} parent=85 // loop_header
                %s663 = sphi 0, %s667
                %p664 = scmp.ge.s32.totalorder %s663, 1
                %s668 = sphi %s647, %s647
                %s669 = sphi %s653, %s653
              $region89: #{calo_ae_forward.9} parent=85 // loop_header_branch
                %666 = sbr.rel (%p664) target = $region93
              $region90: #{calo_ae_forward.9} parent=85 // loop_body
                %v670 = vld [vmem:[%s668] sm:%s661]
                %671 = vst [vmem:[%s669] sm:%s661] %v670
                %v672 = vld [vmem:[%s668 + $0x8] sm:%s661]
                %673 = vst [vmem:[%s669 + $0x10] sm:%s661] %v672
              $region91: #{calo_ae_forward.9} parent=85 // loop_footer
                %s667 = sadd.s32 1, %s663
              $region92: #{calo_ae_forward.9} parent=85 // loop_footer_branch
                %662 = sbr.rel target = $region88
              $region93: #{calo_ae_forward.9} parent=85 // loop_exit
                _
            $region86: #{calo_ae_forward.9} parent=77 // pred_fallthru
              _
          $region78: #{calo_ae_forward.9} parent=73 // pred_fallthru
            _
          %690 = vnop
        $region74: #{calo_ae_forward.9} parent=65 // pred_fallthru
          _
      $region66: #{calo_ae_forward.9} parent=5 // pred_fallthru
        _
      %p691 = scmp.le.s32.totalorder 2, %s9
      // Predicated region
      $region109: #{calo_ae_forward.9} parent=5 // pred_check
        %p692 = pneg %p691
      $region110: #{calo_ae_forward.9} parent=5 // pred_check_branch
        %694 = sbr.rel (%p692) target = $region112
      $region111: #{calo_ae_forward.9} parent=5 // pred_region
        %s695 = ssub.s32 %s9, 2
        // Predicated region
        $region113: #{calo_ae_forward.9} parent=111 // pred_check
          %p696 = pneg %p106
        $region114: #{calo_ae_forward.9} parent=111 // pred_check_branch
          %698 = sbr.rel (%p696) target = $region116
        $region115: #{calo_ae_forward.9} parent=111 // pred_region
          %s699 = sand.u32 %s91, 1
          %s700 = sand.u32 %s91, 1
          %s701 = smul.addr %s700, 16
          %s702 = scalar_lea.vmem [#allocation3], %s701
        $region116: #{calo_ae_forward.9} parent=111 // pred_fallthru
          _
      $region112: #{calo_ae_forward.9} parent=5 // pred_fallthru
        _
    $region6: #{calo_ae_forward.9} parent=1 // loop_footer
      %s13 = sadd.s32 1, %s9
    $region7: #{calo_ae_forward.9} parent=1 // loop_footer_branch
      %8 = sbr.rel target = $region3
    $region8: #{calo_ae_forward.9} parent=1 // loop_exit
      _

// kernel: calo_ae_forward.10
$region0: #{calo_ae_forward.10}
  #allocation0 [shape = 'u32[]', space=smem, size = 0x4, offset = 0x4, fixed_abs, tag = 'smem constant byte address 0x4 - core index']
  #allocation1 [shape = 'u32[72,128]{1,0:T(1,128)}', space=vmem, size = 0x9000, scoped, tag = 'internal scratch']
  %s0 = inlined_call_operand.vmem [shape: bf16[8,432], index: 0, kind: input, shape index: {}]
  %s1 = inlined_call_operand.vmem [shape: bf16[432,128], index: 1, kind: input, shape index: {}]
  %s2 = inlined_call_operand.vmem [shape: f32[8,1], index: 2, kind: input, shape index: {}]
  %s3 = inlined_call_operand.vmem [shape: bf16[8,128], index: 3, kind: output, shape index: {}]
  %s4 = sld [smem:[#allocation0]]
  $region22: #{calo_ae_forward.10} parent=0
    _
  %s6 = ssub.s32 1, %s4
  %s7 = scalar_select 0, %s6, %s4
  // Predicated region
  $region2: #{calo_ae_forward.10} parent=0 // pred_check
    _
  $region3: #{calo_ae_forward.10} parent=0 // pred_check_branch
    %9 = sbr.rel (0) target = $region5
  $region4: #{calo_ae_forward.10} parent=0 // pred_region
    _
  $region5: #{calo_ae_forward.10} parent=0 // pred_fallthru
    _
  // Predicated region
  $region6: #{calo_ae_forward.10} parent=0 // pred_check
    _
  $region7: #{calo_ae_forward.10} parent=0 // pred_check_branch
    %11 = sbr.rel (0) target = $region9
  $region8: #{calo_ae_forward.10} parent=0 // pred_region
    _
  $region9: #{calo_ae_forward.10} parent=0 // pred_fallthru
    _
  // Predicated region
  $region10: #{calo_ae_forward.10} parent=0 // pred_check
    _
  $region11: #{calo_ae_forward.10} parent=0 // pred_check_branch
    %13 = sbr.rel (0) target = $region13
  $region12: #{calo_ae_forward.10} parent=0 // pred_region
    _
  $region13: #{calo_ae_forward.10} parent=0 // pred_fallthru
    _
  %v15 = vld [vmem:[%s0] sm:$0xff]
  %v16 = vld [vmem:[%s0 + $0x8] sm:$0xff]
  %v17 = vld [vmem:[%s1] sm:$0xf]
  %v18 = vld [vmem:[%s1 + $0x4] sm:$0xf]
  %v19 = vld [vmem:[%s1 + $0x8] sm:$0xf]
  %v20 = vld [vmem:[%s1 + $0xc] sm:$0xf]
  %v21 = vld [vmem:[%s1 + $0x10] sm:$0xf]
  %v22 = vld [vmem:[%s1 + $0x14] sm:$0xf]
  %v23 = vld [vmem:[%s1 + $0x18] sm:$0xf]
  %v24 = vld [vmem:[%s1 + $0x1c] sm:$0xf]
  %v25 = vld [vmem:[%s1 + $0x20] sm:$0xf]
  %v26 = vld [vmem:[%s1 + $0x24] sm:$0xf]
  %v27 = vld [vmem:[%s1 + $0x28] sm:$0xf]
  %v28 = vld [vmem:[%s1 + $0x2c] sm:$0xf]
  %v29 = vld [vmem:[%s1 + $0x30] sm:$0xf]
  %v30 = vld [vmem:[%s1 + $0x34] sm:$0xf]
  %v31 = vld [vmem:[%s1 + $0x38] sm:$0xf]
  %v32 = vld [vmem:[%s1 + $0x3c] sm:$0xf]
  %v33 = vld [vmem:[%s1 + $0x40] sm:$0xf]
  %v34 = vld [vmem:[%s1 + $0x44] sm:$0xf]
  %v35 = vld [vmem:[%s1 + $0x48] sm:$0xf]
  %v36 = vld [vmem:[%s1 + $0x4c] sm:$0xf]
  %v37 = vld [vmem:[%s1 + $0x50] sm:$0xf]
  %v38 = vld [vmem:[%s1 + $0x54] sm:$0xf]
  %v39 = vld [vmem:[%s1 + $0x58] sm:$0xf]
  %v40 = vld [vmem:[%s1 + $0x5c] sm:$0xf]
  %v41 = vld [vmem:[%s1 + $0x60] sm:$0xf]
  %v42 = vld [vmem:[%s1 + $0x64] sm:$0xf]
  %v43 = vld [vmem:[%s1 + $0x68] sm:$0xf]
  %v44 = vld [vmem:[%s1 + $0x6c] sm:$0xf]
  %v45 = vld [vmem:[%s1 + $0x70] sm:$0xf]
  %v46 = vld [vmem:[%s1 + $0x74] sm:$0xf]
  %v47 = vld [vmem:[%s1 + $0x78] sm:$0xf]
  %v48 = vld [vmem:[%s1 + $0x7c] sm:$0xf]
  %v49 = vld [vmem:[%s1 + $0x80] sm:$0xf]
  %v50 = vld [vmem:[%s1 + $0x84] sm:$0xf]
  %v51 = vld [vmem:[%s1 + $0x88] sm:$0xf]
  %v52 = vld [vmem:[%s1 + $0x8c] sm:$0xf]
  %v53 = vld [vmem:[%s1 + $0x90] sm:$0xf]
  %v54 = vld [vmem:[%s1 + $0x94] sm:$0xf]
  %v55 = vld [vmem:[%s1 + $0x98] sm:$0xf]
  %v56 = vld [vmem:[%s1 + $0x9c] sm:$0xf]
  %v57 = vld [vmem:[%s1 + $0xa0] sm:$0xf]
  %v58 = vld [vmem:[%s1 + $0xa4] sm:$0xf]
  %v59 = vld [vmem:[%s1 + $0xa8] sm:$0xf]
  %v60 = vld [vmem:[%s1 + $0xac] sm:$0xf]
  %v61 = vld [vmem:[%s1 + $0xb0] sm:$0xf]
  %v62 = vld [vmem:[%s1 + $0xb4] sm:$0xf]
  %v63 = vld [vmem:[%s1 + $0xb8] sm:$0xf]
  %v64 = vld [vmem:[%s1 + $0xbc] sm:$0xf]
  %v65 = vld [vmem:[%s1 + $0xc0] sm:$0xf]
  %v66 = vld [vmem:[%s1 + $0xc4] sm:$0xf]
  %v67 = vld [vmem:[%s1 + $0xc8] sm:$0xf]
  %v68 = vld [vmem:[%s1 + $0xcc] sm:$0xf]
  %v69 = vld [vmem:[%s1 + $0xd0] sm:$0xf]
  %v70 = vld [vmem:[%s1 + $0xd4] sm:$0xf]
  %v71 = vld [vmem:[%s2] sm:$0xff]
  %73 = vset.pattern.permute.xlu0 0
  %74 = vperm.xlu0 %73, %v71
  %v75 = vpop.permute.xlu0 %74
  %v79 = vunpack.c.l.b16 %v15
  %v80 = vunpack.c.h.b16 %v15
  %v81 = vunpack.c.l.b16 %v16
  %v82 = vunpack.c.h.b16 %v16
  %v83 = vpack.c.b16 %v79, %v79
  %v84 = vpack.c.b16 %v80, %v80
  %v85 = vpack.c.b16 %v81, %v81
  %v86 = vpack.c.b16 %v82, %v82
  %v144 = vunpack.c.l.b16 %v17
  %v145 = vunpack.c.l.b16 %v18
  %v146 = vunpack.c.l.b16 %v19
  %v147 = vunpack.c.l.b16 %v20
  %v148 = vunpack.c.l.b16 %v21
  %v149 = vunpack.c.l.b16 %v22
  %v150 = vunpack.c.l.b16 %v23
  %v151 = vunpack.c.l.b16 %v24
  %v152 = vunpack.c.l.b16 %v25
  %v153 = vunpack.c.l.b16 %v26
  %v154 = vunpack.c.l.b16 %v27
  %v155 = vunpack.c.l.b16 %v28
  %v156 = vunpack.c.l.b16 %v29
  %v157 = vunpack.c.l.b16 %v30
  %v158 = vunpack.c.l.b16 %v31
  %v159 = vunpack.c.l.b16 %v32
  %v160 = vunpack.c.l.b16 %v33
  %v161 = vunpack.c.l.b16 %v34
  %v162 = vunpack.c.l.b16 %v35
  %v163 = vunpack.c.l.b16 %v36
  %v164 = vunpack.c.l.b16 %v37
  %v165 = vunpack.c.l.b16 %v38
  %v166 = vunpack.c.l.b16 %v39
  %v167 = vunpack.c.l.b16 %v40
  %v168 = vunpack.c.l.b16 %v41
  %v169 = vunpack.c.l.b16 %v42
  %v170 = vunpack.c.l.b16 %v43
  %v171 = vunpack.c.l.b16 %v44
  %v172 = vunpack.c.l.b16 %v45
  %v173 = vunpack.c.l.b16 %v46
  %v174 = vunpack.c.l.b16 %v47
  %v175 = vunpack.c.l.b16 %v48
  %v176 = vunpack.c.l.b16 %v49
  %v177 = vunpack.c.l.b16 %v50
  %v178 = vunpack.c.l.b16 %v51
  %v179 = vunpack.c.l.b16 %v52
  %v180 = vunpack.c.l.b16 %v53
  %v181 = vunpack.c.l.b16 %v54
  %v182 = vunpack.c.l.b16 %v55
  %v183 = vunpack.c.l.b16 %v56
  %v184 = vunpack.c.l.b16 %v57
  %v185 = vunpack.c.l.b16 %v58
  %v186 = vunpack.c.l.b16 %v59
  %v187 = vunpack.c.l.b16 %v60
  %v188 = vunpack.c.l.b16 %v61
  %v189 = vunpack.c.l.b16 %v62
  %v190 = vunpack.c.l.b16 %v63
  %v191 = vunpack.c.l.b16 %v64
  %v192 = vunpack.c.l.b16 %v65
  %v193 = vunpack.c.l.b16 %v66
  %v194 = vunpack.c.l.b16 %v67
  %v195 = vunpack.c.l.b16 %v68
  %v196 = vunpack.c.l.b16 %v69
  %v197 = vunpack.c.l.b16 %v70
  %v198 = vpack.c.b16 %v145, %v144
  %v199 = vpack.c.b16 %v147, %v146
  %v200 = vpack.c.b16 %v149, %v148
  %v201 = vpack.c.b16 %v151, %v150
  %v202 = vpack.c.b16 %v153, %v152
  %v203 = vpack.c.b16 %v155, %v154
  %v204 = vpack.c.b16 %v157, %v156
  %v205 = vpack.c.b16 %v159, %v158
  %v206 = vpack.c.b16 %v161, %v160
  %v207 = vpack.c.b16 %v163, %v162
  %v208 = vpack.c.b16 %v165, %v164
  %v209 = vpack.c.b16 %v167, %v166
  %v210 = vpack.c.b16 %v169, %v168
  %v211 = vpack.c.b16 %v171, %v170
  %v212 = vpack.c.b16 %v173, %v172
  %v213 = vpack.c.b16 %v175, %v174
  %v214 = vpack.c.b16 %v177, %v176
  %v215 = vpack.c.b16 %v179, %v178
  %v216 = vpack.c.b16 %v181, %v180
  %v217 = vpack.c.b16 %v183, %v182
  %v218 = vpack.c.b16 %v185, %v184
  %v219 = vpack.c.b16 %v187, %v186
  %v220 = vpack.c.b16 %v189, %v188
  %v221 = vpack.c.b16 %v191, %v190
  %v222 = vpack.c.b16 %v193, %v192
  %v223 = vpack.c.b16 %v195, %v194
  %v224 = vpack.c.b16 %v197, %v196
  %vm252 = vcmask 392192
  %v254 = vsel %vm252, %v86, 0
  %256 = vmatpush.bf16.msra.mxu0 %v205
  %257 = vmatpush.bf16.msra.mxu0 %v204
  %258 = vmatpush.bf16.msra.mxu0 %v203
  %259 = vmatpush.bf16.msra.mxu0 %v202
  %260 = vmatpush.bf16.msra.mxu0 %v201
  %261 = vmatpush.bf16.msra.mxu0 %v200
  %262 = vmatpush.bf16.msra.mxu0 %v199
  %263 = vmatpush.bf16.msra.mxu0 %v198
  %264 = vmatmul.bf16.gmra.mxu0 %v83
  %v265 = vpop.f32.mrf.mxu0
  %v266 = vadd.f32 %v75, %v265
  %v267 = vpop.f32.mrf.mxu0
  %268 = vdwg.mxu0
  %269 = vmatpush.bf16.msra.mxu0 %v213
  %270 = vmatpush.bf16.msra.mxu0 %v212
  %271 = vmatpush.bf16.msra.mxu0 %v211
  %272 = vmatpush.bf16.msra.mxu0 %v210
  %273 = vmatpush.bf16.msra.mxu0 %v209
  %274 = vmatpush.bf16.msra.mxu0 %v208
  %275 = vmatpush.bf16.msra.mxu0 %v207
  %276 = vmatpush.bf16.msra.mxu0 %v206
  %277 = vmatmul.bf16.gmra.mxu0 %v84
  %v278 = vpop.f32.mrf.mxu0
  %v279 = vadd.f32 %v266, %v278
  %v280 = vpop.f32.mrf.mxu0
  %281 = vdwg.mxu0
  %282 = vmatpush.bf16.msra.mxu0 %v221
  %283 = vmatpush.bf16.msra.mxu0 %v220
  %284 = vmatpush.bf16.msra.mxu0 %v219
  %285 = vmatpush.bf16.msra.mxu0 %v218
  %286 = vmatpush.bf16.msra.mxu0 %v217
  %287 = vmatpush.bf16.msra.mxu0 %v216
  %288 = vmatpush.bf16.msra.mxu0 %v215
  %289 = vmatpush.bf16.msra.mxu0 %v214
  %290 = vmatmul.bf16.gmra.mxu0 %v85
  %v291 = vpop.f32.mrf.mxu0
  %v292 = vadd.f32 %v279, %v291
  %v293 = vpop.f32.mrf.mxu0
  %294 = vdwg.mxu0
  %295 = vmatpush.bf16.msra.mxu0 0
  %296 = vmatpush.bf16.msra.mxu0 0
  %297 = vmatpush.bf16.msra.mxu0 0
  %298 = vmatpush.bf16.msra.mxu0 0
  %299 = vmatpush.bf16.msra.mxu0 0
  %300 = vmatpush.bf16.msra.mxu0 %v224
  %301 = vmatpush.bf16.msra.mxu0 %v223
  %302 = vmatpush.bf16.msra.mxu0 %v222
  %303 = vmatmul.bf16.gmra.mxu0 %v254
  %v304 = vpop.f32.mrf.mxu0
  %v305 = vadd.f32 %v292, %v304
  %v306 = vpop.f32.mrf.mxu0
  %307 = vdwg.mxu0
  %v308 = vpack.c.bf16 %v305, %v305
  %309 = vst [vmem:[%s3] sm:$0xf] %v308
  // Predicated region
  $region14: #{calo_ae_forward.10} parent=0 // pred_check
    _
  $region15: #{calo_ae_forward.10} parent=0 // pred_check_branch
    %311 = sbr.rel (0) target = $region17
  $region16: #{calo_ae_forward.10} parent=0 // pred_region
    _
  $region17: #{calo_ae_forward.10} parent=0 // pred_fallthru
    _
  // Predicated region
  $region18: #{calo_ae_forward.10} parent=0 // pred_check
    _
  $region19: #{calo_ae_forward.10} parent=0 // pred_check_branch
    %313 = sbr.rel (0) target = $region21
  $region20: #{calo_ae_forward.10} parent=0 // pred_region
    _
  $region21: #{calo_ae_forward.10} parent=0 // pred_fallthru
    _

// kernel: calo_ae_forward.11
$region0: #{calo_ae_forward.11}
  #allocation0 [shape = 'u32[]', space=smem, size = 0x4, offset = 0x4, fixed_abs, tag = 'smem constant byte address 0x4 - core index']
  #allocation1 [shape = 'u32[72,128]{1,0:T(1,128)}', space=vmem, size = 0x9000, scoped, tag = 'internal scratch']
  %s0 = inlined_call_operand.vmem [shape: bf16[16,27], index: 0, kind: input, shape index: {}]
  %s1 = inlined_call_operand.vmem [shape: bf16[27,128], index: 1, kind: input, shape index: {}]
  %s2 = inlined_call_operand.vmem [shape: f32[16,1], index: 2, kind: input, shape index: {}]
  %s3 = inlined_call_operand.vmem [shape: bf16[16,128], index: 3, kind: output, shape index: {}]
  %s4 = sld [smem:[#allocation0]]
  $region22: #{calo_ae_forward.11} parent=0
    _
  %s6 = ssub.s32 1, %s4
  %s7 = scalar_select 0, %s6, %s4
  // Predicated region
  $region2: #{calo_ae_forward.11} parent=0 // pred_check
    _
  $region3: #{calo_ae_forward.11} parent=0 // pred_check_branch
    %9 = sbr.rel (0) target = $region5
  $region4: #{calo_ae_forward.11} parent=0 // pred_region
    _
  $region5: #{calo_ae_forward.11} parent=0 // pred_fallthru
    _
  // Predicated region
  $region6: #{calo_ae_forward.11} parent=0 // pred_check
    _
  $region7: #{calo_ae_forward.11} parent=0 // pred_check_branch
    %11 = sbr.rel (0) target = $region9
  $region8: #{calo_ae_forward.11} parent=0 // pred_region
    _
  $region9: #{calo_ae_forward.11} parent=0 // pred_fallthru
    _
  // Predicated region
  $region10: #{calo_ae_forward.11} parent=0 // pred_check
    _
  $region11: #{calo_ae_forward.11} parent=0 // pred_check_branch
    %13 = sbr.rel (0) target = $region13
  $region12: #{calo_ae_forward.11} parent=0 // pred_region
    _
  $region13: #{calo_ae_forward.11} parent=0 // pred_fallthru
    _
  %v15 = vld [vmem:[%s0] sm:$0xf]
  %v16 = vld [vmem:[%s0 + $0x4] sm:$0xf]
  %v17 = vld [vmem:[%s1] sm:$0xf]
  %v18 = vld [vmem:[%s1 + $0x4] sm:$0xf]
  %v19 = vld [vmem:[%s1 + $0x8] sm:$0xf]
  %v20 = vld [vmem:[%s1 + $0xc] sm:$0x3]
  %v21 = vld [vmem:[%s2] sm:$0xff]
  %v22 = vld [vmem:[%s2 + $0x8] sm:$0xff]
  %24 = vset.pattern.permute.xlu0 0
  %25 = vperm.xlu0 %24, %v21
  %v26 = vpop.permute.xlu0 %25
  %29 = vset.pattern.permute.xlu0 0
  %30 = vperm.xlu0 %29, %v22
  %v31 = vpop.permute.xlu0 %30
  %v35 = vunpack.c.l.b16 %v15
  %v36 = vunpack.c.l.b16 %v16
  %v37 = vpack.c.b16 %v36, %v35
  %v42 = vunpack.c.l.b16 %v17
  %v43 = vunpack.c.l.b16 %v18
  %v44 = vunpack.c.l.b16 %v19
  %v45 = vunpack.c.l.b16 %v20
  %v46 = vpack.c.b16 %v43, %v42
  %v47 = vpack.c.b16 %v45, %v44
  %vm49 = vcmask 220160
  %v51 = vsel %vm49, %v37, 0
  %vm53 = vcmask 1044480
  %vm54 = vcmask 1045504
  %v55 = vsel %vm53, 4294967295, 65535
  %v56 = vsel %vm54, %v55, 0
  %v58 = vand.u32 %v47, %v56
  %60 = vmatpush.bf16.msra.mxu0 0
  %61 = vmatpush.bf16.msra.mxu0 0
  %62 = vmatpush.bf16.msra.mxu0 0
  %63 = vmatpush.bf16.msra.mxu0 0
  %64 = vmatpush.bf16.msra.mxu0 0
  %65 = vmatpush.bf16.msra.mxu0 0
  %66 = vmatpush.bf16.msra.mxu0 %v58
  %67 = vmatpush.bf16.msra.mxu0 %v46
  %68 = vmatmul.bf16.gmra.mxu0 %v51
  %v69 = vpop.f32.mrf.mxu0
  %v70 = vadd.f32 %v26, %v69
  %v71 = vpop.f32.mrf.mxu0
  %v72 = vadd.f32 %v31, %v71
  %73 = vdwg.mxu0
  %v74 = vsub.f32 0.0, %v70
  %v75 = vsub.f32 0.0, %v72
  %v76 = vmul.f32 %v74, 1.442695
  %v77 = vpow.pop %v76
  %v78 = vmul.f32 %v75, 1.442695
  %v79 = vpow.pop %v78
  %v80 = vadd.f32 %v77, 1.0
  %v81 = vadd.f32 %v79, 1.0
  %v82 = vrcp.pop %v80
  %v83 = vmul.f32 %v80, %v82
  %v84 = vsub.f32 1.0, %v83
  %v85 = vmul.f32 %v82, %v84
  %v86 = vadd.f32 %v82, %v85
  %vm87 = vweird.f32 %v80
  %vm88 = vweird.f32 %v82
  %vm89 = vmor %vm87, %vm88
  %v90 = vsel %vm89, %v82, %v86
  %v91 = vand.u32 2147483647, %v80
  %vm92 = vcmp.eq.f32.partialorder %v91, 8.507059e+37
  %v93 = vand.u32 %v80, 2147483648
  %v94 = vor.u32 1.1754944e-38, %v93
  %v95 = vsel %vm92, %v94, %v90
  %v96 = vmul.f32 1.0, %v95
  %v97 = vrcp.pop %v81
  %v98 = vmul.f32 %v81, %v97
  %v99 = vsub.f32 1.0, %v98
  %v100 = vmul.f32 %v97, %v99
  %v101 = vadd.f32 %v97, %v100
  %vm102 = vweird.f32 %v81
  %vm103 = vweird.f32 %v97
  %vm104 = vmor %vm102, %vm103
  %v105 = vsel %vm104, %v97, %v101
  %v106 = vand.u32 2147483647, %v81
  %vm107 = vcmp.eq.f32.partialorder %v106, 8.507059e+37
  %v108 = vand.u32 %v81, 2147483648
  %v109 = vor.u32 1.1754944e-38, %v108
  %v110 = vsel %vm107, %v109, %v105
  %v111 = vmul.f32 1.0, %v110
  %v112 = vmul.f32 %v70, %v96
  %v113 = vmul.f32 %v72, %v111
  %v114 = vpack.c.bf16 %v112, %v112
  %v115 = vpack.c.bf16 %v113, %v113
  %116 = vst [vmem:[%s3] sm:$0xf] %v114
  %117 = vst [vmem:[%s3 + $0x4] sm:$0xf] %v115
  // Predicated region
  $region14: #{calo_ae_forward.11} parent=0 // pred_check
    _
  $region15: #{calo_ae_forward.11} parent=0 // pred_check_branch
    %119 = sbr.rel (0) target = $region17
  $region16: #{calo_ae_forward.11} parent=0 // pred_region
    _
  $region17: #{calo_ae_forward.11} parent=0 // pred_fallthru
    _
  // Predicated region
  $region18: #{calo_ae_forward.11} parent=0 // pred_check
    _
  $region19: #{calo_ae_forward.11} parent=0 // pred_check_branch
    %121 = sbr.rel (0) target = $region21
  $region20: #{calo_ae_forward.11} parent=0 // pred_region
    _
  $region21: #{calo_ae_forward.11} parent=0 // pred_fallthru
    _

// kernel: calo_ae_forward.12
$region0: #{calo_ae_forward.12}
  #allocation0 [shape = 'u32[]', space=smem, size = 0x4, offset = 0x4, fixed_abs, tag = 'smem constant byte address 0x4 - core index']
  #allocation1 [shape = 'u32[72,128]{1,0:T(1,128)}', space=vmem, size = 0x9000, scoped, tag = 'internal scratch']
  %s0 = inlined_call_operand.vmem [shape: bf16[64,432], index: 0, kind: input, shape index: {}]
  %s1 = inlined_call_operand.vmem [shape: bf16[432,128], index: 1, kind: input, shape index: {}]
  %s2 = inlined_call_operand.vmem [shape: f32[64,1], index: 2, kind: input, shape index: {}]
  %s3 = inlined_call_operand.vmem [shape: bf16[64,128], index: 3, kind: output, shape index: {}]
  %s4 = sld [smem:[#allocation0]]
  $region22: #{calo_ae_forward.12} parent=0
    _
  %s6 = ssub.s32 1, %s4
  %s7 = scalar_select 0, %s6, %s4
  // Predicated region
  $region2: #{calo_ae_forward.12} parent=0 // pred_check
    _
  $region3: #{calo_ae_forward.12} parent=0 // pred_check_branch
    %9 = sbr.rel (0) target = $region5
  $region4: #{calo_ae_forward.12} parent=0 // pred_region
    _
  $region5: #{calo_ae_forward.12} parent=0 // pred_fallthru
    _
  // Predicated region
  $region6: #{calo_ae_forward.12} parent=0 // pred_check
    _
  $region7: #{calo_ae_forward.12} parent=0 // pred_check_branch
    %11 = sbr.rel (0) target = $region9
  $region8: #{calo_ae_forward.12} parent=0 // pred_region
    _
  $region9: #{calo_ae_forward.12} parent=0 // pred_fallthru
    _
  // Predicated region
  $region10: #{calo_ae_forward.12} parent=0 // pred_check
    _
  $region11: #{calo_ae_forward.12} parent=0 // pred_check_branch
    %13 = sbr.rel (0) target = $region13
  $region12: #{calo_ae_forward.12} parent=0 // pred_region
    _
  $region13: #{calo_ae_forward.12} parent=0 // pred_fallthru
    _
  %v15 = vld [vmem:[%s0] sm:$0xff]
  %v16 = vld [vmem:[%s0 + $0x8] sm:$0xff]
  %v17 = vld [vmem:[%s0 + $0x10] sm:$0xff]
  %v18 = vld [vmem:[%s0 + $0x18] sm:$0xff]
  %v19 = vld [vmem:[%s0 + $0x20] sm:$0xff]
  %v20 = vld [vmem:[%s0 + $0x28] sm:$0xff]
  %v21 = vld [vmem:[%s0 + $0x30] sm:$0xff]
  %v22 = vld [vmem:[%s0 + $0x38] sm:$0xff]
  %v23 = vld [vmem:[%s0 + $0x40] sm:$0xff]
  %v24 = vld [vmem:[%s0 + $0x48] sm:$0xff]
  %v25 = vld [vmem:[%s0 + $0x50] sm:$0xff]
  %v26 = vld [vmem:[%s0 + $0x58] sm:$0xff]
  %v27 = vld [vmem:[%s0 + $0x60] sm:$0xff]
  %v28 = vld [vmem:[%s0 + $0x68] sm:$0xff]
  %v29 = vld [vmem:[%s0 + $0x70] sm:$0xff]
  %v30 = vld [vmem:[%s0 + $0x78] sm:$0xff]
  %v31 = vld [vmem:[%s1] sm:$0xf]
  %v32 = vld [vmem:[%s1 + $0x4] sm:$0xf]
  %v33 = vld [vmem:[%s1 + $0x8] sm:$0xf]
  %v34 = vld [vmem:[%s1 + $0xc] sm:$0xf]
  %v35 = vld [vmem:[%s1 + $0x10] sm:$0xf]
  %v36 = vld [vmem:[%s1 + $0x14] sm:$0xf]
  %v37 = vld [vmem:[%s1 + $0x18] sm:$0xf]
  %v38 = vld [vmem:[%s1 + $0x1c] sm:$0xf]
  %v39 = vld [vmem:[%s1 + $0x20] sm:$0xf]
  %v40 = vld [vmem:[%s1 + $0x24] sm:$0xf]
  %v41 = vld [vmem:[%s1 + $0x28] sm:$0xf]
  %v42 = vld [vmem:[%s1 + $0x2c] sm:$0xf]
  %v43 = vld [vmem:[%s1 + $0x30] sm:$0xf]
  %v44 = vld [vmem:[%s1 + $0x34] sm:$0xf]
  %v45 = vld [vmem:[%s1 + $0x38] sm:$0xf]
  %v46 = vld [vmem:[%s1 + $0x3c] sm:$0xf]
  %v47 = vld [vmem:[%s1 + $0x40] sm:$0xf]
  %v48 = vld [vmem:[%s1 + $0x44] sm:$0xf]
  %v49 = vld [vmem:[%s1 + $0x48] sm:$0xf]
  %v50 = vld [vmem:[%s1 + $0x4c] sm:$0xf]
  %v51 = vld [vmem:[%s1 + $0x50] sm:$0xf]
  %v52 = vld [vmem:[%s1 + $0x54] sm:$0xf]
  %v53 = vld [vmem:[%s1 + $0x58] sm:$0xf]
  %v54 = vld [vmem:[%s1 + $0x5c] sm:$0xf]
  %v55 = vld [vmem:[%s1 + $0x60] sm:$0xf]
  %v56 = vld [vmem:[%s1 + $0x64] sm:$0xf]
  %v57 = vld [vmem:[%s1 + $0x68] sm:$0xf]
  %v58 = vld [vmem:[%s1 + $0x6c] sm:$0xf]
  %v59 = vld [vmem:[%s1 + $0x70] sm:$0xf]
  %v60 = vld [vmem:[%s1 + $0x74] sm:$0xf]
  %v61 = vld [vmem:[%s1 + $0x78] sm:$0xf]
  %v62 = vld [vmem:[%s1 + $0x7c] sm:$0xf]
  %v63 = vld [vmem:[%s1 + $0x80] sm:$0xf]
  %v64 = vld [vmem:[%s1 + $0x84] sm:$0xf]
  %v65 = vld [vmem:[%s1 + $0x88] sm:$0xf]
  %v66 = vld [vmem:[%s1 + $0x8c] sm:$0xf]
  %v67 = vld [vmem:[%s1 + $0x90] sm:$0xf]
  %v68 = vld [vmem:[%s1 + $0x94] sm:$0xf]
  %v69 = vld [vmem:[%s1 + $0x98] sm:$0xf]
  %v70 = vld [vmem:[%s1 + $0x9c] sm:$0xf]
  %v71 = vld [vmem:[%s1 + $0xa0] sm:$0xf]
  %v72 = vld [vmem:[%s1 + $0xa4] sm:$0xf]
  %v73 = vld [vmem:[%s1 + $0xa8] sm:$0xf]
  %v74 = vld [vmem:[%s1 + $0xac] sm:$0xf]
  %v75 = vld [vmem:[%s1 + $0xb0] sm:$0xf]
  %v76 = vld [vmem:[%s1 + $0xb4] sm:$0xf]
  %v77 = vld [vmem:[%s1 + $0xb8] sm:$0xf]
  %v78 = vld [vmem:[%s1 + $0xbc] sm:$0xf]
  %v79 = vld [vmem:[%s1 + $0xc0] sm:$0xf]
  %v80 = vld [vmem:[%s1 + $0xc4] sm:$0xf]
  %v81 = vld [vmem:[%s1 + $0xc8] sm:$0xf]
  %v82 = vld [vmem:[%s1 + $0xcc] sm:$0xf]
  %v83 = vld [vmem:[%s1 + $0xd0] sm:$0xf]
  %v84 = vld [vmem:[%s1 + $0xd4] sm:$0xf]
  %v85 = vld [vmem:[%s2] sm:$0xff]
  %v86 = vld [vmem:[%s2 + $0x8] sm:$0xff]
  %v87 = vld [vmem:[%s2 + $0x10] sm:$0xff]
  %v88 = vld [vmem:[%s2 + $0x18] sm:$0xff]
  %v89 = vld [vmem:[%s2 + $0x20] sm:$0xff]
  %v90 = vld [vmem:[%s2 + $0x28] sm:$0xff]
  %v91 = vld [vmem:[%s2 + $0x30] sm:$0xff]
  %v92 = vld [vmem:[%s2 + $0x38] sm:$0xff]
  %94 = vset.pattern.permute.xlu0 0
  %95 = vperm.xlu0 %94, %v85
  %v96 = vpop.permute.xlu0 %95
  %99 = vset.pattern.permute.xlu0 0
  %100 = vperm.xlu0 %99, %v86
  %v101 = vpop.permute.xlu0 %100
  %104 = vset.pattern.permute.xlu0 0
  %105 = vperm.xlu0 %104, %v87
  %v106 = vpop.permute.xlu0 %105
  %109 = vset.pattern.permute.xlu0 0
  %110 = vperm.xlu0 %109, %v88
  %v111 = vpop.permute.xlu0 %110
  %114 = vset.pattern.permute.xlu0 0
  %115 = vperm.xlu0 %114, %v89
  %v116 = vpop.permute.xlu0 %115
  %119 = vset.pattern.permute.xlu0 0
  %120 = vperm.xlu0 %119, %v90
  %v121 = vpop.permute.xlu0 %120
  %124 = vset.pattern.permute.xlu0 0
  %125 = vperm.xlu0 %124, %v91
  %v126 = vpop.permute.xlu0 %125
  %129 = vset.pattern.permute.xlu0 0
  %130 = vperm.xlu0 %129, %v92
  %v131 = vpop.permute.xlu0 %130
  %v149 = vunpack.c.l.b16 %v15
  %v150 = vunpack.c.h.b16 %v15
  %v151 = vunpack.c.l.b16 %v16
  %v152 = vunpack.c.h.b16 %v16
  %v153 = vunpack.c.l.b16 %v17
  %v154 = vunpack.c.h.b16 %v17
  %v155 = vunpack.c.l.b16 %v18
  %v156 = vunpack.c.h.b16 %v18
  %v157 = vunpack.c.l.b16 %v19
  %v158 = vunpack.c.h.b16 %v19
  %v159 = vunpack.c.l.b16 %v20
  %v160 = vunpack.c.h.b16 %v20
  %v161 = vunpack.c.l.b16 %v21
  %v162 = vunpack.c.h.b16 %v21
  %v163 = vunpack.c.l.b16 %v22
  %v164 = vunpack.c.h.b16 %v22
  %v165 = vunpack.c.l.b16 %v23
  %v166 = vunpack.c.h.b16 %v23
  %v167 = vunpack.c.l.b16 %v24
  %v168 = vunpack.c.h.b16 %v24
  %v169 = vunpack.c.l.b16 %v25
  %v170 = vunpack.c.h.b16 %v25
  %v171 = vunpack.c.l.b16 %v26
  %v172 = vunpack.c.h.b16 %v26
  %v173 = vunpack.c.l.b16 %v27
  %v174 = vunpack.c.h.b16 %v27
  %v175 = vunpack.c.l.b16 %v28
  %v176 = vunpack.c.h.b16 %v28
  %v177 = vunpack.c.l.b16 %v29
  %v178 = vunpack.c.h.b16 %v29
  %v179 = vunpack.c.l.b16 %v30
  %v180 = vunpack.c.h.b16 %v30
  %v181 = vpack.c.b16 %v153, %v149
  %v182 = vpack.c.b16 %v154, %v150
  %v183 = vpack.c.b16 %v155, %v151
  %v184 = vpack.c.b16 %v156, %v152
  %v185 = vpack.c.b16 %v161, %v157
  %v186 = vpack.c.b16 %v162, %v158
  %v187 = vpack.c.b16 %v163, %v159
  %v188 = vpack.c.b16 %v164, %v160
  %v189 = vpack.c.b16 %v169, %v165
  %v190 = vpack.c.b16 %v170, %v166
  %v191 = vpack.c.b16 %v171, %v167
  %v192 = vpack.c.b16 %v172, %v168
  %v193 = vpack.c.b16 %v177, %v173
  %v194 = vpack.c.b16 %v178, %v174
  %v195 = vpack.c.b16 %v179, %v175
  %v196 = vpack.c.b16 %v180, %v176
  %v263 = vunpack.c.l.b16 %v31
  %v264 = vunpack.c.l.b16 %v32
  %v265 = vunpack.c.l.b16 %v33
  %v266 = vunpack.c.l.b16 %v34
  %v267 = vunpack.c.l.b16 %v35
  %v268 = vunpack.c.l.b16 %v36
  %v269 = vunpack.c.l.b16 %v37
  %v270 = vunpack.c.l.b16 %v38
  %v271 = vunpack.c.l.b16 %v39
  %v272 = vunpack.c.l.b16 %v40
  %v273 = vunpack.c.l.b16 %v41
  %v274 = vunpack.c.l.b16 %v42
  %v275 = vunpack.c.l.b16 %v43
  %v276 = vunpack.c.l.b16 %v44
  %v277 = vunpack.c.l.b16 %v45
  %v278 = vunpack.c.l.b16 %v46
  %v279 = vunpack.c.l.b16 %v47
  %v280 = vunpack.c.l.b16 %v48
  %v281 = vunpack.c.l.b16 %v49
  %v282 = vunpack.c.l.b16 %v50
  %v283 = vunpack.c.l.b16 %v51
  %v284 = vunpack.c.l.b16 %v52
  %v285 = vunpack.c.l.b16 %v53
  %v286 = vunpack.c.l.b16 %v54
  %v287 = vunpack.c.l.b16 %v55
  %v288 = vunpack.c.l.b16 %v56
  %v289 = vunpack.c.l.b16 %v57
  %v290 = vunpack.c.l.b16 %v58
  %v291 = vunpack.c.l.b16 %v59
  %v292 = vunpack.c.l.b16 %v60
  %v293 = vunpack.c.l.b16 %v61
  %v294 = vunpack.c.l.b16 %v62
  %v295 = vunpack.c.l.b16 %v63
  %v296 = vunpack.c.l.b16 %v64
  %v297 = vunpack.c.l.b16 %v65
  %v298 = vunpack.c.l.b16 %v66
  %v299 = vunpack.c.l.b16 %v67
  %v300 = vunpack.c.l.b16 %v68
  %v301 = vunpack.c.l.b16 %v69
  %v302 = vunpack.c.l.b16 %v70
  %v303 = vunpack.c.l.b16 %v71
  %v304 = vunpack.c.l.b16 %v72
  %v305 = vunpack.c.l.b16 %v73
  %v306 = vunpack.c.l.b16 %v74
  %v307 = vunpack.c.l.b16 %v75
  %v308 = vunpack.c.l.b16 %v76
  %v309 = vunpack.c.l.b16 %v77
  %v310 = vunpack.c.l.b16 %v78
  %v311 = vunpack.c.l.b16 %v79
  %v312 = vunpack.c.l.b16 %v80
  %v313 = vunpack.c.l.b16 %v81
  %v314 = vunpack.c.l.b16 %v82
  %v315 = vunpack.c.l.b16 %v83
  %v316 = vunpack.c.l.b16 %v84
  %v317 = vpack.c.b16 %v264, %v263
  %v318 = vpack.c.b16 %v266, %v265
  %v319 = vpack.c.b16 %v268, %v267
  %v320 = vpack.c.b16 %v270, %v269
  %v321 = vpack.c.b16 %v272, %v271
  %v322 = vpack.c.b16 %v274, %v273
  %v323 = vpack.c.b16 %v276, %v275
  %v324 = vpack.c.b16 %v278, %v277
  %v325 = vpack.c.b16 %v280, %v279
  %v326 = vpack.c.b16 %v282, %v281
  %v327 = vpack.c.b16 %v284, %v283
  %v328 = vpack.c.b16 %v286, %v285
  %v329 = vpack.c.b16 %v288, %v287
  %v330 = vpack.c.b16 %v290, %v289
  %v331 = vpack.c.b16 %v292, %v291
  %v332 = vpack.c.b16 %v294, %v293
  %v333 = vpack.c.b16 %v296, %v295
  %v334 = vpack.c.b16 %v298, %v297
  %v335 = vpack.c.b16 %v300, %v299
  %v336 = vpack.c.b16 %v302, %v301
  %v337 = vpack.c.b16 %v304, %v303
  %v338 = vpack.c.b16 %v306, %v305
  %v339 = vpack.c.b16 %v308, %v307
  %v340 = vpack.c.b16 %v310, %v309
  %v341 = vpack.c.b16 %v312, %v311
  %v342 = vpack.c.b16 %v314, %v313
  %v343 = vpack.c.b16 %v316, %v315
  %vm371 = vcmask 392192
  %v373 = vsel %vm371, %v184, 0
  %v376 = vsel %vm371, %v188, 0
  %v379 = vsel %vm371, %v192, 0
  %v382 = vsel %vm371, %v196, 0
  %384 = vmatpush.bf16.msra.mxu0 %v324
  %385 = vmatpush.bf16.msra.mxu0 %v323
  %386 = vmatpush.bf16.msra.mxu0 %v322
  %387 = vmatpush.bf16.msra.mxu0 %v321
  %388 = vmatpush.bf16.msra.mxu0 %v320
  %389 = vmatpush.bf16.msra.mxu0 %v319
  %390 = vmatpush.bf16.msra.mxu0 %v318
  %391 = vmatpush.bf16.msra.mxu0 %v317
  %392 = vmatmul.bf16.gmra.mxu0 %v181
  %v393 = vpop.f32.mrf.mxu0
  %v394 = vadd.f32 %v96, %v393
  %v395 = vpop.f32.mrf.mxu0
  %v396 = vadd.f32 %v101, %v395
  %397 = vmatmul.bf16.gmra.mxu0 %v185
  %v398 = vpop.f32.mrf.mxu0
  %v399 = vadd.f32 %v106, %v398
  %v400 = vpop.f32.mrf.mxu0
  %v401 = vadd.f32 %v111, %v400
  %402 = vmatmul.bf16.gmra.mxu0 %v189
  %v403 = vpop.f32.mrf.mxu0
  %v404 = vadd.f32 %v116, %v403
  %v405 = vpop.f32.mrf.mxu0
  %v406 = vadd.f32 %v121, %v405
  %407 = vmatmul.bf16.gmra.mxu0 %v193
  %v408 = vpop.f32.mrf.mxu0
  %v409 = vadd.f32 %v126, %v408
  %v410 = vpop.f32.mrf.mxu0
  %v411 = vadd.f32 %v131, %v410
  %412 = vdwg.mxu0
  %413 = vmatpush.bf16.msra.mxu0 %v332
  %414 = vmatpush.bf16.msra.mxu0 %v331
  %415 = vmatpush.bf16.msra.mxu0 %v330
  %416 = vmatpush.bf16.msra.mxu0 %v329
  %417 = vmatpush.bf16.msra.mxu0 %v328
  %418 = vmatpush.bf16.msra.mxu0 %v327
  %419 = vmatpush.bf16.msra.mxu0 %v326
  %420 = vmatpush.bf16.msra.mxu0 %v325
  %421 = vmatmul.bf16.gmra.mxu0 %v182
  %v422 = vpop.f32.mrf.mxu0
  %v423 = vadd.f32 %v394, %v422
  %v424 = vpop.f32.mrf.mxu0
  %v425 = vadd.f32 %v396, %v424
  %426 = vmatmul.bf16.gmra.mxu0 %v186
  %v427 = vpop.f32.mrf.mxu0
  %v428 = vadd.f32 %v399, %v427
  %v429 = vpop.f32.mrf.mxu0
  %v430 = vadd.f32 %v401, %v429
  %431 = vmatmul.bf16.gmra.mxu0 %v190
  %v432 = vpop.f32.mrf.mxu0
  %v433 = vadd.f32 %v404, %v432
  %v434 = vpop.f32.mrf.mxu0
  %v435 = vadd.f32 %v406, %v434
  %436 = vmatmul.bf16.gmra.mxu0 %v194
  %v437 = vpop.f32.mrf.mxu0
  %v438 = vadd.f32 %v409, %v437
  %v439 = vpop.f32.mrf.mxu0
  %v440 = vadd.f32 %v411, %v439
  %441 = vdwg.mxu0
  %442 = vmatpush.bf16.msra.mxu0 %v340
  %443 = vmatpush.bf16.msra.mxu0 %v339
  %444 = vmatpush.bf16.msra.mxu0 %v338
  %445 = vmatpush.bf16.msra.mxu0 %v337
  %446 = vmatpush.bf16.msra.mxu0 %v336
  %447 = vmatpush.bf16.msra.mxu0 %v335
  %448 = vmatpush.bf16.msra.mxu0 %v334
  %449 = vmatpush.bf16.msra.mxu0 %v333
  %450 = vmatmul.bf16.gmra.mxu0 %v183
  %v451 = vpop.f32.mrf.mxu0
  %v452 = vadd.f32 %v423, %v451
  %v453 = vpop.f32.mrf.mxu0
  %v454 = vadd.f32 %v425, %v453
  %455 = vmatmul.bf16.gmra.mxu0 %v187
  %v456 = vpop.f32.mrf.mxu0
  %v457 = vadd.f32 %v428, %v456
  %v458 = vpop.f32.mrf.mxu0
  %v459 = vadd.f32 %v430, %v458
  %460 = vmatmul.bf16.gmra.mxu0 %v191
  %v461 = vpop.f32.mrf.mxu0
  %v462 = vadd.f32 %v433, %v461
  %v463 = vpop.f32.mrf.mxu0
  %v464 = vadd.f32 %v435, %v463
  %465 = vmatmul.bf16.gmra.mxu0 %v195
  %v466 = vpop.f32.mrf.mxu0
  %v467 = vadd.f32 %v438, %v466
  %v468 = vpop.f32.mrf.mxu0
  %v469 = vadd.f32 %v440, %v468
  %470 = vdwg.mxu0
  %471 = vmatpush.bf16.msra.mxu0 0
  %472 = vmatpush.bf16.msra.mxu0 0
  %473 = vmatpush.bf16.msra.mxu0 0
  %474 = vmatpush.bf16.msra.mxu0 0
  %475 = vmatpush.bf16.msra.mxu0 0
  %476 = vmatpush.bf16.msra.mxu0 %v343
  %477 = vmatpush.bf16.msra.mxu0 %v342
  %478 = vmatpush.bf16.msra.mxu0 %v341
  %479 = vmatmul.bf16.gmra.mxu0 %v373
  %v480 = vpop.f32.mrf.mxu0
  %v481 = vadd.f32 %v452, %v480
  %v482 = vpop.f32.mrf.mxu0
  %v483 = vadd.f32 %v454, %v482
  %484 = vmatmul.bf16.gmra.mxu0 %v376
  %v485 = vpop.f32.mrf.mxu0
  %v486 = vadd.f32 %v457, %v485
  %v487 = vpop.f32.mrf.mxu0
  %v488 = vadd.f32 %v459, %v487
  %489 = vmatmul.bf16.gmra.mxu0 %v379
  %v490 = vpop.f32.mrf.mxu0
  %v491 = vadd.f32 %v462, %v490
  %v492 = vpop.f32.mrf.mxu0
  %v493 = vadd.f32 %v464, %v492
  %494 = vmatmul.bf16.gmra.mxu0 %v382
  %v495 = vpop.f32.mrf.mxu0
  %v496 = vadd.f32 %v467, %v495
  %v497 = vpop.f32.mrf.mxu0
  %v498 = vadd.f32 %v469, %v497
  %499 = vdwg.mxu0
  %v500 = vpack.c.bf16 %v481, %v481
  %v501 = vpack.c.bf16 %v483, %v483
  %v502 = vpack.c.bf16 %v486, %v486
  %v503 = vpack.c.bf16 %v488, %v488
  %v504 = vpack.c.bf16 %v491, %v491
  %v505 = vpack.c.bf16 %v493, %v493
  %v506 = vpack.c.bf16 %v496, %v496
  %v507 = vpack.c.bf16 %v498, %v498
  %508 = vst [vmem:[%s3] sm:$0xf] %v500
  %509 = vst [vmem:[%s3 + $0x4] sm:$0xf] %v501
  %510 = vst [vmem:[%s3 + $0x8] sm:$0xf] %v502
  %511 = vst [vmem:[%s3 + $0xc] sm:$0xf] %v503
  %512 = vst [vmem:[%s3 + $0x10] sm:$0xf] %v504
  %513 = vst [vmem:[%s3 + $0x14] sm:$0xf] %v505
  %514 = vst [vmem:[%s3 + $0x18] sm:$0xf] %v506
  %515 = vst [vmem:[%s3 + $0x1c] sm:$0xf] %v507
  // Predicated region
  $region14: #{calo_ae_forward.12} parent=0 // pred_check
    _
  $region15: #{calo_ae_forward.12} parent=0 // pred_check_branch
    %517 = sbr.rel (0) target = $region17
  $region16: #{calo_ae_forward.12} parent=0 // pred_region
    _
  $region17: #{calo_ae_forward.12} parent=0 // pred_fallthru
    _
  // Predicated region
  $region18: #{calo_ae_forward.12} parent=0 // pred_check
    _
  $region19: #{calo_ae_forward.12} parent=0 // pred_check_branch
    %519 = sbr.rel (0) target = $region21
  $region20: #{calo_ae_forward.12} parent=0 // pred_region
    _
  $region21: #{calo_ae_forward.12} parent=0 // pred_fallthru
    _

// kernel: calo_ae_forward.13
$region0: #{calo_ae_forward.13}
  #allocation0 [shape = 'u32[]', space=smem, size = 0x4, offset = 0x4, fixed_abs, tag = 'smem constant byte address 0x4 - core index']
  #allocation1 [shape = 'u32[72,128]{1,0:T(1,128)}', space=vmem, size = 0x9000, scoped, tag = 'internal scratch']
  %s0 = inlined_call_operand.vmem [shape: bf16[8,432], index: 0, kind: input, shape index: {}]
  %s1 = inlined_call_operand.vmem [shape: bf16[432,512], index: 1, kind: input, shape index: {}]
  %s2 = inlined_call_operand.vmem [shape: f32[8,1], index: 2, kind: input, shape index: {}]
  %s3 = inlined_call_operand.vmem [shape: bf16[8,512], index: 3, kind: output, shape index: {}]
  %s4 = sld [smem:[#allocation0]]
  $region83: #{calo_ae_forward.13} parent=0
    _
  %s6 = ssub.s32 1, %s4
  %s7 = scalar_select 0, %s6, %s4
  $region1: #{calo_ae_forward.13} parent=0
    #allocation2 [shape = 'u8[442368]{0}', space=vmem, size = 0x6c000, scoped, tag = 'input window, operand 1']
    loop: start=0, step=1, limit=4
    $region2: #{calo_ae_forward.13} parent=1 // loop_pre_header
      _
    $region3: #{calo_ae_forward.13} parent=1 // loop_header
      %s9 = sphi 0, %s13
      %p10 = scmp.ge.s32.totalorder %s9, 4
      %s17 = sphi 0, %s17
      %s19 = sphi 0, %s17
      %s20 = sphi 0, %s19
      %s34 = sphi 0, %s20
      %s40 = sphi 0, %s42
      %s43 = sphi 0, %s40
      %s44 = sphi 0, %s43
      %s60 = sphi 0, %s44
      %s64 = sphi 0, %s64
      %s66 = sphi 0, %s64
      %s67 = sphi 0, %s66
      %s81 = sphi 0, %s67
      %s87 = sphi 0, %s89
      %s90 = sphi 0, %s87
      %s91 = sphi 0, %s90
      %s107 = sphi 0, %s91
    $region4: #{calo_ae_forward.13} parent=1 // loop_header_branch
      %12 = sbr.rel (%p10) target = $region8
    $region5: #{calo_ae_forward.13} parent=1 // loop_body
      %s14 = ssub.s32 %s9, 1
      %s15 = ssub.s32 %s9, 2
      %s16 = sadd.s32 %s9, 1
      %s18 = sadd.s32 %s17, 1
      %p21 = scmp.eq.s32.totalorder %s9, 1
      %p22 = scmp.ne.s32.totalorder %s17, %s19
      %p23 = scmp.eq.s32.totalorder %s9, 0
      %p24 = por %p22, %p23
      %p25 = scmp.ne.s32.totalorder %s17, %s19
      %p26 = scmp.eq.s32.totalorder %s14, 1
      %p27 = por %p25, %p26
      %p28 = scmp.ne.s32.totalorder %s19, %s20
      %p29 = scmp.eq.s32.totalorder %s14, 0
      %p30 = por %p28, %p29
      %p31 = scmp.ne.s32.totalorder %s19, %s20
      %p32 = scmp.eq.s32.totalorder %s15, 1
      %p33 = por %p31, %p32
      %p35 = scmp.ne.s32.totalorder %s20, %s34
      %p36 = scmp.eq.s32.totalorder %s15, 0
      %p37 = por %p35, %p36
      %s38 = ssub.s32 %s9, %s16
      %p39 = scmp.eq.s32.totalorder %s38, 0
      %s41 = sadd.s32 %s40, 1
      %s42 = scalar_select %p39, %s40, %s41
      %p45 = pneg %p39
      %p46 = scmp.eq.s32.totalorder %s9, 1
      %p47 = por %p45, %p46
      %p48 = scmp.ne.s32.totalorder %s40, %s43
      %p49 = scmp.eq.s32.totalorder %s9, 0
      %p50 = por %p48, %p49
      %p51 = scmp.ne.s32.totalorder %s40, %s43
      %p52 = scmp.eq.s32.totalorder %s14, 1
      %p53 = por %p51, %p52
      %p54 = scmp.ne.s32.totalorder %s43, %s44
      %p55 = scmp.eq.s32.totalorder %s14, 0
      %p56 = por %p54, %p55
      %p57 = scmp.ne.s32.totalorder %s43, %s44
      %p58 = scmp.eq.s32.totalorder %s15, 1
      %p59 = por %p57, %p58
      %p61 = scmp.ne.s32.totalorder %s44, %s60
      %p62 = scmp.eq.s32.totalorder %s15, 0
      %p63 = por %p61, %p62
      %s65 = sadd.s32 %s64, 1
      %p68 = scmp.eq.s32.totalorder %s9, 1
      %p69 = scmp.ne.s32.totalorder %s64, %s66
      %p70 = scmp.eq.s32.totalorder %s9, 0
      %p71 = por %p69, %p70
      %p72 = scmp.ne.s32.totalorder %s64, %s66
      %p73 = scmp.eq.s32.totalorder %s14, 1
      %p74 = por %p72, %p73
      %p75 = scmp.ne.s32.totalorder %s66, %s67
      %p76 = scmp.eq.s32.totalorder %s14, 0
      %p77 = por %p75, %p76
      %p78 = scmp.ne.s32.totalorder %s66, %s67
      %p79 = scmp.eq.s32.totalorder %s15, 1
      %p80 = por %p78, %p79
      %p82 = scmp.ne.s32.totalorder %s67, %s81
      %p83 = scmp.eq.s32.totalorder %s15, 0
      %p84 = por %p82, %p83
      %s85 = ssub.s32 %s9, %s16
      %p86 = scmp.eq.s32.totalorder %s85, 0
      %s88 = sadd.s32 %s87, 1
      %s89 = scalar_select %p86, %s87, %s88
      %p92 = pneg %p86
      %p93 = scmp.eq.s32.totalorder %s9, 1
      %p94 = por %p92, %p93
      %p95 = scmp.ne.s32.totalorder %s87, %s90
      %p96 = scmp.eq.s32.totalorder %s9, 0
      %p97 = por %p95, %p96
      %p98 = scmp.ne.s32.totalorder %s87, %s90
      %p99 = scmp.eq.s32.totalorder %s14, 1
      %p100 = por %p98, %p99
      %p101 = scmp.ne.s32.totalorder %s90, %s91
      %p102 = scmp.eq.s32.totalorder %s14, 0
      %p103 = por %p101, %p102
      %p104 = scmp.ne.s32.totalorder %s90, %s91
      %p105 = scmp.eq.s32.totalorder %s15, 1
      %p106 = por %p104, %p105
      %p108 = scmp.ne.s32.totalorder %s91, %s107
      %p109 = scmp.eq.s32.totalorder %s15, 0
      %p110 = por %p108, %p109
      %p111 = scmp.le.s32.totalorder 1, %s9
      %p112 = scmp.lt.s32.totalorder %s9, 3
      %p113 = pnand %p111, %p112
      %p114 = pneg %p113
      // Predicated region
      $region9: #{calo_ae_forward.13} parent=5 // pred_check
        _
      $region10: #{calo_ae_forward.13} parent=5 // pred_check_branch
        %116 = sbr.rel (%p113) target = $region12
      $region11: #{calo_ae_forward.13} parent=5 // pred_region
        %s117 = ssub.s32 %s9, 1
        // Predicated region
        $region13: #{calo_ae_forward.13} parent=11 // pred_check
          %p118 = pneg %p30
        $region14: #{calo_ae_forward.13} parent=11 // pred_check_branch
          %120 = sbr.rel (%p118) target = $region16
        $region15: #{calo_ae_forward.13} parent=11 // pred_region
          _
        $region16: #{calo_ae_forward.13} parent=11 // pred_fallthru
          _
        // Predicated region
        $region17: #{calo_ae_forward.13} parent=11 // pred_check
          %p121 = pneg %p77
        $region18: #{calo_ae_forward.13} parent=11 // pred_check_branch
          %123 = sbr.rel (%p121) target = $region20
        $region19: #{calo_ae_forward.13} parent=11 // pred_region
          _
        $region20: #{calo_ae_forward.13} parent=11 // pred_fallthru
          _
      $region12: #{calo_ae_forward.13} parent=5 // pred_fallthru
        _
      %p124 = scmp.lt.s32.totalorder %s9, 2
      // Predicated region
      $region21: #{calo_ae_forward.13} parent=5 // pred_check
        %p125 = pneg %p124
      $region22: #{calo_ae_forward.13} parent=5 // pred_check_branch
        %127 = sbr.rel (%p125) target = $region24
      $region23: #{calo_ae_forward.13} parent=5 // pred_region
        // Predicated region
        $region25: #{calo_ae_forward.13} parent=23 // pred_check
          %p128 = pneg %p50
        $region26: #{calo_ae_forward.13} parent=23 // pred_check_branch
          %130 = sbr.rel (%p128) target = $region28
        $region27: #{calo_ae_forward.13} parent=23 // pred_region
          %s131 = sand.u32 %s40, 1
          %s132 = sand.u32 %s40, 1
          %s133 = smul.addr %s132, 432
          %s134 = scalar_lea.vmem [#allocation2], %s133
          %s135 = smul.u32 2, %s9
          %s136 = smul.addr %s135, 4
          %s137 = scalar_lea.vmem %s1, %s136
          // Predicated region
          $region29: #{calo_ae_forward.13} parent=27 // pred_check
            _
          $region30: #{calo_ae_forward.13} parent=27 // pred_check_branch
            %139 = sbr.rel (0) target = $region32
          $region31: #{calo_ae_forward.13} parent=27 // pred_region
            // Predicated region
            $region33: #{calo_ae_forward.13} parent=31 // pred_check
              _
            $region34: #{calo_ae_forward.13} parent=31 // pred_check_branch
              %141 = sbr.rel (0) target = $region36
            $region35: #{calo_ae_forward.13} parent=31 // pred_region
              // Predicated region
              $region48: #{calo_ae_forward.13} parent=35 // pred_check
                _
              $region49: #{calo_ae_forward.13} parent=35 // pred_check_branch
                %263 = sbr.rel (0) target = $region51
              $region50: #{calo_ae_forward.13} parent=35 // pred_region
                loop: start=0, step=1, limit=1
                $region52: #{calo_ae_forward.13} parent=50 // loop_pre_header
                  _
                $region53: #{calo_ae_forward.13} parent=50 // loop_header
                  %s265 = sphi 0, %s269
                  %p266 = scmp.ge.s32.totalorder %s265, 1
                  %s270 = sphi %s137, %s137
                  %s271 = sphi %s134, %s134
                $region54: #{calo_ae_forward.13} parent=50 // loop_header_branch
                  %268 = sbr.rel (%p266) target = $region58
                $region55: #{calo_ae_forward.13} parent=50 // loop_body
                  %v272 = vld [vmem:[%s270] sm:$0xff]
                  %273 = vst [vmem:[%s271] sm:$0xff] %v272
                  %v274 = vld [vmem:[%s270 + $0x10] sm:$0xff]
                  %275 = vst [vmem:[%s271 + $0x8] sm:$0xff] %v274
                  %v276 = vld [vmem:[%s270 + $0x20] sm:$0xff]
                  %277 = vst [vmem:[%s271 + $0x10] sm:$0xff] %v276
                  %v278 = vld [vmem:[%s270 + $0x30] sm:$0xff]
                  %279 = vst [vmem:[%s271 + $0x18] sm:$0xff] %v278
                  %v280 = vld [vmem:[%s270 + $0x40] sm:$0xff]
                  %281 = vst [vmem:[%s271 + $0x20] sm:$0xff] %v280
                  %v282 = vld [vmem:[%s270 + $0x50] sm:$0xff]
                  %283 = vst [vmem:[%s271 + $0x28] sm:$0xff] %v282
                  %v284 = vld [vmem:[%s270 + $0x60] sm:$0xff]
                  %285 = vst [vmem:[%s271 + $0x30] sm:$0xff] %v284
                  %v286 = vld [vmem:[%s270 + $0x70] sm:$0xff]
                  %287 = vst [vmem:[%s271 + $0x38] sm:$0xff] %v286
                  %v288 = vld [vmem:[%s270 + $0x80] sm:$0xff]
                  %289 = vst [vmem:[%s271 + $0x40] sm:$0xff] %v288
                  %v290 = vld [vmem:[%s270 + $0x90] sm:$0xff]
                  %291 = vst [vmem:[%s271 + $0x48] sm:$0xff] %v290
                  %v292 = vld [vmem:[%s270 + $0xa0] sm:$0xff]
                  %293 = vst [vmem:[%s271 + $0x50] sm:$0xff] %v292
                  %v294 = vld [vmem:[%s270 + $0xb0] sm:$0xff]
                  %295 = vst [vmem:[%s271 + $0x58] sm:$0xff] %v294
                  %v296 = vld [vmem:[%s270 + $0xc0] sm:$0xff]
                  %297 = vst [vmem:[%s271 + $0x60] sm:$0xff] %v296
                  %v298 = vld [vmem:[%s270 + $0xd0] sm:$0xff]
                  %299 = vst [vmem:[%s271 + $0x68] sm:$0xff] %v298
                  %v300 = vld [vmem:[%s270 + $0xe0] sm:$0xff]
                  %301 = vst [vmem:[%s271 + $0x70] sm:$0xff] %v300
                  %v302 = vld [vmem:[%s270 + $0xf0] sm:$0xff]
                  %303 = vst [vmem:[%s271 + $0x78] sm:$0xff] %v302
                  %v304 = vld [vmem:[%s270 + $0x100] sm:$0xff]
                  %305 = vst [vmem:[%s271 + $0x80] sm:$0xff] %v304
                  %v306 = vld [vmem:[%s270 + $0x110] sm:$0xff]
                  %307 = vst [vmem:[%s271 + $0x88] sm:$0xff] %v306
                  %v308 = vld [vmem:[%s270 + $0x120] sm:$0xff]
                  %309 = vst [vmem:[%s271 + $0x90] sm:$0xff] %v308
                  %v310 = vld [vmem:[%s270 + $0x130] sm:$0xff]
                  %311 = vst [vmem:[%s271 + $0x98] sm:$0xff] %v310
                  %v312 = vld [vmem:[%s270 + $0x140] sm:$0xff]
                  %313 = vst [vmem:[%s271 + $0xa0] sm:$0xff] %v312
                  %v314 = vld [vmem:[%s270 + $0x150] sm:$0xff]
                  %315 = vst [vmem:[%s271 + $0xa8] sm:$0xff] %v314
                  %v316 = vld [vmem:[%s270 + $0x160] sm:$0xff]
                  %317 = vst [vmem:[%s271 + $0xb0] sm:$0xff] %v316
                  %v318 = vld [vmem:[%s270 + $0x170] sm:$0xff]
                  %319 = vst [vmem:[%s271 + $0xb8] sm:$0xff] %v318
                  %v320 = vld [vmem:[%s270 + $0x180] sm:$0xff]
                  %321 = vst [vmem:[%s271 + $0xc0] sm:$0xff] %v320
                  %v322 = vld [vmem:[%s270 + $0x190] sm:$0xff]
                  %323 = vst [vmem:[%s271 + $0xc8] sm:$0xff] %v322
                  %v324 = vld [vmem:[%s270 + $0x1a0] sm:$0xff]
                  %325 = vst [vmem:[%s271 + $0xd0] sm:$0xff] %v324
                  %v326 = vld [vmem:[%s270 + $0x1b0] sm:$0xff]
                  %327 = vst [vmem:[%s271 + $0xd8] sm:$0xff] %v326
                  %v328 = vld [vmem:[%s270 + $0x1c0] sm:$0xff]
                  %329 = vst [vmem:[%s271 + $0xe0] sm:$0xff] %v328
                  %v330 = vld [vmem:[%s270 + $0x1d0] sm:$0xff]
                  %331 = vst [vmem:[%s271 + $0xe8] sm:$0xff] %v330
                  %v332 = vld [vmem:[%s270 + $0x1e0] sm:$0xff]
                  %333 = vst [vmem:[%s271 + $0xf0] sm:$0xff] %v332
                  %v334 = vld [vmem:[%s270 + $0x1f0] sm:$0xff]
                  %335 = vst [vmem:[%s271 + $0xf8] sm:$0xff] %v334
                  %v336 = vld [vmem:[%s270 + $0x200] sm:$0xff]
                  %337 = vst [vmem:[%s271 + $0x100] sm:$0xff] %v336
                  %v338 = vld [vmem:[%s270 + $0x210] sm:$0xff]
                  %339 = vst [vmem:[%s271 + $0x108] sm:$0xff] %v338
                  %v340 = vld [vmem:[%s270 + $0x220] sm:$0xff]
                  %341 = vst [vmem:[%s271 + $0x110] sm:$0xff] %v340
                  %v342 = vld [vmem:[%s270 + $0x230] sm:$0xff]
                  %343 = vst [vmem:[%s271 + $0x118] sm:$0xff] %v342
                  %v344 = vld [vmem:[%s270 + $0x240] sm:$0xff]
                  %345 = vst [vmem:[%s271 + $0x120] sm:$0xff] %v344
                  %v346 = vld [vmem:[%s270 + $0x250] sm:$0xff]
                  %347 = vst [vmem:[%s271 + $0x128] sm:$0xff] %v346
                  %v348 = vld [vmem:[%s270 + $0x260] sm:$0xff]
                  %349 = vst [vmem:[%s271 + $0x130] sm:$0xff] %v348
                  %v350 = vld [vmem:[%s270 + $0x270] sm:$0xff]
                  %351 = vst [vmem:[%s271 + $0x138] sm:$0xff] %v350
                  %v352 = vld [vmem:[%s270 + $0x280] sm:$0xff]
                  %353 = vst [vmem:[%s271 + $0x140] sm:$0xff] %v352
                  %v354 = vld [vmem:[%s270 + $0x290] sm:$0xff]
                  %355 = vst [vmem:[%s271 + $0x148] sm:$0xff] %v354
                  %v356 = vld [vmem:[%s270 + $0x2a0] sm:$0xff]
                  %357 = vst [vmem:[%s271 + $0x150] sm:$0xff] %v356
                  %v358 = vld [vmem:[%s270 + $0x2b0] sm:$0xff]
                  %359 = vst [vmem:[%s271 + $0x158] sm:$0xff] %v358
                  %v360 = vld [vmem:[%s270 + $0x2c0] sm:$0xff]
                  %361 = vst [vmem:[%s271 + $0x160] sm:$0xff] %v360
                  %v362 = vld [vmem:[%s270 + $0x2d0] sm:$0xff]
                  %363 = vst [vmem:[%s271 + $0x168] sm:$0xff] %v362
                  %v364 = vld [vmem:[%s270 + $0x2e0] sm:$0xff]
                  %365 = vst [vmem:[%s271 + $0x170] sm:$0xff] %v364
                  %v366 = vld [vmem:[%s270 + $0x2f0] sm:$0xff]
                  %367 = vst [vmem:[%s271 + $0x178] sm:$0xff] %v366
                  %v368 = vld [vmem:[%s270 + $0x300] sm:$0xff]
                  %369 = vst [vmem:[%s271 + $0x180] sm:$0xff] %v368
                  %v370 = vld [vmem:[%s270 + $0x310] sm:$0xff]
                  %371 = vst [vmem:[%s271 + $0x188] sm:$0xff] %v370
                  %v372 = vld [vmem:[%s270 + $0x320] sm:$0xff]
                  %373 = vst [vmem:[%s271 + $0x190] sm:$0xff] %v372
                  %v374 = vld [vmem:[%s270 + $0x330] sm:$0xff]
                  %375 = vst [vmem:[%s271 + $0x198] sm:$0xff] %v374
                  %v376 = vld [vmem:[%s270 + $0x340] sm:$0xff]
                  %377 = vst [vmem:[%s271 + $0x1a0] sm:$0xff] %v376
                  %v378 = vld [vmem:[%s270 + $0x350] sm:$0xff]
                  %379 = vst [vmem:[%s271 + $0x1a8] sm:$0xff] %v378
                $region56: #{calo_ae_forward.13} parent=50 // loop_footer
                  %s269 = sadd.s32 1, %s265
                $region57: #{calo_ae_forward.13} parent=50 // loop_footer_branch
                  %264 = sbr.rel target = $region53
                $region58: #{calo_ae_forward.13} parent=50 // loop_exit
                  _
              $region51: #{calo_ae_forward.13} parent=35 // pred_fallthru
                _
              // Predicated region
              $region59: #{calo_ae_forward.13} parent=35 // pred_check
                _
              $region60: #{calo_ae_forward.13} parent=35 // pred_check_branch
                %381 = sbr.rel target = $region62
              $region61: #{calo_ae_forward.13} parent=35 // pred_region
                _
              $region62: #{calo_ae_forward.13} parent=35 // pred_fallthru
                _
            $region36: #{calo_ae_forward.13} parent=31 // pred_fallthru
              _
            // Predicated region
            $region37: #{calo_ae_forward.13} parent=31 // pred_check
              _
            $region38: #{calo_ae_forward.13} parent=31 // pred_check_branch
              %143 = sbr.rel target = $region40
            $region39: #{calo_ae_forward.13} parent=31 // pred_region
              %s145 = ssub.s32 256, 1
              loop: start=0, step=1, limit=1
              $region41: #{calo_ae_forward.13} parent=39 // loop_pre_header
                _
              $region42: #{calo_ae_forward.13} parent=39 // loop_header
                %s147 = sphi 0, %s151
                %p148 = scmp.ge.s32.totalorder %s147, 1
                %s152 = sphi %s137, %s137
                %s153 = sphi %s134, %s134
              $region43: #{calo_ae_forward.13} parent=39 // loop_header_branch
                %150 = sbr.rel (%p148) target = $region47
              $region44: #{calo_ae_forward.13} parent=39 // loop_body
                %v154 = vld [vmem:[%s152] sm:%s145]
                %155 = vst [vmem:[%s153] sm:%s145] %v154
                %v156 = vld [vmem:[%s152 + $0x10] sm:%s145]
                %157 = vst [vmem:[%s153 + $0x8] sm:%s145] %v156
                %v158 = vld [vmem:[%s152 + $0x20] sm:%s145]
                %159 = vst [vmem:[%s153 + $0x10] sm:%s145] %v158
                %v160 = vld [vmem:[%s152 + $0x30] sm:%s145]
                %161 = vst [vmem:[%s153 + $0x18] sm:%s145] %v160
                %v162 = vld [vmem:[%s152 + $0x40] sm:%s145]
                %163 = vst [vmem:[%s153 + $0x20] sm:%s145] %v162
                %v164 = vld [vmem:[%s152 + $0x50] sm:%s145]
                %165 = vst [vmem:[%s153 + $0x28] sm:%s145] %v164
                %v166 = vld [vmem:[%s152 + $0x60] sm:%s145]
                %167 = vst [vmem:[%s153 + $0x30] sm:%s145] %v166
                %v168 = vld [vmem:[%s152 + $0x70] sm:%s145]
                %169 = vst [vmem:[%s153 + $0x38] sm:%s145] %v168
                %v170 = vld [vmem:[%s152 + $0x80] sm:%s145]
                %171 = vst [vmem:[%s153 + $0x40] sm:%s145] %v170
                %v172 = vld [vmem:[%s152 + $0x90] sm:%s145]
                %173 = vst [vmem:[%s153 + $0x48] sm:%s145] %v172
                %v174 = vld [vmem:[%s152 + $0xa0] sm:%s145]
                %175 = vst [vmem:[%s153 + $0x50] sm:%s145] %v174
                %v176 = vld [vmem:[%s152 + $0xb0] sm:%s145]
                %177 = vst [vmem:[%s153 + $0x58] sm:%s145] %v176
                %v178 = vld [vmem:[%s152 + $0xc0] sm:%s145]
                %179 = vst [vmem:[%s153 + $0x60] sm:%s145] %v178
                %v180 = vld [vmem:[%s152 + $0xd0] sm:%s145]
                %181 = vst [vmem:[%s153 + $0x68] sm:%s145] %v180
                %v182 = vld [vmem:[%s152 + $0xe0] sm:%s145]
                %183 = vst [vmem:[%s153 + $0x70] sm:%s145] %v182
                %v184 = vld [vmem:[%s152 + $0xf0] sm:%s145]
                %185 = vst [vmem:[%s153 + $0x78] sm:%s145] %v184
                %v186 = vld [vmem:[%s152 + $0x100] sm:%s145]
                %187 = vst [vmem:[%s153 + $0x80] sm:%s145] %v186
                %v188 = vld [vmem:[%s152 + $0x110] sm:%s145]
                %189 = vst [vmem:[%s153 + $0x88] sm:%s145] %v188
                %v190 = vld [vmem:[%s152 + $0x120] sm:%s145]
                %191 = vst [vmem:[%s153 + $0x90] sm:%s145] %v190
                %v192 = vld [vmem:[%s152 + $0x130] sm:%s145]
                %193 = vst [vmem:[%s153 + $0x98] sm:%s145] %v192
                %v194 = vld [vmem:[%s152 + $0x140] sm:%s145]
                %195 = vst [vmem:[%s153 + $0xa0] sm:%s145] %v194
                %v196 = vld [vmem:[%s152 + $0x150] sm:%s145]
                %197 = vst [vmem:[%s153 + $0xa8] sm:%s145] %v196
                %v198 = vld [vmem:[%s152 + $0x160] sm:%s145]
                %199 = vst [vmem:[%s153 + $0xb0] sm:%s145] %v198
                %v200 = vld [vmem:[%s152 + $0x170] sm:%s145]
                %201 = vst [vmem:[%s153 + $0xb8] sm:%s145] %v200
                %v202 = vld [vmem:[%s152 + $0x180] sm:%s145]
                %203 = vst [vmem:[%s153 + $0xc0] sm:%s145] %v202
                %v204 = vld [vmem:[%s152 + $0x190] sm:%s145]
                %205 = vst [vmem:[%s153 + $0xc8] sm:%s145] %v204
                %v206 = vld [vmem:[%s152 + $0x1a0] sm:%s145]
                %207 = vst [vmem:[%s153 + $0xd0] sm:%s145] %v206
                %v208 = vld [vmem:[%s152 + $0x1b0] sm:%s145]
                %209 = vst [vmem:[%s153 + $0xd8] sm:%s145] %v208
                %v210 = vld [vmem:[%s152 + $0x1c0] sm:%s145]
                %211 = vst [vmem:[%s153 + $0xe0] sm:%s145] %v210
                %v212 = vld [vmem:[%s152 + $0x1d0] sm:%s145]
                %213 = vst [vmem:[%s153 + $0xe8] sm:%s145] %v212
                %v214 = vld [vmem:[%s152 + $0x1e0] sm:%s145]
                %215 = vst [vmem:[%s153 + $0xf0] sm:%s145] %v214
                %v216 = vld [vmem:[%s152 + $0x1f0] sm:%s145]
                %217 = vst [vmem:[%s153 + $0xf8] sm:%s145] %v216
                %v218 = vld [vmem:[%s152 + $0x200] sm:%s145]
                %219 = vst [vmem:[%s153 + $0x100] sm:%s145] %v218
                %v220 = vld [vmem:[%s152 + $0x210] sm:%s145]
                %221 = vst [vmem:[%s153 + $0x108] sm:%s145] %v220
                %v222 = vld [vmem:[%s152 + $0x220] sm:%s145]
                %223 = vst [vmem:[%s153 + $0x110] sm:%s145] %v222
                %v224 = vld [vmem:[%s152 + $0x230] sm:%s145]
                %225 = vst [vmem:[%s153 + $0x118] sm:%s145] %v224
                %v226 = vld [vmem:[%s152 + $0x240] sm:%s145]
                %227 = vst [vmem:[%s153 + $0x120] sm:%s145] %v226
                %v228 = vld [vmem:[%s152 + $0x250] sm:%s145]
                %229 = vst [vmem:[%s153 + $0x128] sm:%s145] %v228
                %v230 = vld [vmem:[%s152 + $0x260] sm:%s145]
                %231 = vst [vmem:[%s153 + $0x130] sm:%s145] %v230
                %v232 = vld [vmem:[%s152 + $0x270] sm:%s145]
                %233 = vst [vmem:[%s153 + $0x138] sm:%s145] %v232
                %v234 = vld [vmem:[%s152 + $0x280] sm:%s145]
                %235 = vst [vmem:[%s153 + $0x140] sm:%s145] %v234
                %v236 = vld [vmem:[%s152 + $0x290] sm:%s145]
                %237 = vst [vmem:[%s153 + $0x148] sm:%s145] %v236
                %v238 = vld [vmem:[%s152 + $0x2a0] sm:%s145]
                %239 = vst [vmem:[%s153 + $0x150] sm:%s145] %v238
                %v240 = vld [vmem:[%s152 + $0x2b0] sm:%s145]
                %241 = vst [vmem:[%s153 + $0x158] sm:%s145] %v240
                %v242 = vld [vmem:[%s152 + $0x2c0] sm:%s145]
                %243 = vst [vmem:[%s153 + $0x160] sm:%s145] %v242
                %v244 = vld [vmem:[%s152 + $0x2d0] sm:%s145]
                %245 = vst [vmem:[%s153 + $0x168] sm:%s145] %v244
                %v246 = vld [vmem:[%s152 + $0x2e0] sm:%s145]
                %247 = vst [vmem:[%s153 + $0x170] sm:%s145] %v246
                %v248 = vld [vmem:[%s152 + $0x2f0] sm:%s145]
                %249 = vst [vmem:[%s153 + $0x178] sm:%s145] %v248
                %v250 = vld [vmem:[%s152 + $0x300] sm:%s145]
                %251 = vst [vmem:[%s153 + $0x180] sm:%s145] %v250
                %v252 = vld [vmem:[%s152 + $0x310] sm:%s145]
                %253 = vst [vmem:[%s153 + $0x188] sm:%s145] %v252
                %v254 = vld [vmem:[%s152 + $0x320] sm:%s145]
                %255 = vst [vmem:[%s153 + $0x190] sm:%s145] %v254
                %v256 = vld [vmem:[%s152 + $0x330] sm:%s145]
                %257 = vst [vmem:[%s153 + $0x198] sm:%s145] %v256
                %v258 = vld [vmem:[%s152 + $0x340] sm:%s145]
                %259 = vst [vmem:[%s153 + $0x1a0] sm:%s145] %v258
                %v260 = vld [vmem:[%s152 + $0x350] sm:%s145]
                %261 = vst [vmem:[%s153 + $0x1a8] sm:%s145] %v260
              $region45: #{calo_ae_forward.13} parent=39 // loop_footer
                %s151 = sadd.s32 1, %s147
              $region46: #{calo_ae_forward.13} parent=39 // loop_footer_branch
                %146 = sbr.rel target = $region42
              $region47: #{calo_ae_forward.13} parent=39 // loop_exit
                _
            $region40: #{calo_ae_forward.13} parent=31 // pred_fallthru
              _
          $region32: #{calo_ae_forward.13} parent=27 // pred_fallthru
            _
          %382 = vnop
        $region28: #{calo_ae_forward.13} parent=23 // pred_fallthru
          _
      $region24: #{calo_ae_forward.13} parent=5 // pred_fallthru
        _
      %p383 = scmp.le.s32.totalorder 1, %s9
      %p384 = scmp.lt.s32.totalorder %s9, 3
      %p385 = pnand %p383, %p384
      %p386 = pneg %p385
      // Predicated region
      $region63: #{calo_ae_forward.13} parent=5 // pred_check
        _
      $region64: #{calo_ae_forward.13} parent=5 // pred_check_branch
        %388 = sbr.rel (%p385) target = $region66
      $region65: #{calo_ae_forward.13} parent=5 // pred_region
        %s389 = ssub.s32 %s9, 1
        %s390 = sand.u32 %s43, 1
        %s391 = sand.u32 %s43, 1
        %s392 = smul.addr %s391, 432
        %s393 = scalar_lea.vmem [#allocation2], %s392
        // Predicated region
        $region67: #{calo_ae_forward.13} parent=65 // pred_check
          %p394 = pneg %p56
        $region68: #{calo_ae_forward.13} parent=65 // pred_check_branch
          %396 = sbr.rel (%p394) target = $region70
        $region69: #{calo_ae_forward.13} parent=65 // pred_region
          _
        $region70: #{calo_ae_forward.13} parent=65 // pred_fallthru
          _
        %p397 = pneg %p30
        %p398 = pneg %p27
        %s399 = sand.u32 %s43, 1
        %s400 = sand.u32 %s43, 1
        %s401 = smul.addr %s400, 432
        %s402 = scalar_lea.vmem [#allocation2], %s401
        %p403 = pneg %p56
        %p404 = pneg %p53
        %p405 = pneg %p77
        %p406 = pneg %p74
        %p407 = pneg %p103
        %p408 = pneg %p100
        %s409 = smul.u32 2, %s14
        %p410 = scmp.lt.s32.totalorder %s409, 3
        %s411 = scalar_select %p410, %s409, 3
        %s412 = smul.addr %s411, 4
        %s413 = scalar_lea.vmem %s3, %s412
        %s414 = smul.u32 2, %s14
        %s415 = smul.u32 2, %s14
        %p416 = scmp.lt.s32.totalorder %s415, 3
        %s417 = scalar_select %p416, %s415, 3
        %s418 = smul.addr %s417, 4
        %s419 = scalar_lea.vmem %s3, %s418
        %s420 = smul.u32 2, %s14
        %v422 = vld [vmem:[%s0] sm:$0xff]
        %v423 = vld [vmem:[%s0 + $0x8] sm:$0xff]
        %v424 = vld [vmem:[%s393] sm:$0xff]
        %v425 = vld [vmem:[%s393 + $0x8] sm:$0xff]
        %v426 = vld [vmem:[%s393 + $0x10] sm:$0xff]
        %v427 = vld [vmem:[%s393 + $0x18] sm:$0xff]
        %v428 = vld [vmem:[%s393 + $0x20] sm:$0xff]
        %v429 = vld [vmem:[%s393 + $0x28] sm:$0xff]
        %v430 = vld [vmem:[%s393 + $0x30] sm:$0xff]
        %v431 = vld [vmem:[%s393 + $0x38] sm:$0xff]
        %v432 = vld [vmem:[%s393 + $0x40] sm:$0xff]
        %v433 = vld [vmem:[%s393 + $0x48] sm:$0xff]
        %v434 = vld [vmem:[%s393 + $0x50] sm:$0xff]
        %v435 = vld [vmem:[%s393 + $0x58] sm:$0xff]
        %v436 = vld [vmem:[%s393 + $0x60] sm:$0xff]
        %v437 = vld [vmem:[%s393 + $0x68] sm:$0xff]
        %v438 = vld [vmem:[%s393 + $0x70] sm:$0xff]
        %v439 = vld [vmem:[%s393 + $0x78] sm:$0xff]
        %v440 = vld [vmem:[%s393 + $0x80] sm:$0xff]
        %v441 = vld [vmem:[%s393 + $0x88] sm:$0xff]
        %v442 = vld [vmem:[%s393 + $0x90] sm:$0xff]
        %v443 = vld [vmem:[%s393 + $0x98] sm:$0xff]
        %v444 = vld [vmem:[%s393 + $0xa0] sm:$0xff]
        %v445 = vld [vmem:[%s393 + $0xa8] sm:$0xff]
        %v446 = vld [vmem:[%s393 + $0xb0] sm:$0xff]
        %v447 = vld [vmem:[%s393 + $0xb8] sm:$0xff]
        %v448 = vld [vmem:[%s393 + $0xc0] sm:$0xff]
        %v449 = vld [vmem:[%s393 + $0xc8] sm:$0xff]
        %v450 = vld [vmem:[%s393 + $0xd0] sm:$0xff]
        %v451 = vld [vmem:[%s393 + $0xd8] sm:$0xff]
        %v452 = vld [vmem:[%s393 + $0xe0] sm:$0xff]
        %v453 = vld [vmem:[%s393 + $0xe8] sm:$0xff]
        %v454 = vld [vmem:[%s393 + $0xf0] sm:$0xff]
        %v455 = vld [vmem:[%s393 + $0xf8] sm:$0xff]
        %v456 = vld [vmem:[%s393 + $0x100] sm:$0xff]
        %v457 = vld [vmem:[%s393 + $0x108] sm:$0xff]
        %v458 = vld [vmem:[%s393 + $0x110] sm:$0xff]
        %v459 = vld [vmem:[%s393 + $0x118] sm:$0xff]
        %v460 = vld [vmem:[%s393 + $0x120] sm:$0xff]
        %v461 = vld [vmem:[%s393 + $0x128] sm:$0xff]
        %v462 = vld [vmem:[%s393 + $0x130] sm:$0xff]
        %v463 = vld [vmem:[%s393 + $0x138] sm:$0xff]
        %v464 = vld [vmem:[%s393 + $0x140] sm:$0xff]
        %v465 = vld [vmem:[%s393 + $0x148] sm:$0xff]
        %v466 = vld [vmem:[%s393 + $0x150] sm:$0xff]
        %v467 = vld [vmem:[%s393 + $0x158] sm:$0xff]
        %v468 = vld [vmem:[%s393 + $0x160] sm:$0xff]
        %v469 = vld [vmem:[%s393 + $0x168] sm:$0xff]
        %v470 = vld [vmem:[%s393 + $0x170] sm:$0xff]
        %v471 = vld [vmem:[%s393 + $0x178] sm:$0xff]
        %v472 = vld [vmem:[%s393 + $0x180] sm:$0xff]
        %v473 = vld [vmem:[%s393 + $0x188] sm:$0xff]
        %v474 = vld [vmem:[%s393 + $0x190] sm:$0xff]
        %v475 = vld [vmem:[%s393 + $0x198] sm:$0xff]
        %v476 = vld [vmem:[%s393 + $0x1a0] sm:$0xff]
        %v477 = vld [vmem:[%s393 + $0x1a8] sm:$0xff]
        %v478 = vld [vmem:[%s2] sm:$0xff]
        %480 = vset.pattern.permute.xlu0 0
        %481 = vperm.xlu0 %480, %v478
        %v482 = vpop.permute.xlu0 %481
        %v486 = vunpack.c.l.b16 %v422
        %v487 = vunpack.c.h.b16 %v422
        %v488 = vunpack.c.l.b16 %v423
        %v489 = vunpack.c.h.b16 %v423
        %v490 = vpack.c.b16 %v486, %v486
        %v491 = vpack.c.b16 %v487, %v487
        %v492 = vpack.c.b16 %v488, %v488
        %v493 = vpack.c.b16 %v489, %v489
        %v551 = vunpack.c.l.b16 %v424
        %v552 = vunpack.c.h.b16 %v424
        %v553 = vunpack.c.l.b16 %v425
        %v554 = vunpack.c.h.b16 %v425
        %v555 = vunpack.c.l.b16 %v426
        %v556 = vunpack.c.h.b16 %v426
        %v557 = vunpack.c.l.b16 %v427
        %v558 = vunpack.c.h.b16 %v427
        %v559 = vunpack.c.l.b16 %v428
        %v560 = vunpack.c.h.b16 %v428
        %v561 = vunpack.c.l.b16 %v429
        %v562 = vunpack.c.h.b16 %v429
        %v563 = vunpack.c.l.b16 %v430
        %v564 = vunpack.c.h.b16 %v430
        %v565 = vunpack.c.l.b16 %v431
        %v566 = vunpack.c.h.b16 %v431
        %v567 = vunpack.c.l.b16 %v432
        %v568 = vunpack.c.h.b16 %v432
        %v569 = vunpack.c.l.b16 %v433
        %v570 = vunpack.c.h.b16 %v433
        %v571 = vunpack.c.l.b16 %v434
        %v572 = vunpack.c.h.b16 %v434
        %v573 = vunpack.c.l.b16 %v435
        %v574 = vunpack.c.h.b16 %v435
        %v575 = vunpack.c.l.b16 %v436
        %v576 = vunpack.c.h.b16 %v436
        %v577 = vunpack.c.l.b16 %v437
        %v578 = vunpack.c.h.b16 %v437
        %v579 = vunpack.c.l.b16 %v438
        %v580 = vunpack.c.h.b16 %v438
        %v581 = vunpack.c.l.b16 %v439
        %v582 = vunpack.c.h.b16 %v439
        %v583 = vunpack.c.l.b16 %v440
        %v584 = vunpack.c.h.b16 %v440
        %v585 = vunpack.c.l.b16 %v441
        %v586 = vunpack.c.h.b16 %v441
        %v587 = vunpack.c.l.b16 %v442
        %v588 = vunpack.c.h.b16 %v442
        %v589 = vunpack.c.l.b16 %v443
        %v590 = vunpack.c.h.b16 %v443
        %v591 = vunpack.c.l.b16 %v444
        %v592 = vunpack.c.h.b16 %v444
        %v593 = vunpack.c.l.b16 %v445
        %v594 = vunpack.c.h.b16 %v445
        %v595 = vunpack.c.l.b16 %v446
        %v596 = vunpack.c.h.b16 %v446
        %v597 = vunpack.c.l.b16 %v447
        %v598 = vunpack.c.h.b16 %v447
        %v599 = vunpack.c.l.b16 %v448
        %v600 = vunpack.c.h.b16 %v448
        %v601 = vunpack.c.l.b16 %v449
        %v602 = vunpack.c.h.b16 %v449
        %v603 = vunpack.c.l.b16 %v450
        %v604 = vunpack.c.h.b16 %v450
        %v605 = vunpack.c.l.b16 %v451
        %v606 = vunpack.c.h.b16 %v451
        %v607 = vunpack.c.l.b16 %v452
        %v608 = vunpack.c.h.b16 %v452
        %v609 = vunpack.c.l.b16 %v453
        %v610 = vunpack.c.h.b16 %v453
        %v611 = vunpack.c.l.b16 %v454
        %v612 = vunpack.c.h.b16 %v454
        %v613 = vunpack.c.l.b16 %v455
        %v614 = vunpack.c.h.b16 %v455
        %v615 = vunpack.c.l.b16 %v456
        %v616 = vunpack.c.h.b16 %v456
        %v617 = vunpack.c.l.b16 %v457
        %v618 = vunpack.c.h.b16 %v457
        %v619 = vunpack.c.l.b16 %v458
        %v620 = vunpack.c.h.b16 %v458
        %v621 = vunpack.c.l.b16 %v459
        %v622 = vunpack.c.h.b16 %v459
        %v623 = vunpack.c.l.b16 %v460
        %v624 = vunpack.c.h.b16 %v460
        %v625 = vunpack.c.l.b16 %v461
        %v626 = vunpack.c.h.b16 %v461
        %v627 = vunpack.c.l.b16 %v462
        %v628 = vunpack.c.h.b16 %v462
        %v629 = vunpack.c.l.b16 %v463
        %v630 = vunpack.c.h.b16 %v463
        %v631 = vunpack.c.l.b16 %v464
        %v632 = vunpack.c.h.b16 %v464
        %v633 = vunpack.c.l.b16 %v465
        %v634 = vunpack.c.h.b16 %v465
        %v635 = vunpack.c.l.b16 %v466
        %v636 = vunpack.c.h.b16 %v466
        %v637 = vunpack.c.l.b16 %v467
        %v638 = vunpack.c.h.b16 %v467
        %v639 = vunpack.c.l.b16 %v468
        %v640 = vunpack.c.h.b16 %v468
        %v641 = vunpack.c.l.b16 %v469
        %v642 = vunpack.c.h.b16 %v469
        %v643 = vunpack.c.l.b16 %v470
        %v644 = vunpack.c.h.b16 %v470
        %v645 = vunpack.c.l.b16 %v471
        %v646 = vunpack.c.h.b16 %v471
        %v647 = vunpack.c.l.b16 %v472
        %v648 = vunpack.c.h.b16 %v472
        %v649 = vunpack.c.l.b16 %v473
        %v650 = vunpack.c.h.b16 %v473
        %v651 = vunpack.c.l.b16 %v474
        %v652 = vunpack.c.h.b16 %v474
        %v653 = vunpack.c.l.b16 %v475
        %v654 = vunpack.c.h.b16 %v475
        %v655 = vunpack.c.l.b16 %v476
        %v656 = vunpack.c.h.b16 %v476
        %v657 = vunpack.c.l.b16 %v477
        %v658 = vunpack.c.h.b16 %v477
        %v659 = vpack.c.b16 %v553, %v551
        %v660 = vpack.c.b16 %v554, %v552
        %v661 = vpack.c.b16 %v557, %v555
        %v662 = vpack.c.b16 %v558, %v556
        %v663 = vpack.c.b16 %v561, %v559
        %v664 = vpack.c.b16 %v562, %v560
        %v665 = vpack.c.b16 %v565, %v563
        %v666 = vpack.c.b16 %v566, %v564
        %v667 = vpack.c.b16 %v569, %v567
        %v668 = vpack.c.b16 %v570, %v568
        %v669 = vpack.c.b16 %v573, %v571
        %v670 = vpack.c.b16 %v574, %v572
        %v671 = vpack.c.b16 %v577, %v575
        %v672 = vpack.c.b16 %v578, %v576
        %v673 = vpack.c.b16 %v581, %v579
        %v674 = vpack.c.b16 %v582, %v580
        %v675 = vpack.c.b16 %v585, %v583
        %v676 = vpack.c.b16 %v586, %v584
        %v677 = vpack.c.b16 %v589, %v587
        %v678 = vpack.c.b16 %v590, %v588
        %v679 = vpack.c.b16 %v593, %v591
        %v680 = vpack.c.b16 %v594, %v592
        %v681 = vpack.c.b16 %v597, %v595
        %v682 = vpack.c.b16 %v598, %v596
        %v683 = vpack.c.b16 %v601, %v599
        %v684 = vpack.c.b16 %v602, %v600
        %v685 = vpack.c.b16 %v605, %v603
        %v686 = vpack.c.b16 %v606, %v604
        %v687 = vpack.c.b16 %v609, %v607
        %v688 = vpack.c.b16 %v610, %v608
        %v689 = vpack.c.b16 %v613, %v611
        %v690 = vpack.c.b16 %v614, %v612
        %v691 = vpack.c.b16 %v617, %v615
        %v692 = vpack.c.b16 %v618, %v616
        %v693 = vpack.c.b16 %v621, %v619
        %v694 = vpack.c.b16 %v622, %v620
        %v695 = vpack.c.b16 %v625, %v623
        %v696 = vpack.c.b16 %v626, %v624
        %v697 = vpack.c.b16 %v629, %v627
        %v698 = vpack.c.b16 %v630, %v628
        %v699 = vpack.c.b16 %v633, %v631
        %v700 = vpack.c.b16 %v634, %v632
        %v701 = vpack.c.b16 %v637, %v635
        %v702 = vpack.c.b16 %v638, %v636
        %v703 = vpack.c.b16 %v641, %v639
        %v704 = vpack.c.b16 %v642, %v640
        %v705 = vpack.c.b16 %v645, %v643
        %v706 = vpack.c.b16 %v646, %v644
        %v707 = vpack.c.b16 %v649, %v647
        %v708 = vpack.c.b16 %v650, %v648
        %v709 = vpack.c.b16 %v653, %v651
        %v710 = vpack.c.b16 %v654, %v652
        %v711 = vpack.c.b16 %v657, %v655
        %v712 = vpack.c.b16 %v658, %v656
        %vm767 = vcmask 392192
        %v769 = vsel %vm767, %v493, 0
        %771 = vmatpush.bf16.msra.mxu0 %v673
        %772 = vmatpush.bf16.msra.mxu0 %v671
        %773 = vmatpush.bf16.msra.mxu0 %v669
        %774 = vmatpush.bf16.msra.mxu0 %v667
        %775 = vmatpush.bf16.msra.mxu0 %v665
        %776 = vmatpush.bf16.msra.mxu0 %v663
        %777 = vmatpush.bf16.msra.mxu0 %v661
        %778 = vmatpush.bf16.msra.mxu0 %v659
        %779 = vmatmul.bf16.gmra.mxu0 %v490
        %v780 = vpop.f32.mrf.mxu0
        %v781 = vadd.f32 %v482, %v780
        %v782 = vpop.f32.mrf.mxu0
        %783 = vdwg.mxu0
        %784 = vmatpush.bf16.msra.mxu0 %v689
        %785 = vmatpush.bf16.msra.mxu0 %v687
        %786 = vmatpush.bf16.msra.mxu0 %v685
        %787 = vmatpush.bf16.msra.mxu0 %v683
        %788 = vmatpush.bf16.msra.mxu0 %v681
        %789 = vmatpush.bf16.msra.mxu0 %v679
        %790 = vmatpush.bf16.msra.mxu0 %v677
        %791 = vmatpush.bf16.msra.mxu0 %v675
        %792 = vmatmul.bf16.gmra.mxu0 %v491
        %v793 = vpop.f32.mrf.mxu0
        %v794 = vadd.f32 %v781, %v793
        %v795 = vpop.f32.mrf.mxu0
        %796 = vdwg.mxu0
        %797 = vmatpush.bf16.msra.mxu0 %v705
        %798 = vmatpush.bf16.msra.mxu0 %v703
        %799 = vmatpush.bf16.msra.mxu0 %v701
        %800 = vmatpush.bf16.msra.mxu0 %v699
        %801 = vmatpush.bf16.msra.mxu0 %v697
        %802 = vmatpush.bf16.msra.mxu0 %v695
        %803 = vmatpush.bf16.msra.mxu0 %v693
        %804 = vmatpush.bf16.msra.mxu0 %v691
        %805 = vmatmul.bf16.gmra.mxu0 %v492
        %v806 = vpop.f32.mrf.mxu0
        %v807 = vadd.f32 %v794, %v806
        %v808 = vpop.f32.mrf.mxu0
        %809 = vdwg.mxu0
        %810 = vmatpush.bf16.msra.mxu0 0
        %811 = vmatpush.bf16.msra.mxu0 0
        %812 = vmatpush.bf16.msra.mxu0 0
        %813 = vmatpush.bf16.msra.mxu0 0
        %814 = vmatpush.bf16.msra.mxu0 0
        %815 = vmatpush.bf16.msra.mxu0 %v711
        %816 = vmatpush.bf16.msra.mxu0 %v709
        %817 = vmatpush.bf16.msra.mxu0 %v707
        %818 = vmatmul.bf16.gmra.mxu0 %v769
        %v819 = vpop.f32.mrf.mxu0
        %v820 = vadd.f32 %v807, %v819
        %v821 = vpop.f32.mrf.mxu0
        %822 = vdwg.mxu0
        %823 = vmatpush.bf16.msra.mxu0 %v674
        %824 = vmatpush.bf16.msra.mxu0 %v672
        %825 = vmatpush.bf16.msra.mxu0 %v670
        %826 = vmatpush.bf16.msra.mxu0 %v668
        %827 = vmatpush.bf16.msra.mxu0 %v666
        %828 = vmatpush.bf16.msra.mxu0 %v664
        %829 = vmatpush.bf16.msra.mxu0 %v662
        %830 = vmatpush.bf16.msra.mxu0 %v660
        %831 = vmatmul.bf16.gmra.mxu0 %v490
        %v832 = vpop.f32.mrf.mxu0
        %v833 = vadd.f32 %v482, %v832
        %v834 = vpop.f32.mrf.mxu0
        %835 = vdwg.mxu0
        %836 = vmatpush.bf16.msra.mxu0 %v690
        %837 = vmatpush.bf16.msra.mxu0 %v688
        %838 = vmatpush.bf16.msra.mxu0 %v686
        %839 = vmatpush.bf16.msra.mxu0 %v684
        %840 = vmatpush.bf16.msra.mxu0 %v682
        %841 = vmatpush.bf16.msra.mxu0 %v680
        %842 = vmatpush.bf16.msra.mxu0 %v678
        %843 = vmatpush.bf16.msra.mxu0 %v676
        %844 = vmatmul.bf16.gmra.mxu0 %v491
        %v845 = vpop.f32.mrf.mxu0
        %v846 = vadd.f32 %v833, %v845
        %v847 = vpop.f32.mrf.mxu0
        %848 = vdwg.mxu0
        %849 = vmatpush.bf16.msra.mxu0 %v706
        %850 = vmatpush.bf16.msra.mxu0 %v704
        %851 = vmatpush.bf16.msra.mxu0 %v702
        %852 = vmatpush.bf16.msra.mxu0 %v700
        %853 = vmatpush.bf16.msra.mxu0 %v698
        %854 = vmatpush.bf16.msra.mxu0 %v696
        %855 = vmatpush.bf16.msra.mxu0 %v694
        %856 = vmatpush.bf16.msra.mxu0 %v692
        %857 = vmatmul.bf16.gmra.mxu0 %v492
        %v858 = vpop.f32.mrf.mxu0
        %v859 = vadd.f32 %v846, %v858
        %v860 = vpop.f32.mrf.mxu0
        %861 = vdwg.mxu0
        %862 = vmatpush.bf16.msra.mxu0 0
        %863 = vmatpush.bf16.msra.mxu0 0
        %864 = vmatpush.bf16.msra.mxu0 0
        %865 = vmatpush.bf16.msra.mxu0 0
        %866 = vmatpush.bf16.msra.mxu0 0
        %867 = vmatpush.bf16.msra.mxu0 %v712
        %868 = vmatpush.bf16.msra.mxu0 %v710
        %869 = vmatpush.bf16.msra.mxu0 %v708
        %870 = vmatmul.bf16.gmra.mxu0 %v769
        %v871 = vpop.f32.mrf.mxu0
        %v872 = vadd.f32 %v859, %v871
        %v873 = vpop.f32.mrf.mxu0
        %874 = vdwg.mxu0
        %v875 = vsub.f32 0.0, %v820
        %v876 = vsub.f32 0.0, %v872
        %v877 = vmul.f32 %v875, 1.442695
        %v878 = vpow.pop %v877
        %v879 = vmul.f32 %v876, 1.442695
        %v880 = vpow.pop %v879
        %v881 = vadd.f32 %v878, 1.0
        %v882 = vadd.f32 %v880, 1.0
        %v883 = vrcp.pop %v881
        %v884 = vmul.f32 %v881, %v883
        %v885 = vsub.f32 1.0, %v884
        %v886 = vmul.f32 %v883, %v885
        %v887 = vadd.f32 %v883, %v886
        %vm888 = vweird.f32 %v881
        %vm889 = vweird.f32 %v883
        %vm890 = vmor %vm888, %vm889
        %v891 = vsel %vm890, %v883, %v887
        %v892 = vand.u32 2147483647, %v881
        %vm893 = vcmp.eq.f32.partialorder %v892, 8.507059e+37
        %v894 = vand.u32 %v881, 2147483648
        %v895 = vor.u32 1.1754944e-38, %v894
        %v896 = vsel %vm893, %v895, %v891
        %v897 = vmul.f32 1.0, %v896
        %v898 = vrcp.pop %v882
        %v899 = vmul.f32 %v882, %v898
        %v900 = vsub.f32 1.0, %v899
        %v901 = vmul.f32 %v898, %v900
        %v902 = vadd.f32 %v898, %v901
        %vm903 = vweird.f32 %v882
        %vm904 = vweird.f32 %v898
        %vm905 = vmor %vm903, %vm904
        %v906 = vsel %vm905, %v898, %v902
        %v907 = vand.u32 2147483647, %v882
        %vm908 = vcmp.eq.f32.partialorder %v907, 8.507059e+37
        %v909 = vand.u32 %v882, 2147483648
        %v910 = vor.u32 1.1754944e-38, %v909
        %v911 = vsel %vm908, %v910, %v906
        %v912 = vmul.f32 1.0, %v911
        %v913 = vmul.f32 %v820, %v897
        %v914 = vmul.f32 %v872, %v912
        %v915 = vpack.c.bf16 %v914, %v913
        %916 = vst [vmem:[%s419] sm:$0xff] %v915
        %s917 = smul.u32 2, %s14
        %p918 = scmp.lt.s32.totalorder %s917, 3
        %s919 = scalar_select %p918, %s917, 3
        %s920 = smul.addr %s919, 4
        %s921 = scalar_lea.vmem %s3, %s920
        // Predicated region
        $region71: #{calo_ae_forward.13} parent=65 // pred_check
          %p922 = pneg %p100
        $region72: #{calo_ae_forward.13} parent=65 // pred_check_branch
          %924 = sbr.rel (%p922) target = $region74
        $region73: #{calo_ae_forward.13} parent=65 // pred_region
          %s925 = smul.u32 2, %s14
        $region74: #{calo_ae_forward.13} parent=65 // pred_fallthru
          _
      $region66: #{calo_ae_forward.13} parent=5 // pred_fallthru
        _
      %p926 = scmp.le.s32.totalorder 2, %s9
      // Predicated region
      $region75: #{calo_ae_forward.13} parent=5 // pred_check
        %p927 = pneg %p926
      $region76: #{calo_ae_forward.13} parent=5 // pred_check_branch
        %929 = sbr.rel (%p927) target = $region78
      $region77: #{calo_ae_forward.13} parent=5 // pred_region
        %s930 = ssub.s32 %s9, 2
        // Predicated region
        $region79: #{calo_ae_forward.13} parent=77 // pred_check
          %p931 = pneg %p106
        $region80: #{calo_ae_forward.13} parent=77 // pred_check_branch
          %933 = sbr.rel (%p931) target = $region82
        $region81: #{calo_ae_forward.13} parent=77 // pred_region
          %s934 = smul.u32 2, %s15
          %p935 = scmp.lt.s32.totalorder %s934, 3
          %s936 = scalar_select %p935, %s934, 3
          %s937 = smul.addr %s936, 4
          %s938 = scalar_lea.vmem %s3, %s937
        $region82: #{calo_ae_forward.13} parent=77 // pred_fallthru
          _
      $region78: #{calo_ae_forward.13} parent=5 // pred_fallthru
        _
    $region6: #{calo_ae_forward.13} parent=1 // loop_footer
      %s13 = sadd.s32 1, %s9
    $region7: #{calo_ae_forward.13} parent=1 // loop_footer_branch
      %8 = sbr.rel target = $region3
    $region8: #{calo_ae_forward.13} parent=1 // loop_exit
      _

// kernel: calo_ae_forward.14
$region0: #{calo_ae_forward.14}
  #allocation0 [shape = 'u32[]', space=smem, size = 0x4, offset = 0x4, fixed_abs, tag = 'smem constant byte address 0x4 - core index']
  #allocation1 [shape = 'u32[72,128]{1,0:T(1,128)}', space=vmem, size = 0x9000, scoped, tag = 'internal scratch']
  %s0 = inlined_call_operand.vmem [shape: bf16[32,216], index: 0, kind: input, shape index: {}]
  %s1 = inlined_call_operand.vmem [shape: bf16[216,512], index: 1, kind: input, shape index: {}]
  %s2 = inlined_call_operand.vmem [shape: f32[32,1], index: 2, kind: input, shape index: {}]
  %s3 = inlined_call_operand.vmem [shape: bf16[32,512], index: 3, kind: output, shape index: {}]
  %s4 = sld [smem:[#allocation0]]
  $region117: #{calo_ae_forward.14} parent=0
    _
  %s6 = ssub.s32 1, %s4
  %s7 = scalar_select 0, %s6, %s4
  $region1: #{calo_ae_forward.14} parent=0
    #allocation2 [shape = 'u8[221184]{0}', space=vmem, size = 0x36000, scoped, tag = 'input window, operand 1']
    #allocation3 [shape = 'u8[32768]{0}', space=vmem, size = 0x8000, scoped, tag = 'output window, operand 0']
    loop: start=0, step=1, limit=4
    $region2: #{calo_ae_forward.14} parent=1 // loop_pre_header
      _
    $region3: #{calo_ae_forward.14} parent=1 // loop_header
      %s9 = sphi 0, %s13
      %p10 = scmp.ge.s32.totalorder %s9, 4
      %s17 = sphi 0, %s17
      %s19 = sphi 0, %s17
      %s20 = sphi 0, %s19
      %s34 = sphi 0, %s20
      %s40 = sphi 0, %s42
      %s43 = sphi 0, %s40
      %s44 = sphi 0, %s43
      %s60 = sphi 0, %s44
      %s64 = sphi 0, %s64
      %s66 = sphi 0, %s64
      %s67 = sphi 0, %s66
      %s81 = sphi 0, %s67
      %s87 = sphi 0, %s89
      %s90 = sphi 0, %s87
      %s91 = sphi 0, %s90
      %s107 = sphi 0, %s91
    $region4: #{calo_ae_forward.14} parent=1 // loop_header_branch
      %12 = sbr.rel (%p10) target = $region8
    $region5: #{calo_ae_forward.14} parent=1 // loop_body
      %s14 = ssub.s32 %s9, 1
      %s15 = ssub.s32 %s9, 2
      %s16 = sadd.s32 %s9, 1
      %s18 = sadd.s32 %s17, 1
      %p21 = scmp.eq.s32.totalorder %s9, 1
      %p22 = scmp.ne.s32.totalorder %s17, %s19
      %p23 = scmp.eq.s32.totalorder %s9, 0
      %p24 = por %p22, %p23
      %p25 = scmp.ne.s32.totalorder %s17, %s19
      %p26 = scmp.eq.s32.totalorder %s14, 1
      %p27 = por %p25, %p26
      %p28 = scmp.ne.s32.totalorder %s19, %s20
      %p29 = scmp.eq.s32.totalorder %s14, 0
      %p30 = por %p28, %p29
      %p31 = scmp.ne.s32.totalorder %s19, %s20
      %p32 = scmp.eq.s32.totalorder %s15, 1
      %p33 = por %p31, %p32
      %p35 = scmp.ne.s32.totalorder %s20, %s34
      %p36 = scmp.eq.s32.totalorder %s15, 0
      %p37 = por %p35, %p36
      %s38 = ssub.s32 %s9, %s16
      %p39 = scmp.eq.s32.totalorder %s38, 0
      %s41 = sadd.s32 %s40, 1
      %s42 = scalar_select %p39, %s40, %s41
      %p45 = pneg %p39
      %p46 = scmp.eq.s32.totalorder %s9, 1
      %p47 = por %p45, %p46
      %p48 = scmp.ne.s32.totalorder %s40, %s43
      %p49 = scmp.eq.s32.totalorder %s9, 0
      %p50 = por %p48, %p49
      %p51 = scmp.ne.s32.totalorder %s40, %s43
      %p52 = scmp.eq.s32.totalorder %s14, 1
      %p53 = por %p51, %p52
      %p54 = scmp.ne.s32.totalorder %s43, %s44
      %p55 = scmp.eq.s32.totalorder %s14, 0
      %p56 = por %p54, %p55
      %p57 = scmp.ne.s32.totalorder %s43, %s44
      %p58 = scmp.eq.s32.totalorder %s15, 1
      %p59 = por %p57, %p58
      %p61 = scmp.ne.s32.totalorder %s44, %s60
      %p62 = scmp.eq.s32.totalorder %s15, 0
      %p63 = por %p61, %p62
      %s65 = sadd.s32 %s64, 1
      %p68 = scmp.eq.s32.totalorder %s9, 1
      %p69 = scmp.ne.s32.totalorder %s64, %s66
      %p70 = scmp.eq.s32.totalorder %s9, 0
      %p71 = por %p69, %p70
      %p72 = scmp.ne.s32.totalorder %s64, %s66
      %p73 = scmp.eq.s32.totalorder %s14, 1
      %p74 = por %p72, %p73
      %p75 = scmp.ne.s32.totalorder %s66, %s67
      %p76 = scmp.eq.s32.totalorder %s14, 0
      %p77 = por %p75, %p76
      %p78 = scmp.ne.s32.totalorder %s66, %s67
      %p79 = scmp.eq.s32.totalorder %s15, 1
      %p80 = por %p78, %p79
      %p82 = scmp.ne.s32.totalorder %s67, %s81
      %p83 = scmp.eq.s32.totalorder %s15, 0
      %p84 = por %p82, %p83
      %s85 = ssub.s32 %s9, %s16
      %p86 = scmp.eq.s32.totalorder %s85, 0
      %s88 = sadd.s32 %s87, 1
      %s89 = scalar_select %p86, %s87, %s88
      %p92 = pneg %p86
      %p93 = scmp.eq.s32.totalorder %s9, 1
      %p94 = por %p92, %p93
      %p95 = scmp.ne.s32.totalorder %s87, %s90
      %p96 = scmp.eq.s32.totalorder %s9, 0
      %p97 = por %p95, %p96
      %p98 = scmp.ne.s32.totalorder %s87, %s90
      %p99 = scmp.eq.s32.totalorder %s14, 1
      %p100 = por %p98, %p99
      %p101 = scmp.ne.s32.totalorder %s90, %s91
      %p102 = scmp.eq.s32.totalorder %s14, 0
      %p103 = por %p101, %p102
      %p104 = scmp.ne.s32.totalorder %s90, %s91
      %p105 = scmp.eq.s32.totalorder %s15, 1
      %p106 = por %p104, %p105
      %p108 = scmp.ne.s32.totalorder %s91, %s107
      %p109 = scmp.eq.s32.totalorder %s15, 0
      %p110 = por %p108, %p109
      %p111 = scmp.le.s32.totalorder 1, %s9
      %p112 = scmp.lt.s32.totalorder %s9, 3
      %p113 = pnand %p111, %p112
      %p114 = pneg %p113
      // Predicated region
      $region9: #{calo_ae_forward.14} parent=5 // pred_check
        _
      $region10: #{calo_ae_forward.14} parent=5 // pred_check_branch
        %116 = sbr.rel (%p113) target = $region12
      $region11: #{calo_ae_forward.14} parent=5 // pred_region
        %s117 = ssub.s32 %s9, 1
        // Predicated region
        $region13: #{calo_ae_forward.14} parent=11 // pred_check
          %p118 = pneg %p30
        $region14: #{calo_ae_forward.14} parent=11 // pred_check_branch
          %120 = sbr.rel (%p118) target = $region16
        $region15: #{calo_ae_forward.14} parent=11 // pred_region
          _
        $region16: #{calo_ae_forward.14} parent=11 // pred_fallthru
          _
        // Predicated region
        $region17: #{calo_ae_forward.14} parent=11 // pred_check
          %p121 = pneg %p77
        $region18: #{calo_ae_forward.14} parent=11 // pred_check_branch
          %123 = sbr.rel (%p121) target = $region20
        $region19: #{calo_ae_forward.14} parent=11 // pred_region
          _
        $region20: #{calo_ae_forward.14} parent=11 // pred_fallthru
          _
      $region12: #{calo_ae_forward.14} parent=5 // pred_fallthru
        _
      %p124 = scmp.lt.s32.totalorder %s9, 2
      // Predicated region
      $region21: #{calo_ae_forward.14} parent=5 // pred_check
        %p125 = pneg %p124
      $region22: #{calo_ae_forward.14} parent=5 // pred_check_branch
        %127 = sbr.rel (%p125) target = $region24
      $region23: #{calo_ae_forward.14} parent=5 // pred_region
        // Predicated region
        $region25: #{calo_ae_forward.14} parent=23 // pred_check
          %p128 = pneg %p50
        $region26: #{calo_ae_forward.14} parent=23 // pred_check_branch
          %130 = sbr.rel (%p128) target = $region28
        $region27: #{calo_ae_forward.14} parent=23 // pred_region
          %s131 = sand.u32 %s40, 1
          %s132 = sand.u32 %s40, 1
          %s133 = smul.addr %s132, 216
          %s134 = scalar_lea.vmem [#allocation2], %s133
          %s135 = smul.u32 2, %s9
          %s136 = smul.addr %s135, 4
          %s137 = scalar_lea.vmem %s1, %s136
          // Predicated region
          $region29: #{calo_ae_forward.14} parent=27 // pred_check
            _
          $region30: #{calo_ae_forward.14} parent=27 // pred_check_branch
            %139 = sbr.rel (0) target = $region32
          $region31: #{calo_ae_forward.14} parent=27 // pred_region
            // Predicated region
            $region33: #{calo_ae_forward.14} parent=31 // pred_check
              _
            $region34: #{calo_ae_forward.14} parent=31 // pred_check_branch
              %141 = sbr.rel (0) target = $region36
            $region35: #{calo_ae_forward.14} parent=31 // pred_region
              // Predicated region
              $region48: #{calo_ae_forward.14} parent=35 // pred_check
                _
              $region49: #{calo_ae_forward.14} parent=35 // pred_check_branch
                %209 = sbr.rel (0) target = $region51
              $region50: #{calo_ae_forward.14} parent=35 // pred_region
                loop: start=0, step=1, limit=1
                $region52: #{calo_ae_forward.14} parent=50 // loop_pre_header
                  _
                $region53: #{calo_ae_forward.14} parent=50 // loop_header
                  %s211 = sphi 0, %s215
                  %p212 = scmp.ge.s32.totalorder %s211, 1
                  %s216 = sphi %s137, %s137
                  %s217 = sphi %s134, %s134
                $region54: #{calo_ae_forward.14} parent=50 // loop_header_branch
                  %214 = sbr.rel (%p212) target = $region58
                $region55: #{calo_ae_forward.14} parent=50 // loop_body
                  %v218 = vld [vmem:[%s216] sm:$0xff]
                  %219 = vst [vmem:[%s217] sm:$0xff] %v218
                  %v220 = vld [vmem:[%s216 + $0x10] sm:$0xff]
                  %221 = vst [vmem:[%s217 + $0x8] sm:$0xff] %v220
                  %v222 = vld [vmem:[%s216 + $0x20] sm:$0xff]
                  %223 = vst [vmem:[%s217 + $0x10] sm:$0xff] %v222
                  %v224 = vld [vmem:[%s216 + $0x30] sm:$0xff]
                  %225 = vst [vmem:[%s217 + $0x18] sm:$0xff] %v224
                  %v226 = vld [vmem:[%s216 + $0x40] sm:$0xff]
                  %227 = vst [vmem:[%s217 + $0x20] sm:$0xff] %v226
                  %v228 = vld [vmem:[%s216 + $0x50] sm:$0xff]
                  %229 = vst [vmem:[%s217 + $0x28] sm:$0xff] %v228
                  %v230 = vld [vmem:[%s216 + $0x60] sm:$0xff]
                  %231 = vst [vmem:[%s217 + $0x30] sm:$0xff] %v230
                  %v232 = vld [vmem:[%s216 + $0x70] sm:$0xff]
                  %233 = vst [vmem:[%s217 + $0x38] sm:$0xff] %v232
                  %v234 = vld [vmem:[%s216 + $0x80] sm:$0xff]
                  %235 = vst [vmem:[%s217 + $0x40] sm:$0xff] %v234
                  %v236 = vld [vmem:[%s216 + $0x90] sm:$0xff]
                  %237 = vst [vmem:[%s217 + $0x48] sm:$0xff] %v236
                  %v238 = vld [vmem:[%s216 + $0xa0] sm:$0xff]
                  %239 = vst [vmem:[%s217 + $0x50] sm:$0xff] %v238
                  %v240 = vld [vmem:[%s216 + $0xb0] sm:$0xff]
                  %241 = vst [vmem:[%s217 + $0x58] sm:$0xff] %v240
                  %v242 = vld [vmem:[%s216 + $0xc0] sm:$0xff]
                  %243 = vst [vmem:[%s217 + $0x60] sm:$0xff] %v242
                  %v244 = vld [vmem:[%s216 + $0xd0] sm:$0xff]
                  %245 = vst [vmem:[%s217 + $0x68] sm:$0xff] %v244
                  %v246 = vld [vmem:[%s216 + $0xe0] sm:$0xff]
                  %247 = vst [vmem:[%s217 + $0x70] sm:$0xff] %v246
                  %v248 = vld [vmem:[%s216 + $0xf0] sm:$0xff]
                  %249 = vst [vmem:[%s217 + $0x78] sm:$0xff] %v248
                  %v250 = vld [vmem:[%s216 + $0x100] sm:$0xff]
                  %251 = vst [vmem:[%s217 + $0x80] sm:$0xff] %v250
                  %v252 = vld [vmem:[%s216 + $0x110] sm:$0xff]
                  %253 = vst [vmem:[%s217 + $0x88] sm:$0xff] %v252
                  %v254 = vld [vmem:[%s216 + $0x120] sm:$0xff]
                  %255 = vst [vmem:[%s217 + $0x90] sm:$0xff] %v254
                  %v256 = vld [vmem:[%s216 + $0x130] sm:$0xff]
                  %257 = vst [vmem:[%s217 + $0x98] sm:$0xff] %v256
                  %v258 = vld [vmem:[%s216 + $0x140] sm:$0xff]
                  %259 = vst [vmem:[%s217 + $0xa0] sm:$0xff] %v258
                  %v260 = vld [vmem:[%s216 + $0x150] sm:$0xff]
                  %261 = vst [vmem:[%s217 + $0xa8] sm:$0xff] %v260
                  %v262 = vld [vmem:[%s216 + $0x160] sm:$0xff]
                  %263 = vst [vmem:[%s217 + $0xb0] sm:$0xff] %v262
                  %v264 = vld [vmem:[%s216 + $0x170] sm:$0xff]
                  %265 = vst [vmem:[%s217 + $0xb8] sm:$0xff] %v264
                  %v266 = vld [vmem:[%s216 + $0x180] sm:$0xff]
                  %267 = vst [vmem:[%s217 + $0xc0] sm:$0xff] %v266
                  %v268 = vld [vmem:[%s216 + $0x190] sm:$0xff]
                  %269 = vst [vmem:[%s217 + $0xc8] sm:$0xff] %v268
                  %v270 = vld [vmem:[%s216 + $0x1a0] sm:$0xff]
                  %271 = vst [vmem:[%s217 + $0xd0] sm:$0xff] %v270
                $region56: #{calo_ae_forward.14} parent=50 // loop_footer
                  %s215 = sadd.s32 1, %s211
                $region57: #{calo_ae_forward.14} parent=50 // loop_footer_branch
                  %210 = sbr.rel target = $region53
                $region58: #{calo_ae_forward.14} parent=50 // loop_exit
                  _
              $region51: #{calo_ae_forward.14} parent=35 // pred_fallthru
                _
              // Predicated region
              $region59: #{calo_ae_forward.14} parent=35 // pred_check
                _
              $region60: #{calo_ae_forward.14} parent=35 // pred_check_branch
                %273 = sbr.rel target = $region62
              $region61: #{calo_ae_forward.14} parent=35 // pred_region
                _
              $region62: #{calo_ae_forward.14} parent=35 // pred_fallthru
                _
            $region36: #{calo_ae_forward.14} parent=31 // pred_fallthru
              _
            // Predicated region
            $region37: #{calo_ae_forward.14} parent=31 // pred_check
              _
            $region38: #{calo_ae_forward.14} parent=31 // pred_check_branch
              %143 = sbr.rel target = $region40
            $region39: #{calo_ae_forward.14} parent=31 // pred_region
              %s145 = ssub.s32 256, 1
              loop: start=0, step=1, limit=1
              $region41: #{calo_ae_forward.14} parent=39 // loop_pre_header
                _
              $region42: #{calo_ae_forward.14} parent=39 // loop_header
                %s147 = sphi 0, %s151
                %p148 = scmp.ge.s32.totalorder %s147, 1
                %s152 = sphi %s137, %s137
                %s153 = sphi %s134, %s134
              $region43: #{calo_ae_forward.14} parent=39 // loop_header_branch
                %150 = sbr.rel (%p148) target = $region47
              $region44: #{calo_ae_forward.14} parent=39 // loop_body
                %v154 = vld [vmem:[%s152] sm:%s145]
                %155 = vst [vmem:[%s153] sm:%s145] %v154
                %v156 = vld [vmem:[%s152 + $0x10] sm:%s145]
                %157 = vst [vmem:[%s153 + $0x8] sm:%s145] %v156
                %v158 = vld [vmem:[%s152 + $0x20] sm:%s145]
                %159 = vst [vmem:[%s153 + $0x10] sm:%s145] %v158
                %v160 = vld [vmem:[%s152 + $0x30] sm:%s145]
                %161 = vst [vmem:[%s153 + $0x18] sm:%s145] %v160
                %v162 = vld [vmem:[%s152 + $0x40] sm:%s145]
                %163 = vst [vmem:[%s153 + $0x20] sm:%s145] %v162
                %v164 = vld [vmem:[%s152 + $0x50] sm:%s145]
                %165 = vst [vmem:[%s153 + $0x28] sm:%s145] %v164
                %v166 = vld [vmem:[%s152 + $0x60] sm:%s145]
                %167 = vst [vmem:[%s153 + $0x30] sm:%s145] %v166
                %v168 = vld [vmem:[%s152 + $0x70] sm:%s145]
                %169 = vst [vmem:[%s153 + $0x38] sm:%s145] %v168
                %v170 = vld [vmem:[%s152 + $0x80] sm:%s145]
                %171 = vst [vmem:[%s153 + $0x40] sm:%s145] %v170
                %v172 = vld [vmem:[%s152 + $0x90] sm:%s145]
                %173 = vst [vmem:[%s153 + $0x48] sm:%s145] %v172
                %v174 = vld [vmem:[%s152 + $0xa0] sm:%s145]
                %175 = vst [vmem:[%s153 + $0x50] sm:%s145] %v174
                %v176 = vld [vmem:[%s152 + $0xb0] sm:%s145]
                %177 = vst [vmem:[%s153 + $0x58] sm:%s145] %v176
                %v178 = vld [vmem:[%s152 + $0xc0] sm:%s145]
                %179 = vst [vmem:[%s153 + $0x60] sm:%s145] %v178
                %v180 = vld [vmem:[%s152 + $0xd0] sm:%s145]
                %181 = vst [vmem:[%s153 + $0x68] sm:%s145] %v180
                %v182 = vld [vmem:[%s152 + $0xe0] sm:%s145]
                %183 = vst [vmem:[%s153 + $0x70] sm:%s145] %v182
                %v184 = vld [vmem:[%s152 + $0xf0] sm:%s145]
                %185 = vst [vmem:[%s153 + $0x78] sm:%s145] %v184
                %v186 = vld [vmem:[%s152 + $0x100] sm:%s145]
                %187 = vst [vmem:[%s153 + $0x80] sm:%s145] %v186
                %v188 = vld [vmem:[%s152 + $0x110] sm:%s145]
                %189 = vst [vmem:[%s153 + $0x88] sm:%s145] %v188
                %v190 = vld [vmem:[%s152 + $0x120] sm:%s145]
                %191 = vst [vmem:[%s153 + $0x90] sm:%s145] %v190
                %v192 = vld [vmem:[%s152 + $0x130] sm:%s145]
                %193 = vst [vmem:[%s153 + $0x98] sm:%s145] %v192
                %v194 = vld [vmem:[%s152 + $0x140] sm:%s145]
                %195 = vst [vmem:[%s153 + $0xa0] sm:%s145] %v194
                %v196 = vld [vmem:[%s152 + $0x150] sm:%s145]
                %197 = vst [vmem:[%s153 + $0xa8] sm:%s145] %v196
                %v198 = vld [vmem:[%s152 + $0x160] sm:%s145]
                %199 = vst [vmem:[%s153 + $0xb0] sm:%s145] %v198
                %v200 = vld [vmem:[%s152 + $0x170] sm:%s145]
                %201 = vst [vmem:[%s153 + $0xb8] sm:%s145] %v200
                %v202 = vld [vmem:[%s152 + $0x180] sm:%s145]
                %203 = vst [vmem:[%s153 + $0xc0] sm:%s145] %v202
                %v204 = vld [vmem:[%s152 + $0x190] sm:%s145]
                %205 = vst [vmem:[%s153 + $0xc8] sm:%s145] %v204
                %v206 = vld [vmem:[%s152 + $0x1a0] sm:%s145]
                %207 = vst [vmem:[%s153 + $0xd0] sm:%s145] %v206
              $region45: #{calo_ae_forward.14} parent=39 // loop_footer
                %s151 = sadd.s32 1, %s147
              $region46: #{calo_ae_forward.14} parent=39 // loop_footer_branch
                %146 = sbr.rel target = $region42
              $region47: #{calo_ae_forward.14} parent=39 // loop_exit
                _
            $region40: #{calo_ae_forward.14} parent=31 // pred_fallthru
              _
          $region32: #{calo_ae_forward.14} parent=27 // pred_fallthru
            _
          %274 = vnop
        $region28: #{calo_ae_forward.14} parent=23 // pred_fallthru
          _
      $region24: #{calo_ae_forward.14} parent=5 // pred_fallthru
        _
      %p275 = scmp.le.s32.totalorder 1, %s9
      %p276 = scmp.lt.s32.totalorder %s9, 3
      %p277 = pnand %p275, %p276
      %p278 = pneg %p277
      // Predicated region
      $region63: #{calo_ae_forward.14} parent=5 // pred_check
        _
      $region64: #{calo_ae_forward.14} parent=5 // pred_check_branch
        %280 = sbr.rel (%p277) target = $region66
      $region65: #{calo_ae_forward.14} parent=5 // pred_region
        %s281 = ssub.s32 %s9, 1
        %s282 = sand.u32 %s43, 1
        %s283 = sand.u32 %s43, 1
        %s284 = smul.addr %s283, 216
        %s285 = scalar_lea.vmem [#allocation2], %s284
        // Predicated region
        $region67: #{calo_ae_forward.14} parent=65 // pred_check
          %p286 = pneg %p56
        $region68: #{calo_ae_forward.14} parent=65 // pred_check_branch
          %288 = sbr.rel (%p286) target = $region70
        $region69: #{calo_ae_forward.14} parent=65 // pred_region
          _
        $region70: #{calo_ae_forward.14} parent=65 // pred_fallthru
          _
        %p289 = pneg %p30
        %p290 = pneg %p27
        %s291 = sand.u32 %s43, 1
        %s292 = sand.u32 %s43, 1
        %s293 = smul.addr %s292, 216
        %s294 = scalar_lea.vmem [#allocation2], %s293
        %p295 = pneg %p56
        %p296 = pneg %p53
        %p297 = pneg %p77
        %p298 = pneg %p74
        %p299 = pneg %p103
        %p300 = pneg %p100
        %s301 = sand.u32 %s90, 1
        %s302 = sand.u32 %s90, 1
        %s303 = smul.addr %s302, 32
        %s304 = scalar_lea.vmem [#allocation3], %s303
        %s305 = smul.u32 2, %s14
        %s306 = smul.u32 2, %s14
        %v308 = vld [vmem:[%s0] sm:$0xff]
        %v309 = vld [vmem:[%s0 + $0x8] sm:$0xff]
        %v310 = vld [vmem:[%s0 + $0x10] sm:$0xff]
        %v311 = vld [vmem:[%s0 + $0x18] sm:$0xff]
        %v312 = vld [vmem:[%s285] sm:$0xff]
        %v313 = vld [vmem:[%s285 + $0x8] sm:$0xff]
        %v314 = vld [vmem:[%s285 + $0x10] sm:$0xff]
        %v315 = vld [vmem:[%s285 + $0x18] sm:$0xff]
        %v316 = vld [vmem:[%s285 + $0x20] sm:$0xff]
        %v317 = vld [vmem:[%s285 + $0x28] sm:$0xff]
        %v318 = vld [vmem:[%s285 + $0x30] sm:$0xff]
        %v319 = vld [vmem:[%s285 + $0x38] sm:$0xff]
        %v320 = vld [vmem:[%s285 + $0x40] sm:$0xff]
        %v321 = vld [vmem:[%s285 + $0x48] sm:$0xff]
        %v322 = vld [vmem:[%s285 + $0x50] sm:$0xff]
        %v323 = vld [vmem:[%s285 + $0x58] sm:$0xff]
        %v324 = vld [vmem:[%s285 + $0x60] sm:$0xff]
        %v325 = vld [vmem:[%s285 + $0x68] sm:$0xff]
        %v326 = vld [vmem:[%s285 + $0x70] sm:$0xff]
        %v327 = vld [vmem:[%s285 + $0x78] sm:$0xff]
        %v328 = vld [vmem:[%s285 + $0x80] sm:$0xff]
        %v329 = vld [vmem:[%s285 + $0x88] sm:$0xff]
        %v330 = vld [vmem:[%s285 + $0x90] sm:$0xff]
        %v331 = vld [vmem:[%s285 + $0x98] sm:$0xff]
        %v332 = vld [vmem:[%s285 + $0xa0] sm:$0xff]
        %v333 = vld [vmem:[%s285 + $0xa8] sm:$0xff]
        %v334 = vld [vmem:[%s285 + $0xb0] sm:$0xff]
        %v335 = vld [vmem:[%s285 + $0xb8] sm:$0xff]
        %v336 = vld [vmem:[%s285 + $0xc0] sm:$0xff]
        %v337 = vld [vmem:[%s285 + $0xc8] sm:$0xff]
        %v338 = vld [vmem:[%s285 + $0xd0] sm:$0xff]
        %v339 = vld [vmem:[%s2] sm:$0xff]
        %v340 = vld [vmem:[%s2 + $0x8] sm:$0xff]
        %v341 = vld [vmem:[%s2 + $0x10] sm:$0xff]
        %v342 = vld [vmem:[%s2 + $0x18] sm:$0xff]
        %344 = vset.pattern.permute.xlu0 0
        %345 = vperm.xlu0 %344, %v339
        %v346 = vpop.permute.xlu0 %345
        %349 = vset.pattern.permute.xlu0 0
        %350 = vperm.xlu0 %349, %v340
        %v351 = vpop.permute.xlu0 %350
        %354 = vset.pattern.permute.xlu0 0
        %355 = vperm.xlu0 %354, %v341
        %v356 = vpop.permute.xlu0 %355
        %359 = vset.pattern.permute.xlu0 0
        %360 = vperm.xlu0 %359, %v342
        %v361 = vpop.permute.xlu0 %360
        %v367 = vunpack.c.l.b16 %v308
        %v368 = vunpack.c.h.b16 %v308
        %v369 = vunpack.c.l.b16 %v309
        %v370 = vunpack.c.h.b16 %v309
        %v371 = vunpack.c.l.b16 %v310
        %v372 = vunpack.c.h.b16 %v310
        %v373 = vunpack.c.l.b16 %v311
        %v374 = vunpack.c.h.b16 %v311
        %v375 = vpack.c.b16 %v369, %v367
        %v376 = vpack.c.b16 %v370, %v368
        %v377 = vpack.c.b16 %v373, %v371
        %v378 = vpack.c.b16 %v374, %v372
        %v408 = vunpack.c.l.b16 %v312
        %v409 = vunpack.c.h.b16 %v312
        %v410 = vunpack.c.l.b16 %v313
        %v411 = vunpack.c.h.b16 %v313
        %v412 = vunpack.c.l.b16 %v314
        %v413 = vunpack.c.h.b16 %v314
        %v414 = vunpack.c.l.b16 %v315
        %v415 = vunpack.c.h.b16 %v315
        %v416 = vunpack.c.l.b16 %v316
        %v417 = vunpack.c.h.b16 %v316
        %v418 = vunpack.c.l.b16 %v317
        %v419 = vunpack.c.h.b16 %v317
        %v420 = vunpack.c.l.b16 %v318
        %v421 = vunpack.c.h.b16 %v318
        %v422 = vunpack.c.l.b16 %v319
        %v423 = vunpack.c.h.b16 %v319
        %v424 = vunpack.c.l.b16 %v320
        %v425 = vunpack.c.h.b16 %v320
        %v426 = vunpack.c.l.b16 %v321
        %v427 = vunpack.c.h.b16 %v321
        %v428 = vunpack.c.l.b16 %v322
        %v429 = vunpack.c.h.b16 %v322
        %v430 = vunpack.c.l.b16 %v323
        %v431 = vunpack.c.h.b16 %v323
        %v432 = vunpack.c.l.b16 %v324
        %v433 = vunpack.c.h.b16 %v324
        %v434 = vunpack.c.l.b16 %v325
        %v435 = vunpack.c.h.b16 %v325
        %v436 = vunpack.c.l.b16 %v326
        %v437 = vunpack.c.h.b16 %v326
        %v438 = vunpack.c.l.b16 %v327
        %v439 = vunpack.c.h.b16 %v327
        %v440 = vunpack.c.l.b16 %v328
        %v441 = vunpack.c.h.b16 %v328
        %v442 = vunpack.c.l.b16 %v329
        %v443 = vunpack.c.h.b16 %v329
        %v444 = vunpack.c.l.b16 %v330
        %v445 = vunpack.c.h.b16 %v330
        %v446 = vunpack.c.l.b16 %v331
        %v447 = vunpack.c.h.b16 %v331
        %v448 = vunpack.c.l.b16 %v332
        %v449 = vunpack.c.h.b16 %v332
        %v450 = vunpack.c.l.b16 %v333
        %v451 = vunpack.c.h.b16 %v333
        %v452 = vunpack.c.l.b16 %v334
        %v453 = vunpack.c.h.b16 %v334
        %v454 = vunpack.c.l.b16 %v335
        %v455 = vunpack.c.h.b16 %v335
        %v456 = vunpack.c.l.b16 %v336
        %v457 = vunpack.c.h.b16 %v336
        %v458 = vunpack.c.l.b16 %v337
        %v459 = vunpack.c.h.b16 %v337
        %v460 = vunpack.c.l.b16 %v338
        %v461 = vunpack.c.h.b16 %v338
        %v462 = vpack.c.b16 %v410, %v408
        %v463 = vpack.c.b16 %v411, %v409
        %v464 = vpack.c.b16 %v414, %v412
        %v465 = vpack.c.b16 %v415, %v413
        %v466 = vpack.c.b16 %v418, %v416
        %v467 = vpack.c.b16 %v419, %v417
        %v468 = vpack.c.b16 %v422, %v420
        %v469 = vpack.c.b16 %v423, %v421
        %v470 = vpack.c.b16 %v426, %v424
        %v471 = vpack.c.b16 %v427, %v425
        %v472 = vpack.c.b16 %v430, %v428
        %v473 = vpack.c.b16 %v431, %v429
        %v474 = vpack.c.b16 %v434, %v432
        %v475 = vpack.c.b16 %v435, %v433
        %v476 = vpack.c.b16 %v438, %v436
        %v477 = vpack.c.b16 %v439, %v437
        %v478 = vpack.c.b16 %v442, %v440
        %v479 = vpack.c.b16 %v443, %v441
        %v480 = vpack.c.b16 %v446, %v444
        %v481 = vpack.c.b16 %v447, %v445
        %v482 = vpack.c.b16 %v450, %v448
        %v483 = vpack.c.b16 %v451, %v449
        %v484 = vpack.c.b16 %v454, %v452
        %v485 = vpack.c.b16 %v455, %v453
        %v486 = vpack.c.b16 %v458, %v456
        %v487 = vpack.c.b16 %v459, %v457
        %v488 = vpack.c.b16 %v460, %v460
        %v489 = vpack.c.b16 %v461, %v461
        %vm516 = vcmask 719872
        %v518 = vsel %vm516, %v376, 0
        %v521 = vsel %vm516, %v378, 0
        %vm523 = vcmask 1043456
        %v525 = vsel %vm523, %v488, 0
        %v528 = vsel %vm523, %v489, 0
        %530 = vmatpush.bf16.msra.mxu0 %v476
        %531 = vmatpush.bf16.msra.mxu0 %v474
        %532 = vmatpush.bf16.msra.mxu0 %v472
        %533 = vmatpush.bf16.msra.mxu0 %v470
        %534 = vmatpush.bf16.msra.mxu0 %v468
        %535 = vmatpush.bf16.msra.mxu0 %v466
        %536 = vmatpush.bf16.msra.mxu0 %v464
        %537 = vmatpush.bf16.msra.mxu0 %v462
        %538 = vmatmul.bf16.gmra.mxu0 %v375
        %v539 = vpop.f32.mrf.mxu0
        %v540 = vadd.f32 %v346, %v539
        %v541 = vpop.f32.mrf.mxu0
        %v542 = vadd.f32 %v351, %v541
        %543 = vmatmul.bf16.gmra.mxu0 %v377
        %v544 = vpop.f32.mrf.mxu0
        %v545 = vadd.f32 %v356, %v544
        %v546 = vpop.f32.mrf.mxu0
        %v547 = vadd.f32 %v361, %v546
        %548 = vdwg.mxu0
        %549 = vmatpush.bf16.msra.mxu0 0
        %550 = vmatpush.bf16.msra.mxu0 0
        %551 = vmatpush.bf16.msra.mxu0 %v525
        %552 = vmatpush.bf16.msra.mxu0 %v486
        %553 = vmatpush.bf16.msra.mxu0 %v484
        %554 = vmatpush.bf16.msra.mxu0 %v482
        %555 = vmatpush.bf16.msra.mxu0 %v480
        %556 = vmatpush.bf16.msra.mxu0 %v478
        %557 = vmatmul.bf16.gmra.mxu0 %v518
        %v558 = vpop.f32.mrf.mxu0
        %v559 = vadd.f32 %v540, %v558
        %v560 = vpop.f32.mrf.mxu0
        %v561 = vadd.f32 %v542, %v560
        %562 = vmatmul.bf16.gmra.mxu0 %v521
        %v563 = vpop.f32.mrf.mxu0
        %v564 = vadd.f32 %v545, %v563
        %v565 = vpop.f32.mrf.mxu0
        %v566 = vadd.f32 %v547, %v565
        %567 = vdwg.mxu0
        %568 = vmatpush.bf16.msra.mxu0 %v477
        %569 = vmatpush.bf16.msra.mxu0 %v475
        %570 = vmatpush.bf16.msra.mxu0 %v473
        %571 = vmatpush.bf16.msra.mxu0 %v471
        %572 = vmatpush.bf16.msra.mxu0 %v469
        %573 = vmatpush.bf16.msra.mxu0 %v467
        %574 = vmatpush.bf16.msra.mxu0 %v465
        %575 = vmatpush.bf16.msra.mxu0 %v463
        %576 = vmatmul.bf16.gmra.mxu0 %v375
        %v577 = vpop.f32.mrf.mxu0
        %v578 = vadd.f32 %v346, %v577
        %v579 = vpop.f32.mrf.mxu0
        %v580 = vadd.f32 %v351, %v579
        %581 = vmatmul.bf16.gmra.mxu0 %v377
        %v582 = vpop.f32.mrf.mxu0
        %v583 = vadd.f32 %v356, %v582
        %v584 = vpop.f32.mrf.mxu0
        %v585 = vadd.f32 %v361, %v584
        %586 = vdwg.mxu0
        %587 = vmatpush.bf16.msra.mxu0 0
        %588 = vmatpush.bf16.msra.mxu0 0
        %589 = vmatpush.bf16.msra.mxu0 %v528
        %590 = vmatpush.bf16.msra.mxu0 %v487
        %591 = vmatpush.bf16.msra.mxu0 %v485
        %592 = vmatpush.bf16.msra.mxu0 %v483
        %593 = vmatpush.bf16.msra.mxu0 %v481
        %594 = vmatpush.bf16.msra.mxu0 %v479
        %595 = vmatmul.bf16.gmra.mxu0 %v518
        %v596 = vpop.f32.mrf.mxu0
        %v597 = vadd.f32 %v578, %v596
        %v598 = vpop.f32.mrf.mxu0
        %v599 = vadd.f32 %v580, %v598
        %600 = vmatmul.bf16.gmra.mxu0 %v521
        %v601 = vpop.f32.mrf.mxu0
        %v602 = vadd.f32 %v583, %v601
        %v603 = vpop.f32.mrf.mxu0
        %v604 = vadd.f32 %v585, %v603
        %605 = vdwg.mxu0
        %v606 = vpack.c.bf16 %v597, %v559
        %v607 = vpack.c.bf16 %v599, %v561
        %v608 = vpack.c.bf16 %v602, %v564
        %v609 = vpack.c.bf16 %v604, %v566
        %610 = vst [vmem:[%s304] sm:$0xff] %v606
        %611 = vst [vmem:[%s304 + $0x8] sm:$0xff] %v607
        %612 = vst [vmem:[%s304 + $0x10] sm:$0xff] %v608
        %613 = vst [vmem:[%s304 + $0x18] sm:$0xff] %v609
        %s614 = sand.u32 %s90, 1
        %s615 = sand.u32 %s90, 1
        %s616 = smul.addr %s615, 32
        %s617 = scalar_lea.vmem [#allocation3], %s616
        // Predicated region
        $region71: #{calo_ae_forward.14} parent=65 // pred_check
          %p618 = pneg %p100
        $region72: #{calo_ae_forward.14} parent=65 // pred_check_branch
          %620 = sbr.rel (%p618) target = $region74
        $region73: #{calo_ae_forward.14} parent=65 // pred_region
          %s621 = smul.u32 2, %s14
          %s622 = smul.addr %s621, 4
          %s623 = scalar_lea.vmem %s3, %s622
          // Predicated region
          $region75: #{calo_ae_forward.14} parent=73 // pred_check
            _
          $region76: #{calo_ae_forward.14} parent=73 // pred_check_branch
            %625 = sbr.rel (0) target = $region78
          $region77: #{calo_ae_forward.14} parent=73 // pred_region
            // Predicated region
            $region79: #{calo_ae_forward.14} parent=77 // pred_check
              _
            $region80: #{calo_ae_forward.14} parent=77 // pred_check_branch
              %627 = sbr.rel (0) target = $region82
            $region81: #{calo_ae_forward.14} parent=77 // pred_region
              // Predicated region
              $region94: #{calo_ae_forward.14} parent=81 // pred_check
                _
              $region95: #{calo_ae_forward.14} parent=81 // pred_check_branch
                %649 = sbr.rel (0) target = $region97
              $region96: #{calo_ae_forward.14} parent=81 // pred_region
                loop: start=0, step=1, limit=1
                $region98: #{calo_ae_forward.14} parent=96 // loop_pre_header
                  _
                $region99: #{calo_ae_forward.14} parent=96 // loop_header
                  %s651 = sphi 0, %s655
                  %p652 = scmp.ge.s32.totalorder %s651, 1
                  %s656 = sphi %s617, %s617
                  %s657 = sphi %s623, %s623
                $region100: #{calo_ae_forward.14} parent=96 // loop_header_branch
                  %654 = sbr.rel (%p652) target = $region104
                $region101: #{calo_ae_forward.14} parent=96 // loop_body
                  %v658 = vld [vmem:[%s656] sm:$0xff]
                  %659 = vst [vmem:[%s657] sm:$0xff] %v658
                  %v660 = vld [vmem:[%s656 + $0x8] sm:$0xff]
                  %661 = vst [vmem:[%s657 + $0x10] sm:$0xff] %v660
                  %v662 = vld [vmem:[%s656 + $0x10] sm:$0xff]
                  %663 = vst [vmem:[%s657 + $0x20] sm:$0xff] %v662
                  %v664 = vld [vmem:[%s656 + $0x18] sm:$0xff]
                  %665 = vst [vmem:[%s657 + $0x30] sm:$0xff] %v664
                $region102: #{calo_ae_forward.14} parent=96 // loop_footer
                  %s655 = sadd.s32 1, %s651
                $region103: #{calo_ae_forward.14} parent=96 // loop_footer_branch
                  %650 = sbr.rel target = $region99
                $region104: #{calo_ae_forward.14} parent=96 // loop_exit
                  _
              $region97: #{calo_ae_forward.14} parent=81 // pred_fallthru
                _
              // Predicated region
              $region105: #{calo_ae_forward.14} parent=81 // pred_check
                _
              $region106: #{calo_ae_forward.14} parent=81 // pred_check_branch
                %667 = sbr.rel target = $region108
              $region107: #{calo_ae_forward.14} parent=81 // pred_region
                _
              $region108: #{calo_ae_forward.14} parent=81 // pred_fallthru
                _
            $region82: #{calo_ae_forward.14} parent=77 // pred_fallthru
              _
            // Predicated region
            $region83: #{calo_ae_forward.14} parent=77 // pred_check
              _
            $region84: #{calo_ae_forward.14} parent=77 // pred_check_branch
              %629 = sbr.rel target = $region86
            $region85: #{calo_ae_forward.14} parent=77 // pred_region
              %s631 = ssub.s32 256, 1
              loop: start=0, step=1, limit=1
              $region87: #{calo_ae_forward.14} parent=85 // loop_pre_header
                _
              $region88: #{calo_ae_forward.14} parent=85 // loop_header
                %s633 = sphi 0, %s637
                %p634 = scmp.ge.s32.totalorder %s633, 1
                %s638 = sphi %s617, %s617
                %s639 = sphi %s623, %s623
              $region89: #{calo_ae_forward.14} parent=85 // loop_header_branch
                %636 = sbr.rel (%p634) target = $region93
              $region90: #{calo_ae_forward.14} parent=85 // loop_body
                %v640 = vld [vmem:[%s638] sm:%s631]
                %641 = vst [vmem:[%s639] sm:%s631] %v640
                %v642 = vld [vmem:[%s638 + $0x8] sm:%s631]
                %643 = vst [vmem:[%s639 + $0x10] sm:%s631] %v642
                %v644 = vld [vmem:[%s638 + $0x10] sm:%s631]
                %645 = vst [vmem:[%s639 + $0x20] sm:%s631] %v644
                %v646 = vld [vmem:[%s638 + $0x18] sm:%s631]
                %647 = vst [vmem:[%s639 + $0x30] sm:%s631] %v646
              $region91: #{calo_ae_forward.14} parent=85 // loop_footer
                %s637 = sadd.s32 1, %s633
              $region92: #{calo_ae_forward.14} parent=85 // loop_footer_branch
                %632 = sbr.rel target = $region88
              $region93: #{calo_ae_forward.14} parent=85 // loop_exit
                _
            $region86: #{calo_ae_forward.14} parent=77 // pred_fallthru
              _
          $region78: #{calo_ae_forward.14} parent=73 // pred_fallthru
            _
          %668 = vnop
        $region74: #{calo_ae_forward.14} parent=65 // pred_fallthru
          _
      $region66: #{calo_ae_forward.14} parent=5 // pred_fallthru
        _
      %p669 = scmp.le.s32.totalorder 2, %s9
      // Predicated region
      $region109: #{calo_ae_forward.14} parent=5 // pred_check
        %p670 = pneg %p669
      $region110: #{calo_ae_forward.14} parent=5 // pred_check_branch
        %672 = sbr.rel (%p670) target = $region112
      $region111: #{calo_ae_forward.14} parent=5 // pred_region
        %s673 = ssub.s32 %s9, 2
        // Predicated region
        $region113: #{calo_ae_forward.14} parent=111 // pred_check
          %p674 = pneg %p106
        $region114: #{calo_ae_forward.14} parent=111 // pred_check_branch
          %676 = sbr.rel (%p674) target = $region116
        $region115: #{calo_ae_forward.14} parent=111 // pred_region
          %s677 = sand.u32 %s91, 1
          %s678 = sand.u32 %s91, 1
          %s679 = smul.addr %s678, 32
          %s680 = scalar_lea.vmem [#allocation3], %s679
        $region116: #{calo_ae_forward.14} parent=111 // pred_fallthru
          _
      $region112: #{calo_ae_forward.14} parent=5 // pred_fallthru
        _
    $region6: #{calo_ae_forward.14} parent=1 // loop_footer
      %s13 = sadd.s32 1, %s9
    $region7: #{calo_ae_forward.14} parent=1 // loop_footer_branch
      %8 = sbr.rel target = $region3
    $region8: #{calo_ae_forward.14} parent=1 // loop_exit
      _

// kernel: calo_ae_forward.15
$region0: #{calo_ae_forward.15}
  #allocation0 [shape = 'u32[]', space=smem, size = 0x4, offset = 0x4, fixed_abs, tag = 'smem constant byte address 0x4 - core index']
  #allocation1 [shape = 'u32[72,128]{1,0:T(1,128)}', space=vmem, size = 0x9000, scoped, tag = 'internal scratch']
  %s0 = inlined_call_operand.vmem [shape: bf16[8,216], index: 0, kind: input, shape index: {}]
  %s1 = inlined_call_operand.vmem [shape: bf16[216,2048], index: 1, kind: input, shape index: {}]
  %s2 = inlined_call_operand.vmem [shape: f32[8,1], index: 2, kind: input, shape index: {}]
  %s3 = inlined_call_operand.vmem [shape: bf16[8,2048], index: 3, kind: output, shape index: {}]
  %s4 = sld [smem:[#allocation0]]
  $region68: #{calo_ae_forward.15} parent=0
    _
  %s6 = ssub.s32 1, %s4
  %s7 = scalar_select 0, %s6, %s4
  $region1: #{calo_ae_forward.15} parent=0
    #allocation2 [shape = 'u8[884736]{0}', space=vmem, size = 0xd8000, scoped, tag = 'input window, operand 1']
    loop: start=0, step=1, limit=4
    $region2: #{calo_ae_forward.15} parent=1 // loop_pre_header
      _
    $region3: #{calo_ae_forward.15} parent=1 // loop_header
      %s9 = sphi 0, %s13
      %p10 = scmp.ge.s32.totalorder %s9, 4
      %s17 = sphi 0, %s17
      %s19 = sphi 0, %s17
      %s20 = sphi 0, %s19
      %s34 = sphi 0, %s20
      %s40 = sphi 0, %s42
      %s43 = sphi 0, %s40
      %s44 = sphi 0, %s43
      %s60 = sphi 0, %s44
      %s64 = sphi 0, %s64
      %s66 = sphi 0, %s64
      %s67 = sphi 0, %s66
      %s81 = sphi 0, %s67
      %s87 = sphi 0, %s89
      %s90 = sphi 0, %s87
      %s91 = sphi 0, %s90
      %s107 = sphi 0, %s91
    $region4: #{calo_ae_forward.15} parent=1 // loop_header_branch
      %12 = sbr.rel (%p10) target = $region8
    $region5: #{calo_ae_forward.15} parent=1 // loop_body
      %s14 = ssub.s32 %s9, 1
      %s15 = ssub.s32 %s9, 2
      %s16 = sadd.s32 %s9, 1
      %s18 = sadd.s32 %s17, 1
      %p21 = scmp.eq.s32.totalorder %s9, 1
      %p22 = scmp.ne.s32.totalorder %s17, %s19
      %p23 = scmp.eq.s32.totalorder %s9, 0
      %p24 = por %p22, %p23
      %p25 = scmp.ne.s32.totalorder %s17, %s19
      %p26 = scmp.eq.s32.totalorder %s14, 1
      %p27 = por %p25, %p26
      %p28 = scmp.ne.s32.totalorder %s19, %s20
      %p29 = scmp.eq.s32.totalorder %s14, 0
      %p30 = por %p28, %p29
      %p31 = scmp.ne.s32.totalorder %s19, %s20
      %p32 = scmp.eq.s32.totalorder %s15, 1
      %p33 = por %p31, %p32
      %p35 = scmp.ne.s32.totalorder %s20, %s34
      %p36 = scmp.eq.s32.totalorder %s15, 0
      %p37 = por %p35, %p36
      %s38 = ssub.s32 %s9, %s16
      %p39 = scmp.eq.s32.totalorder %s38, 0
      %s41 = sadd.s32 %s40, 1
      %s42 = scalar_select %p39, %s40, %s41
      %p45 = pneg %p39
      %p46 = scmp.eq.s32.totalorder %s9, 1
      %p47 = por %p45, %p46
      %p48 = scmp.ne.s32.totalorder %s40, %s43
      %p49 = scmp.eq.s32.totalorder %s9, 0
      %p50 = por %p48, %p49
      %p51 = scmp.ne.s32.totalorder %s40, %s43
      %p52 = scmp.eq.s32.totalorder %s14, 1
      %p53 = por %p51, %p52
      %p54 = scmp.ne.s32.totalorder %s43, %s44
      %p55 = scmp.eq.s32.totalorder %s14, 0
      %p56 = por %p54, %p55
      %p57 = scmp.ne.s32.totalorder %s43, %s44
      %p58 = scmp.eq.s32.totalorder %s15, 1
      %p59 = por %p57, %p58
      %p61 = scmp.ne.s32.totalorder %s44, %s60
      %p62 = scmp.eq.s32.totalorder %s15, 0
      %p63 = por %p61, %p62
      %s65 = sadd.s32 %s64, 1
      %p68 = scmp.eq.s32.totalorder %s9, 1
      %p69 = scmp.ne.s32.totalorder %s64, %s66
      %p70 = scmp.eq.s32.totalorder %s9, 0
      %p71 = por %p69, %p70
      %p72 = scmp.ne.s32.totalorder %s64, %s66
      %p73 = scmp.eq.s32.totalorder %s14, 1
      %p74 = por %p72, %p73
      %p75 = scmp.ne.s32.totalorder %s66, %s67
      %p76 = scmp.eq.s32.totalorder %s14, 0
      %p77 = por %p75, %p76
      %p78 = scmp.ne.s32.totalorder %s66, %s67
      %p79 = scmp.eq.s32.totalorder %s15, 1
      %p80 = por %p78, %p79
      %p82 = scmp.ne.s32.totalorder %s67, %s81
      %p83 = scmp.eq.s32.totalorder %s15, 0
      %p84 = por %p82, %p83
      %s85 = ssub.s32 %s9, %s16
      %p86 = scmp.eq.s32.totalorder %s85, 0
      %s88 = sadd.s32 %s87, 1
      %s89 = scalar_select %p86, %s87, %s88
      %p92 = pneg %p86
      %p93 = scmp.eq.s32.totalorder %s9, 1
      %p94 = por %p92, %p93
      %p95 = scmp.ne.s32.totalorder %s87, %s90
      %p96 = scmp.eq.s32.totalorder %s9, 0
      %p97 = por %p95, %p96
      %p98 = scmp.ne.s32.totalorder %s87, %s90
      %p99 = scmp.eq.s32.totalorder %s14, 1
      %p100 = por %p98, %p99
      %p101 = scmp.ne.s32.totalorder %s90, %s91
      %p102 = scmp.eq.s32.totalorder %s14, 0
      %p103 = por %p101, %p102
      %p104 = scmp.ne.s32.totalorder %s90, %s91
      %p105 = scmp.eq.s32.totalorder %s15, 1
      %p106 = por %p104, %p105
      %p108 = scmp.ne.s32.totalorder %s91, %s107
      %p109 = scmp.eq.s32.totalorder %s15, 0
      %p110 = por %p108, %p109
      %p111 = scmp.le.s32.totalorder 1, %s9
      %p112 = scmp.lt.s32.totalorder %s9, 3
      %p113 = pnand %p111, %p112
      %p114 = pneg %p113
      // Predicated region
      $region9: #{calo_ae_forward.15} parent=5 // pred_check
        _
      $region10: #{calo_ae_forward.15} parent=5 // pred_check_branch
        %116 = sbr.rel (%p113) target = $region12
      $region11: #{calo_ae_forward.15} parent=5 // pred_region
        %s117 = ssub.s32 %s9, 1
        // Predicated region
        $region13: #{calo_ae_forward.15} parent=11 // pred_check
          %p118 = pneg %p30
        $region14: #{calo_ae_forward.15} parent=11 // pred_check_branch
          %120 = sbr.rel (%p118) target = $region16
        $region15: #{calo_ae_forward.15} parent=11 // pred_region
          _
        $region16: #{calo_ae_forward.15} parent=11 // pred_fallthru
          _
        // Predicated region
        $region17: #{calo_ae_forward.15} parent=11 // pred_check
          %p121 = pneg %p77
        $region18: #{calo_ae_forward.15} parent=11 // pred_check_branch
          %123 = sbr.rel (%p121) target = $region20
        $region19: #{calo_ae_forward.15} parent=11 // pred_region
          _
        $region20: #{calo_ae_forward.15} parent=11 // pred_fallthru
          _
      $region12: #{calo_ae_forward.15} parent=5 // pred_fallthru
        _
      %p124 = scmp.lt.s32.totalorder %s9, 2
      // Predicated region
      $region21: #{calo_ae_forward.15} parent=5 // pred_check
        %p125 = pneg %p124
      $region22: #{calo_ae_forward.15} parent=5 // pred_check_branch
        %127 = sbr.rel (%p125) target = $region24
      $region23: #{calo_ae_forward.15} parent=5 // pred_region
        // Predicated region
        $region25: #{calo_ae_forward.15} parent=23 // pred_check
          %p128 = pneg %p50
        $region26: #{calo_ae_forward.15} parent=23 // pred_check_branch
          %130 = sbr.rel (%p128) target = $region28
        $region27: #{calo_ae_forward.15} parent=23 // pred_region
          %s131 = sand.u32 %s40, 1
          %s132 = sand.u32 %s40, 1
          %s133 = smul.addr %s132, 864
          %s134 = scalar_lea.vmem [#allocation2], %s133
          %s135 = smul.u32 8, %s9
          %s136 = smul.addr %s135, 4
          %s137 = scalar_lea.vmem %s1, %s136
          // Predicated region
          $region29: #{calo_ae_forward.15} parent=27 // pred_check
            _
          $region30: #{calo_ae_forward.15} parent=27 // pred_check_branch
            %139 = sbr.rel (0) target = $region32
          $region31: #{calo_ae_forward.15} parent=27 // pred_region
            // Predicated region
            $region33: #{calo_ae_forward.15} parent=31 // pred_check
              _
            $region34: #{calo_ae_forward.15} parent=31 // pred_check_branch
              %141 = sbr.rel (0) target = $region36
            $region35: #{calo_ae_forward.15} parent=31 // pred_region
              loop: start=0, step=1, limit=1
              $region37: #{calo_ae_forward.15} parent=35 // loop_pre_header
                _
              $region38: #{calo_ae_forward.15} parent=35 // loop_header
                %s143 = sphi 0, %s147
                %p144 = scmp.ge.s32.totalorder %s143, 1
                %s148 = sphi %s137, %s137
                %s149 = sphi %s134, %s134
              $region39: #{calo_ae_forward.15} parent=35 // loop_header_branch
                %146 = sbr.rel (%p144) target = $region43
              $region40: #{calo_ae_forward.15} parent=35 // loop_body
                %v150 = vld [vmem:[%s148] sm:$0xff]
                %151 = vst [vmem:[%s149] sm:$0xff] %v150
                %v152 = vld [vmem:[%s148 + $0x8] sm:$0xff]
                %153 = vst [vmem:[%s149 + $0x8] sm:$0xff] %v152
                %v154 = vld [vmem:[%s148 + $0x10] sm:$0xff]
                %155 = vst [vmem:[%s149 + $0x10] sm:$0xff] %v154
                %v156 = vld [vmem:[%s148 + $0x18] sm:$0xff]
                %157 = vst [vmem:[%s149 + $0x18] sm:$0xff] %v156
                %v158 = vld [vmem:[%s148 + $0x40] sm:$0xff]
                %159 = vst [vmem:[%s149 + $0x20] sm:$0xff] %v158
                %v160 = vld [vmem:[%s148 + $0x48] sm:$0xff]
                %161 = vst [vmem:[%s149 + $0x28] sm:$0xff] %v160
                %v162 = vld [vmem:[%s148 + $0x50] sm:$0xff]
                %163 = vst [vmem:[%s149 + $0x30] sm:$0xff] %v162
                %v164 = vld [vmem:[%s148 + $0x58] sm:$0xff]
                %165 = vst [vmem:[%s149 + $0x38] sm:$0xff] %v164
                %v166 = vld [vmem:[%s148 + $0x80] sm:$0xff]
                %167 = vst [vmem:[%s149 + $0x40] sm:$0xff] %v166
                %v168 = vld [vmem:[%s148 + $0x88] sm:$0xff]
                %169 = vst [vmem:[%s149 + $0x48] sm:$0xff] %v168
                %v170 = vld [vmem:[%s148 + $0x90] sm:$0xff]
                %171 = vst [vmem:[%s149 + $0x50] sm:$0xff] %v170
                %v172 = vld [vmem:[%s148 + $0x98] sm:$0xff]
                %173 = vst [vmem:[%s149 + $0x58] sm:$0xff] %v172
                %v174 = vld [vmem:[%s148 + $0xc0] sm:$0xff]
                %175 = vst [vmem:[%s149 + $0x60] sm:$0xff] %v174
                %v176 = vld [vmem:[%s148 + $0xc8] sm:$0xff]
                %177 = vst [vmem:[%s149 + $0x68] sm:$0xff] %v176
                %v178 = vld [vmem:[%s148 + $0xd0] sm:$0xff]
                %179 = vst [vmem:[%s149 + $0x70] sm:$0xff] %v178
                %v180 = vld [vmem:[%s148 + $0xd8] sm:$0xff]
                %181 = vst [vmem:[%s149 + $0x78] sm:$0xff] %v180
                %v182 = vld [vmem:[%s148 + $0x100] sm:$0xff]
                %183 = vst [vmem:[%s149 + $0x80] sm:$0xff] %v182
                %v184 = vld [vmem:[%s148 + $0x108] sm:$0xff]
                %185 = vst [vmem:[%s149 + $0x88] sm:$0xff] %v184
                %v186 = vld [vmem:[%s148 + $0x110] sm:$0xff]
                %187 = vst [vmem:[%s149 + $0x90] sm:$0xff] %v186
                %v188 = vld [vmem:[%s148 + $0x118] sm:$0xff]
                %189 = vst [vmem:[%s149 + $0x98] sm:$0xff] %v188
                %v190 = vld [vmem:[%s148 + $0x140] sm:$0xff]
                %191 = vst [vmem:[%s149 + $0xa0] sm:$0xff] %v190
                %v192 = vld [vmem:[%s148 + $0x148] sm:$0xff]
                %193 = vst [vmem:[%s149 + $0xa8] sm:$0xff] %v192
                %v194 = vld [vmem:[%s148 + $0x150] sm:$0xff]
                %195 = vst [vmem:[%s149 + $0xb0] sm:$0xff] %v194
                %v196 = vld [vmem:[%s148 + $0x158] sm:$0xff]
                %197 = vst [vmem:[%s149 + $0xb8] sm:$0xff] %v196
                %v198 = vld [vmem:[%s148 + $0x180] sm:$0xff]
                %199 = vst [vmem:[%s149 + $0xc0] sm:$0xff] %v198
                %v200 = vld [vmem:[%s148 + $0x188] sm:$0xff]
                %201 = vst [vmem:[%s149 + $0xc8] sm:$0xff] %v200
                %v202 = vld [vmem:[%s148 + $0x190] sm:$0xff]
                %203 = vst [vmem:[%s149 + $0xd0] sm:$0xff] %v202
                %v204 = vld [vmem:[%s148 + $0x198] sm:$0xff]
                %205 = vst [vmem:[%s149 + $0xd8] sm:$0xff] %v204
                %v206 = vld [vmem:[%s148 + $0x1c0] sm:$0xff]
                %207 = vst [vmem:[%s149 + $0xe0] sm:$0xff] %v206
                %v208 = vld [vmem:[%s148 + $0x1c8] sm:$0xff]
                %209 = vst [vmem:[%s149 + $0xe8] sm:$0xff] %v208
                %v210 = vld [vmem:[%s148 + $0x1d0] sm:$0xff]
                %211 = vst [vmem:[%s149 + $0xf0] sm:$0xff] %v210
                %v212 = vld [vmem:[%s148 + $0x1d8] sm:$0xff]
                %213 = vst [vmem:[%s149 + $0xf8] sm:$0xff] %v212
                %v214 = vld [vmem:[%s148 + $0x200] sm:$0xff]
                %215 = vst [vmem:[%s149 + $0x100] sm:$0xff] %v214
                %v216 = vld [vmem:[%s148 + $0x208] sm:$0xff]
                %217 = vst [vmem:[%s149 + $0x108] sm:$0xff] %v216
                %v218 = vld [vmem:[%s148 + $0x210] sm:$0xff]
                %219 = vst [vmem:[%s149 + $0x110] sm:$0xff] %v218
                %v220 = vld [vmem:[%s148 + $0x218] sm:$0xff]
                %221 = vst [vmem:[%s149 + $0x118] sm:$0xff] %v220
                %v222 = vld [vmem:[%s148 + $0x240] sm:$0xff]
                %223 = vst [vmem:[%s149 + $0x120] sm:$0xff] %v222
                %v224 = vld [vmem:[%s148 + $0x248] sm:$0xff]
                %225 = vst [vmem:[%s149 + $0x128] sm:$0xff] %v224
                %v226 = vld [vmem:[%s148 + $0x250] sm:$0xff]
                %227 = vst [vmem:[%s149 + $0x130] sm:$0xff] %v226
                %v228 = vld [vmem:[%s148 + $0x258] sm:$0xff]
                %229 = vst [vmem:[%s149 + $0x138] sm:$0xff] %v228
                %v230 = vld [vmem:[%s148 + $0x280] sm:$0xff]
                %231 = vst [vmem:[%s149 + $0x140] sm:$0xff] %v230
                %v232 = vld [vmem:[%s148 + $0x288] sm:$0xff]
                %233 = vst [vmem:[%s149 + $0x148] sm:$0xff] %v232
                %v234 = vld [vmem:[%s148 + $0x290] sm:$0xff]
                %235 = vst [vmem:[%s149 + $0x150] sm:$0xff] %v234
                %v236 = vld [vmem:[%s148 + $0x298] sm:$0xff]
                %237 = vst [vmem:[%s149 + $0x158] sm:$0xff] %v236
                %v238 = vld [vmem:[%s148 + $0x2c0] sm:$0xff]
                %239 = vst [vmem:[%s149 + $0x160] sm:$0xff] %v238
                %v240 = vld [vmem:[%s148 + $0x2c8] sm:$0xff]
                %241 = vst [vmem:[%s149 + $0x168] sm:$0xff] %v240
                %v242 = vld [vmem:[%s148 + $0x2d0] sm:$0xff]
                %243 = vst [vmem:[%s149 + $0x170] sm:$0xff] %v242
                %v244 = vld [vmem:[%s148 + $0x2d8] sm:$0xff]
                %245 = vst [vmem:[%s149 + $0x178] sm:$0xff] %v244
                %v246 = vld [vmem:[%s148 + $0x300] sm:$0xff]
                %247 = vst [vmem:[%s149 + $0x180] sm:$0xff] %v246
                %v248 = vld [vmem:[%s148 + $0x308] sm:$0xff]
                %249 = vst [vmem:[%s149 + $0x188] sm:$0xff] %v248
                %v250 = vld [vmem:[%s148 + $0x310] sm:$0xff]
                %251 = vst [vmem:[%s149 + $0x190] sm:$0xff] %v250
                %v252 = vld [vmem:[%s148 + $0x318] sm:$0xff]
                %253 = vst [vmem:[%s149 + $0x198] sm:$0xff] %v252
                %v254 = vld [vmem:[%s148 + $0x340] sm:$0xff]
                %255 = vst [vmem:[%s149 + $0x1a0] sm:$0xff] %v254
                %v256 = vld [vmem:[%s148 + $0x348] sm:$0xff]
                %257 = vst [vmem:[%s149 + $0x1a8] sm:$0xff] %v256
                %v258 = vld [vmem:[%s148 + $0x350] sm:$0xff]
                %259 = vst [vmem:[%s149 + $0x1b0] sm:$0xff] %v258
                %v260 = vld [vmem:[%s148 + $0x358] sm:$0xff]
                %261 = vst [vmem:[%s149 + $0x1b8] sm:$0xff] %v260
                %v262 = vld [vmem:[%s148 + $0x380] sm:$0xff]
                %263 = vst [vmem:[%s149 + $0x1c0] sm:$0xff] %v262
                %v264 = vld [vmem:[%s148 + $0x388] sm:$0xff]
                %265 = vst [vmem:[%s149 + $0x1c8] sm:$0xff] %v264
                %v266 = vld [vmem:[%s148 + $0x390] sm:$0xff]
                %267 = vst [vmem:[%s149 + $0x1d0] sm:$0xff] %v266
                %v268 = vld [vmem:[%s148 + $0x398] sm:$0xff]
                %269 = vst [vmem:[%s149 + $0x1d8] sm:$0xff] %v268
                %v270 = vld [vmem:[%s148 + $0x3c0] sm:$0xff]
                %271 = vst [vmem:[%s149 + $0x1e0] sm:$0xff] %v270
                %v272 = vld [vmem:[%s148 + $0x3c8] sm:$0xff]
                %273 = vst [vmem:[%s149 + $0x1e8] sm:$0xff] %v272
                %v274 = vld [vmem:[%s148 + $0x3d0] sm:$0xff]
                %275 = vst [vmem:[%s149 + $0x1f0] sm:$0xff] %v274
                %v276 = vld [vmem:[%s148 + $0x3d8] sm:$0xff]
                %277 = vst [vmem:[%s149 + $0x1f8] sm:$0xff] %v276
                %v278 = vld [vmem:[%s148 + $0x400] sm:$0xff]
                %279 = vst [vmem:[%s149 + $0x200] sm:$0xff] %v278
                %v280 = vld [vmem:[%s148 + $0x408] sm:$0xff]
                %281 = vst [vmem:[%s149 + $0x208] sm:$0xff] %v280
                %v282 = vld [vmem:[%s148 + $0x410] sm:$0xff]
                %283 = vst [vmem:[%s149 + $0x210] sm:$0xff] %v282
                %v284 = vld [vmem:[%s148 + $0x418] sm:$0xff]
                %285 = vst [vmem:[%s149 + $0x218] sm:$0xff] %v284
                %v286 = vld [vmem:[%s148 + $0x440] sm:$0xff]
                %287 = vst [vmem:[%s149 + $0x220] sm:$0xff] %v286
                %v288 = vld [vmem:[%s148 + $0x448] sm:$0xff]
                %289 = vst [vmem:[%s149 + $0x228] sm:$0xff] %v288
                %v290 = vld [vmem:[%s148 + $0x450] sm:$0xff]
                %291 = vst [vmem:[%s149 + $0x230] sm:$0xff] %v290
                %v292 = vld [vmem:[%s148 + $0x458] sm:$0xff]
                %293 = vst [vmem:[%s149 + $0x238] sm:$0xff] %v292
                %v294 = vld [vmem:[%s148 + $0x480] sm:$0xff]
                %295 = vst [vmem:[%s149 + $0x240] sm:$0xff] %v294
                %v296 = vld [vmem:[%s148 + $0x488] sm:$0xff]
                %297 = vst [vmem:[%s149 + $0x248] sm:$0xff] %v296
                %v298 = vld [vmem:[%s148 + $0x490] sm:$0xff]
                %299 = vst [vmem:[%s149 + $0x250] sm:$0xff] %v298
                %v300 = vld [vmem:[%s148 + $0x498] sm:$0xff]
                %301 = vst [vmem:[%s149 + $0x258] sm:$0xff] %v300
                %v302 = vld [vmem:[%s148 + $0x4c0] sm:$0xff]
                %303 = vst [vmem:[%s149 + $0x260] sm:$0xff] %v302
                %v304 = vld [vmem:[%s148 + $0x4c8] sm:$0xff]
                %305 = vst [vmem:[%s149 + $0x268] sm:$0xff] %v304
                %v306 = vld [vmem:[%s148 + $0x4d0] sm:$0xff]
                %307 = vst [vmem:[%s149 + $0x270] sm:$0xff] %v306
                %v308 = vld [vmem:[%s148 + $0x4d8] sm:$0xff]
                %309 = vst [vmem:[%s149 + $0x278] sm:$0xff] %v308
                %v310 = vld [vmem:[%s148 + $0x500] sm:$0xff]
                %311 = vst [vmem:[%s149 + $0x280] sm:$0xff] %v310
                %v312 = vld [vmem:[%s148 + $0x508] sm:$0xff]
                %313 = vst [vmem:[%s149 + $0x288] sm:$0xff] %v312
                %v314 = vld [vmem:[%s148 + $0x510] sm:$0xff]
                %315 = vst [vmem:[%s149 + $0x290] sm:$0xff] %v314
                %v316 = vld [vmem:[%s148 + $0x518] sm:$0xff]
                %317 = vst [vmem:[%s149 + $0x298] sm:$0xff] %v316
                %v318 = vld [vmem:[%s148 + $0x540] sm:$0xff]
                %319 = vst [vmem:[%s149 + $0x2a0] sm:$0xff] %v318
                %v320 = vld [vmem:[%s148 + $0x548] sm:$0xff]
                %321 = vst [vmem:[%s149 + $0x2a8] sm:$0xff] %v320
                %v322 = vld [vmem:[%s148 + $0x550] sm:$0xff]
                %323 = vst [vmem:[%s149 + $0x2b0] sm:$0xff] %v322
                %v324 = vld [vmem:[%s148 + $0x558] sm:$0xff]
                %325 = vst [vmem:[%s149 + $0x2b8] sm:$0xff] %v324
                %v326 = vld [vmem:[%s148 + $0x580] sm:$0xff]
                %327 = vst [vmem:[%s149 + $0x2c0] sm:$0xff] %v326
                %v328 = vld [vmem:[%s148 + $0x588] sm:$0xff]
                %329 = vst [vmem:[%s149 + $0x2c8] sm:$0xff] %v328
                %v330 = vld [vmem:[%s148 + $0x590] sm:$0xff]
                %331 = vst [vmem:[%s149 + $0x2d0] sm:$0xff] %v330
                %v332 = vld [vmem:[%s148 + $0x598] sm:$0xff]
                %333 = vst [vmem:[%s149 + $0x2d8] sm:$0xff] %v332
                %v334 = vld [vmem:[%s148 + $0x5c0] sm:$0xff]
                %335 = vst [vmem:[%s149 + $0x2e0] sm:$0xff] %v334
                %v336 = vld [vmem:[%s148 + $0x5c8] sm:$0xff]
                %337 = vst [vmem:[%s149 + $0x2e8] sm:$0xff] %v336
                %v338 = vld [vmem:[%s148 + $0x5d0] sm:$0xff]
                %339 = vst [vmem:[%s149 + $0x2f0] sm:$0xff] %v338
                %v340 = vld [vmem:[%s148 + $0x5d8] sm:$0xff]
                %341 = vst [vmem:[%s149 + $0x2f8] sm:$0xff] %v340
                %v342 = vld [vmem:[%s148 + $0x600] sm:$0xff]
                %343 = vst [vmem:[%s149 + $0x300] sm:$0xff] %v342
                %v344 = vld [vmem:[%s148 + $0x608] sm:$0xff]
                %345 = vst [vmem:[%s149 + $0x308] sm:$0xff] %v344
                %v346 = vld [vmem:[%s148 + $0x610] sm:$0xff]
                %347 = vst [vmem:[%s149 + $0x310] sm:$0xff] %v346
                %v348 = vld [vmem:[%s148 + $0x618] sm:$0xff]
                %349 = vst [vmem:[%s149 + $0x318] sm:$0xff] %v348
                %v350 = vld [vmem:[%s148 + $0x640] sm:$0xff]
                %351 = vst [vmem:[%s149 + $0x320] sm:$0xff] %v350
                %v352 = vld [vmem:[%s148 + $0x648] sm:$0xff]
                %353 = vst [vmem:[%s149 + $0x328] sm:$0xff] %v352
                %v354 = vld [vmem:[%s148 + $0x650] sm:$0xff]
                %355 = vst [vmem:[%s149 + $0x330] sm:$0xff] %v354
                %v356 = vld [vmem:[%s148 + $0x658] sm:$0xff]
                %357 = vst [vmem:[%s149 + $0x338] sm:$0xff] %v356
                %v358 = vld [vmem:[%s148 + $0x680] sm:$0xff]
                %359 = vst [vmem:[%s149 + $0x340] sm:$0xff] %v358
                %v360 = vld [vmem:[%s148 + $0x688] sm:$0xff]
                %361 = vst [vmem:[%s149 + $0x348] sm:$0xff] %v360
                %v362 = vld [vmem:[%s148 + $0x690] sm:$0xff]
                %363 = vst [vmem:[%s149 + $0x350] sm:$0xff] %v362
                %v364 = vld [vmem:[%s148 + $0x698] sm:$0xff]
                %365 = vst [vmem:[%s149 + $0x358] sm:$0xff] %v364
              $region41: #{calo_ae_forward.15} parent=35 // loop_footer
                %s147 = sadd.s32 1, %s143
              $region42: #{calo_ae_forward.15} parent=35 // loop_footer_branch
                %142 = sbr.rel target = $region38
              $region43: #{calo_ae_forward.15} parent=35 // loop_exit
                _
            $region36: #{calo_ae_forward.15} parent=31 // pred_fallthru
              _
            // Predicated region
            $region44: #{calo_ae_forward.15} parent=31 // pred_check
              _
            $region45: #{calo_ae_forward.15} parent=31 // pred_check_branch
              %367 = sbr.rel target = $region47
            $region46: #{calo_ae_forward.15} parent=31 // pred_region
              _
            $region47: #{calo_ae_forward.15} parent=31 // pred_fallthru
              _
          $region32: #{calo_ae_forward.15} parent=27 // pred_fallthru
            _
          %368 = vnop
        $region28: #{calo_ae_forward.15} parent=23 // pred_fallthru
          _
      $region24: #{calo_ae_forward.15} parent=5 // pred_fallthru
        _
      %p369 = scmp.le.s32.totalorder 1, %s9
      %p370 = scmp.lt.s32.totalorder %s9, 3
      %p371 = pnand %p369, %p370
      %p372 = pneg %p371
      // Predicated region
      $region48: #{calo_ae_forward.15} parent=5 // pred_check
        _
      $region49: #{calo_ae_forward.15} parent=5 // pred_check_branch
        %374 = sbr.rel (%p371) target = $region51
      $region50: #{calo_ae_forward.15} parent=5 // pred_region
        %s375 = ssub.s32 %s9, 1
        %s376 = sand.u32 %s43, 1
        %s377 = sand.u32 %s43, 1
        %s378 = smul.addr %s377, 864
        %s379 = scalar_lea.vmem [#allocation2], %s378
        // Predicated region
        $region52: #{calo_ae_forward.15} parent=50 // pred_check
          %p380 = pneg %p56
        $region53: #{calo_ae_forward.15} parent=50 // pred_check_branch
          %382 = sbr.rel (%p380) target = $region55
        $region54: #{calo_ae_forward.15} parent=50 // pred_region
          _
        $region55: #{calo_ae_forward.15} parent=50 // pred_fallthru
          _
        %p383 = pneg %p30
        %p384 = pneg %p27
        %s385 = sand.u32 %s43, 1
        %s386 = sand.u32 %s43, 1
        %s387 = smul.addr %s386, 864
        %s388 = scalar_lea.vmem [#allocation2], %s387
        %p389 = pneg %p56
        %p390 = pneg %p53
        %p391 = pneg %p77
        %p392 = pneg %p74
        %p393 = pneg %p103
        %p394 = pneg %p100
        %s395 = smul.u32 8, %s14
        %p396 = scmp.lt.s32.totalorder %s395, 15
        %s397 = scalar_select %p396, %s395, 15
        %s398 = smul.addr %s397, 4
        %s399 = scalar_lea.vmem %s3, %s398
        %s400 = smul.u32 8, %s14
        %s401 = smul.u32 8, %s14
        %p402 = scmp.lt.s32.totalorder %s401, 15
        %s403 = scalar_select %p402, %s401, 15
        %s404 = smul.addr %s403, 4
        %s405 = scalar_lea.vmem %s3, %s404
        %s406 = smul.u32 8, %s14
        %v408 = vld [vmem:[%s0] sm:$0xff]
        %v409 = vld [vmem:[%s379] sm:$0xff]
        %v410 = vld [vmem:[%s379 + $0x8] sm:$0xff]
        %v411 = vld [vmem:[%s379 + $0x10] sm:$0xff]
        %v412 = vld [vmem:[%s379 + $0x18] sm:$0xff]
        %v413 = vld [vmem:[%s379 + $0x20] sm:$0xff]
        %v414 = vld [vmem:[%s379 + $0x28] sm:$0xff]
        %v415 = vld [vmem:[%s379 + $0x30] sm:$0xff]
        %v416 = vld [vmem:[%s379 + $0x38] sm:$0xff]
        %v417 = vld [vmem:[%s379 + $0x40] sm:$0xff]
        %v418 = vld [vmem:[%s379 + $0x48] sm:$0xff]
        %v419 = vld [vmem:[%s379 + $0x50] sm:$0xff]
        %v420 = vld [vmem:[%s379 + $0x58] sm:$0xff]
        %v421 = vld [vmem:[%s379 + $0x60] sm:$0xff]
        %v422 = vld [vmem:[%s379 + $0x68] sm:$0xff]
        %v423 = vld [vmem:[%s379 + $0x70] sm:$0xff]
        %v424 = vld [vmem:[%s379 + $0x78] sm:$0xff]
        %v425 = vld [vmem:[%s379 + $0x80] sm:$0xff]
        %v426 = vld [vmem:[%s379 + $0x88] sm:$0xff]
        %v427 = vld [vmem:[%s379 + $0x90] sm:$0xff]
        %v428 = vld [vmem:[%s379 + $0x98] sm:$0xff]
        %v429 = vld [vmem:[%s379 + $0xa0] sm:$0xff]
        %v430 = vld [vmem:[%s379 + $0xa8] sm:$0xff]
        %v431 = vld [vmem:[%s379 + $0xb0] sm:$0xff]
        %v432 = vld [vmem:[%s379 + $0xb8] sm:$0xff]
        %v433 = vld [vmem:[%s379 + $0xc0] sm:$0xff]
        %v434 = vld [vmem:[%s379 + $0xc8] sm:$0xff]
        %v435 = vld [vmem:[%s379 + $0xd0] sm:$0xff]
        %v436 = vld [vmem:[%s379 + $0xd8] sm:$0xff]
        %v437 = vld [vmem:[%s379 + $0xe0] sm:$0xff]
        %v438 = vld [vmem:[%s379 + $0xe8] sm:$0xff]
        %v439 = vld [vmem:[%s379 + $0xf0] sm:$0xff]
        %v440 = vld [vmem:[%s379 + $0xf8] sm:$0xff]
        %v441 = vld [vmem:[%s379 + $0x100] sm:$0xff]
        %v442 = vld [vmem:[%s379 + $0x108] sm:$0xff]
        %v443 = vld [vmem:[%s379 + $0x110] sm:$0xff]
        %v444 = vld [vmem:[%s379 + $0x118] sm:$0xff]
        %v445 = vld [vmem:[%s379 + $0x120] sm:$0xff]
        %v446 = vld [vmem:[%s379 + $0x128] sm:$0xff]
        %v447 = vld [vmem:[%s379 + $0x130] sm:$0xff]
        %v448 = vld [vmem:[%s379 + $0x138] sm:$0xff]
        %v449 = vld [vmem:[%s379 + $0x140] sm:$0xff]
        %v450 = vld [vmem:[%s379 + $0x148] sm:$0xff]
        %v451 = vld [vmem:[%s379 + $0x150] sm:$0xff]
        %v452 = vld [vmem:[%s379 + $0x158] sm:$0xff]
        %v453 = vld [vmem:[%s379 + $0x160] sm:$0xff]
        %v454 = vld [vmem:[%s379 + $0x168] sm:$0xff]
        %v455 = vld [vmem:[%s379 + $0x170] sm:$0xff]
        %v456 = vld [vmem:[%s379 + $0x178] sm:$0xff]
        %v457 = vld [vmem:[%s379 + $0x180] sm:$0xff]
        %v458 = vld [vmem:[%s379 + $0x188] sm:$0xff]
        %v459 = vld [vmem:[%s379 + $0x190] sm:$0xff]
        %v460 = vld [vmem:[%s379 + $0x198] sm:$0xff]
        %v461 = vld [vmem:[%s379 + $0x1a0] sm:$0xff]
        %v462 = vld [vmem:[%s379 + $0x1a8] sm:$0xff]
        %v463 = vld [vmem:[%s379 + $0x1b0] sm:$0xff]
        %v464 = vld [vmem:[%s379 + $0x1b8] sm:$0xff]
        %v465 = vld [vmem:[%s379 + $0x1c0] sm:$0xff]
        %v466 = vld [vmem:[%s379 + $0x1c8] sm:$0xff]
        %v467 = vld [vmem:[%s379 + $0x1d0] sm:$0xff]
        %v468 = vld [vmem:[%s379 + $0x1d8] sm:$0xff]
        %v469 = vld [vmem:[%s379 + $0x1e0] sm:$0xff]
        %v470 = vld [vmem:[%s379 + $0x1e8] sm:$0xff]
        %v471 = vld [vmem:[%s379 + $0x1f0] sm:$0xff]
        %v472 = vld [vmem:[%s379 + $0x1f8] sm:$0xff]
        %v473 = vld [vmem:[%s379 + $0x200] sm:$0xff]
        %v474 = vld [vmem:[%s379 + $0x208] sm:$0xff]
        %v475 = vld [vmem:[%s379 + $0x210] sm:$0xff]
        %v476 = vld [vmem:[%s379 + $0x218] sm:$0xff]
        %v477 = vld [vmem:[%s379 + $0x220] sm:$0xff]
        %v478 = vld [vmem:[%s379 + $0x228] sm:$0xff]
        %v479 = vld [vmem:[%s379 + $0x230] sm:$0xff]
        %v480 = vld [vmem:[%s379 + $0x238] sm:$0xff]
        %v481 = vld [vmem:[%s379 + $0x240] sm:$0xff]
        %v482 = vld [vmem:[%s379 + $0x248] sm:$0xff]
        %v483 = vld [vmem:[%s379 + $0x250] sm:$0xff]
        %v484 = vld [vmem:[%s379 + $0x258] sm:$0xff]
        %v485 = vld [vmem:[%s379 + $0x260] sm:$0xff]
        %v486 = vld [vmem:[%s379 + $0x268] sm:$0xff]
        %v487 = vld [vmem:[%s379 + $0x270] sm:$0xff]
        %v488 = vld [vmem:[%s379 + $0x278] sm:$0xff]
        %v489 = vld [vmem:[%s379 + $0x280] sm:$0xff]
        %v490 = vld [vmem:[%s379 + $0x288] sm:$0xff]
        %v491 = vld [vmem:[%s379 + $0x290] sm:$0xff]
        %v492 = vld [vmem:[%s379 + $0x298] sm:$0xff]
        %v493 = vld [vmem:[%s379 + $0x2a0] sm:$0xff]
        %v494 = vld [vmem:[%s379 + $0x2a8] sm:$0xff]
        %v495 = vld [vmem:[%s379 + $0x2b0] sm:$0xff]
        %v496 = vld [vmem:[%s379 + $0x2b8] sm:$0xff]
        %v497 = vld [vmem:[%s379 + $0x2c0] sm:$0xff]
        %v498 = vld [vmem:[%s379 + $0x2c8] sm:$0xff]
        %v499 = vld [vmem:[%s379 + $0x2d0] sm:$0xff]
        %v500 = vld [vmem:[%s379 + $0x2d8] sm:$0xff]
        %v501 = vld [vmem:[%s379 + $0x2e0] sm:$0xff]
        %v502 = vld [vmem:[%s379 + $0x2e8] sm:$0xff]
        %v503 = vld [vmem:[%s379 + $0x2f0] sm:$0xff]
        %v504 = vld [vmem:[%s379 + $0x2f8] sm:$0xff]
        %v505 = vld [vmem:[%s379 + $0x300] sm:$0xff]
        %v506 = vld [vmem:[%s379 + $0x308] sm:$0xff]
        %v507 = vld [vmem:[%s379 + $0x310] sm:$0xff]
        %v508 = vld [vmem:[%s379 + $0x318] sm:$0xff]
        %v509 = vld [vmem:[%s379 + $0x320] sm:$0xff]
        %v510 = vld [vmem:[%s379 + $0x328] sm:$0xff]
        %v511 = vld [vmem:[%s379 + $0x330] sm:$0xff]
        %v512 = vld [vmem:[%s379 + $0x338] sm:$0xff]
        %v513 = vld [vmem:[%s379 + $0x340] sm:$0xff]
        %v514 = vld [vmem:[%s379 + $0x348] sm:$0xff]
        %v515 = vld [vmem:[%s379 + $0x350] sm:$0xff]
        %v516 = vld [vmem:[%s379 + $0x358] sm:$0xff]
        %v517 = vld [vmem:[%s2] sm:$0xff]
        %519 = vset.pattern.permute.xlu0 0
        %520 = vperm.xlu0 %519, %v517
        %v521 = vpop.permute.xlu0 %520
        %v524 = vunpack.c.l.b16 %v408
        %v525 = vunpack.c.h.b16 %v408
        %v526 = vpack.c.b16 %v524, %v524
        %v527 = vpack.c.b16 %v525, %v525
        %v637 = vunpack.c.l.b16 %v409
        %v638 = vunpack.c.h.b16 %v409
        %v639 = vunpack.c.l.b16 %v410
        %v640 = vunpack.c.h.b16 %v410
        %v641 = vunpack.c.l.b16 %v411
        %v642 = vunpack.c.h.b16 %v411
        %v643 = vunpack.c.l.b16 %v412
        %v644 = vunpack.c.h.b16 %v412
        %v645 = vunpack.c.l.b16 %v413
        %v646 = vunpack.c.h.b16 %v413
        %v647 = vunpack.c.l.b16 %v414
        %v648 = vunpack.c.h.b16 %v414
        %v649 = vunpack.c.l.b16 %v415
        %v650 = vunpack.c.h.b16 %v415
        %v651 = vunpack.c.l.b16 %v416
        %v652 = vunpack.c.h.b16 %v416
        %v653 = vunpack.c.l.b16 %v417
        %v654 = vunpack.c.h.b16 %v417
        %v655 = vunpack.c.l.b16 %v418
        %v656 = vunpack.c.h.b16 %v418
        %v657 = vunpack.c.l.b16 %v419
        %v658 = vunpack.c.h.b16 %v419
        %v659 = vunpack.c.l.b16 %v420
        %v660 = vunpack.c.h.b16 %v420
        %v661 = vunpack.c.l.b16 %v421
        %v662 = vunpack.c.h.b16 %v421
        %v663 = vunpack.c.l.b16 %v422
        %v664 = vunpack.c.h.b16 %v422
        %v665 = vunpack.c.l.b16 %v423
        %v666 = vunpack.c.h.b16 %v423
        %v667 = vunpack.c.l.b16 %v424
        %v668 = vunpack.c.h.b16 %v424
        %v669 = vunpack.c.l.b16 %v425
        %v670 = vunpack.c.h.b16 %v425
        %v671 = vunpack.c.l.b16 %v426
        %v672 = vunpack.c.h.b16 %v426
        %v673 = vunpack.c.l.b16 %v427
        %v674 = vunpack.c.h.b16 %v427
        %v675 = vunpack.c.l.b16 %v428
        %v676 = vunpack.c.h.b16 %v428
        %v677 = vunpack.c.l.b16 %v429
        %v678 = vunpack.c.h.b16 %v429
        %v679 = vunpack.c.l.b16 %v430
        %v680 = vunpack.c.h.b16 %v430
        %v681 = vunpack.c.l.b16 %v431
        %v682 = vunpack.c.h.b16 %v431
        %v683 = vunpack.c.l.b16 %v432
        %v684 = vunpack.c.h.b16 %v432
        %v685 = vunpack.c.l.b16 %v433
        %v686 = vunpack.c.h.b16 %v433
        %v687 = vunpack.c.l.b16 %v434
        %v688 = vunpack.c.h.b16 %v434
        %v689 = vunpack.c.l.b16 %v435
        %v690 = vunpack.c.h.b16 %v435
        %v691 = vunpack.c.l.b16 %v436
        %v692 = vunpack.c.h.b16 %v436
        %v693 = vunpack.c.l.b16 %v437
        %v694 = vunpack.c.h.b16 %v437
        %v695 = vunpack.c.l.b16 %v438
        %v696 = vunpack.c.h.b16 %v438
        %v697 = vunpack.c.l.b16 %v439
        %v698 = vunpack.c.h.b16 %v439
        %v699 = vunpack.c.l.b16 %v440
        %v700 = vunpack.c.h.b16 %v440
        %v701 = vunpack.c.l.b16 %v441
        %v702 = vunpack.c.h.b16 %v441
        %v703 = vunpack.c.l.b16 %v442
        %v704 = vunpack.c.h.b16 %v442
        %v705 = vunpack.c.l.b16 %v443
        %v706 = vunpack.c.h.b16 %v443
        %v707 = vunpack.c.l.b16 %v444
        %v708 = vunpack.c.h.b16 %v444
        %v709 = vunpack.c.l.b16 %v445
        %v710 = vunpack.c.h.b16 %v445
        %v711 = vunpack.c.l.b16 %v446
        %v712 = vunpack.c.h.b16 %v446
        %v713 = vunpack.c.l.b16 %v447
        %v714 = vunpack.c.h.b16 %v447
        %v715 = vunpack.c.l.b16 %v448
        %v716 = vunpack.c.h.b16 %v448
        %v717 = vunpack.c.l.b16 %v449
        %v718 = vunpack.c.h.b16 %v449
        %v719 = vunpack.c.l.b16 %v450
        %v720 = vunpack.c.h.b16 %v450
        %v721 = vunpack.c.l.b16 %v451
        %v722 = vunpack.c.h.b16 %v451
        %v723 = vunpack.c.l.b16 %v452
        %v724 = vunpack.c.h.b16 %v452
        %v725 = vunpack.c.l.b16 %v453
        %v726 = vunpack.c.h.b16 %v453
        %v727 = vunpack.c.l.b16 %v454
        %v728 = vunpack.c.h.b16 %v454
        %v729 = vunpack.c.l.b16 %v455
        %v730 = vunpack.c.h.b16 %v455
        %v731 = vunpack.c.l.b16 %v456
        %v732 = vunpack.c.h.b16 %v456
        %v733 = vunpack.c.l.b16 %v457
        %v734 = vunpack.c.h.b16 %v457
        %v735 = vunpack.c.l.b16 %v458
        %v736 = vunpack.c.h.b16 %v458
        %v737 = vunpack.c.l.b16 %v459
        %v738 = vunpack.c.h.b16 %v459
        %v739 = vunpack.c.l.b16 %v460
        %v740 = vunpack.c.h.b16 %v460
        %v741 = vunpack.c.l.b16 %v461
        %v742 = vunpack.c.h.b16 %v461
        %v743 = vunpack.c.l.b16 %v462
        %v744 = vunpack.c.h.b16 %v462
        %v745 = vunpack.c.l.b16 %v463
        %v746 = vunpack.c.h.b16 %v463
        %v747 = vunpack.c.l.b16 %v464
        %v748 = vunpack.c.h.b16 %v464
        %v749 = vunpack.c.l.b16 %v465
        %v750 = vunpack.c.h.b16 %v465
        %v751 = vunpack.c.l.b16 %v466
        %v752 = vunpack.c.h.b16 %v466
        %v753 = vunpack.c.l.b16 %v467
        %v754 = vunpack.c.h.b16 %v467
        %v755 = vunpack.c.l.b16 %v468
        %v756 = vunpack.c.h.b16 %v468
        %v757 = vunpack.c.l.b16 %v469
        %v758 = vunpack.c.h.b16 %v469
        %v759 = vunpack.c.l.b16 %v470
        %v760 = vunpack.c.h.b16 %v470
        %v761 = vunpack.c.l.b16 %v471
        %v762 = vunpack.c.h.b16 %v471
        %v763 = vunpack.c.l.b16 %v472
        %v764 = vunpack.c.h.b16 %v472
        %v765 = vunpack.c.l.b16 %v473
        %v766 = vunpack.c.h.b16 %v473
        %v767 = vunpack.c.l.b16 %v474
        %v768 = vunpack.c.h.b16 %v474
        %v769 = vunpack.c.l.b16 %v475
        %v770 = vunpack.c.h.b16 %v475
        %v771 = vunpack.c.l.b16 %v476
        %v772 = vunpack.c.h.b16 %v476
        %v773 = vunpack.c.l.b16 %v477
        %v774 = vunpack.c.h.b16 %v477
        %v775 = vunpack.c.l.b16 %v478
        %v776 = vunpack.c.h.b16 %v478
        %v777 = vunpack.c.l.b16 %v479
        %v778 = vunpack.c.h.b16 %v479
        %v779 = vunpack.c.l.b16 %v480
        %v780 = vunpack.c.h.b16 %v480
        %v781 = vunpack.c.l.b16 %v481
        %v782 = vunpack.c.h.b16 %v481
        %v783 = vunpack.c.l.b16 %v482
        %v784 = vunpack.c.h.b16 %v482
        %v785 = vunpack.c.l.b16 %v483
        %v786 = vunpack.c.h.b16 %v483
        %v787 = vunpack.c.l.b16 %v484
        %v788 = vunpack.c.h.b16 %v484
        %v789 = vunpack.c.l.b16 %v485
        %v790 = vunpack.c.h.b16 %v485
        %v791 = vunpack.c.l.b16 %v486
        %v792 = vunpack.c.h.b16 %v486
        %v793 = vunpack.c.l.b16 %v487
        %v794 = vunpack.c.h.b16 %v487
        %v795 = vunpack.c.l.b16 %v488
        %v796 = vunpack.c.h.b16 %v488
        %v797 = vunpack.c.l.b16 %v489
        %v798 = vunpack.c.h.b16 %v489
        %v799 = vunpack.c.l.b16 %v490
        %v800 = vunpack.c.h.b16 %v490
        %v801 = vunpack.c.l.b16 %v491
        %v802 = vunpack.c.h.b16 %v491
        %v803 = vunpack.c.l.b16 %v492
        %v804 = vunpack.c.h.b16 %v492
        %v805 = vunpack.c.l.b16 %v493
        %v806 = vunpack.c.h.b16 %v493
        %v807 = vunpack.c.l.b16 %v494
        %v808 = vunpack.c.h.b16 %v494
        %v809 = vunpack.c.l.b16 %v495
        %v810 = vunpack.c.h.b16 %v495
        %v811 = vunpack.c.l.b16 %v496
        %v812 = vunpack.c.h.b16 %v496
        %v813 = vunpack.c.l.b16 %v497
        %v814 = vunpack.c.h.b16 %v497
        %v815 = vunpack.c.l.b16 %v498
        %v816 = vunpack.c.h.b16 %v498
        %v817 = vunpack.c.l.b16 %v499
        %v818 = vunpack.c.h.b16 %v499
        %v819 = vunpack.c.l.b16 %v500
        %v820 = vunpack.c.h.b16 %v500
        %v821 = vunpack.c.l.b16 %v501
        %v822 = vunpack.c.h.b16 %v501
        %v823 = vunpack.c.l.b16 %v502
        %v824 = vunpack.c.h.b16 %v502
        %v825 = vunpack.c.l.b16 %v503
        %v826 = vunpack.c.h.b16 %v503
        %v827 = vunpack.c.l.b16 %v504
        %v828 = vunpack.c.h.b16 %v504
        %v829 = vunpack.c.l.b16 %v505
        %v830 = vunpack.c.h.b16 %v505
        %v831 = vunpack.c.l.b16 %v506
        %v832 = vunpack.c.h.b16 %v506
        %v833 = vunpack.c.l.b16 %v507
        %v834 = vunpack.c.h.b16 %v507
        %v835 = vunpack.c.l.b16 %v508
        %v836 = vunpack.c.h.b16 %v508
        %v837 = vunpack.c.l.b16 %v509
        %v838 = vunpack.c.h.b16 %v509
        %v839 = vunpack.c.l.b16 %v510
        %v840 = vunpack.c.h.b16 %v510
        %v841 = vunpack.c.l.b16 %v511
        %v842 = vunpack.c.h.b16 %v511
        %v843 = vunpack.c.l.b16 %v512
        %v844 = vunpack.c.h.b16 %v512
        %v845 = vunpack.c.l.b16 %v513
        %v846 = vunpack.c.h.b16 %v513
        %v847 = vunpack.c.l.b16 %v514
        %v848 = vunpack.c.h.b16 %v514
        %v849 = vunpack.c.l.b16 %v515
        %v850 = vunpack.c.h.b16 %v515
        %v851 = vunpack.c.l.b16 %v516
        %v852 = vunpack.c.h.b16 %v516
        %v853 = vpack.c.b16 %v645, %v637
        %v854 = vpack.c.b16 %v646, %v638
        %v855 = vpack.c.b16 %v647, %v639
        %v856 = vpack.c.b16 %v648, %v640
        %v857 = vpack.c.b16 %v649, %v641
        %v858 = vpack.c.b16 %v650, %v642
        %v859 = vpack.c.b16 %v651, %v643
        %v860 = vpack.c.b16 %v652, %v644
        %v861 = vpack.c.b16 %v661, %v653
        %v862 = vpack.c.b16 %v662, %v654
        %v863 = vpack.c.b16 %v663, %v655
        %v864 = vpack.c.b16 %v664, %v656
        %v865 = vpack.c.b16 %v665, %v657
        %v866 = vpack.c.b16 %v666, %v658
        %v867 = vpack.c.b16 %v667, %v659
        %v868 = vpack.c.b16 %v668, %v660
        %v869 = vpack.c.b16 %v677, %v669
        %v870 = vpack.c.b16 %v678, %v670
        %v871 = vpack.c.b16 %v679, %v671
        %v872 = vpack.c.b16 %v680, %v672
        %v873 = vpack.c.b16 %v681, %v673
        %v874 = vpack.c.b16 %v682, %v674
        %v875 = vpack.c.b16 %v683, %v675
        %v876 = vpack.c.b16 %v684, %v676
        %v877 = vpack.c.b16 %v693, %v685
        %v878 = vpack.c.b16 %v694, %v686
        %v879 = vpack.c.b16 %v695, %v687
        %v880 = vpack.c.b16 %v696, %v688
        %v881 = vpack.c.b16 %v697, %v689
        %v882 = vpack.c.b16 %v698, %v690
        %v883 = vpack.c.b16 %v699, %v691
        %v884 = vpack.c.b16 %v700, %v692
        %v885 = vpack.c.b16 %v709, %v701
        %v886 = vpack.c.b16 %v710, %v702
        %v887 = vpack.c.b16 %v711, %v703
        %v888 = vpack.c.b16 %v712, %v704
        %v889 = vpack.c.b16 %v713, %v705
        %v890 = vpack.c.b16 %v714, %v706
        %v891 = vpack.c.b16 %v715, %v707
        %v892 = vpack.c.b16 %v716, %v708
        %v893 = vpack.c.b16 %v725, %v717
        %v894 = vpack.c.b16 %v726, %v718
        %v895 = vpack.c.b16 %v727, %v719
        %v896 = vpack.c.b16 %v728, %v720
        %v897 = vpack.c.b16 %v729, %v721
        %v898 = vpack.c.b16 %v730, %v722
        %v899 = vpack.c.b16 %v731, %v723
        %v900 = vpack.c.b16 %v732, %v724
        %v901 = vpack.c.b16 %v741, %v733
        %v902 = vpack.c.b16 %v742, %v734
        %v903 = vpack.c.b16 %v743, %v735
        %v904 = vpack.c.b16 %v744, %v736
        %v905 = vpack.c.b16 %v745, %v737
        %v906 = vpack.c.b16 %v746, %v738
        %v907 = vpack.c.b16 %v747, %v739
        %v908 = vpack.c.b16 %v748, %v740
        %v909 = vpack.c.b16 %v757, %v749
        %v910 = vpack.c.b16 %v758, %v750
        %v911 = vpack.c.b16 %v759, %v751
        %v912 = vpack.c.b16 %v760, %v752
        %v913 = vpack.c.b16 %v761, %v753
        %v914 = vpack.c.b16 %v762, %v754
        %v915 = vpack.c.b16 %v763, %v755
        %v916 = vpack.c.b16 %v764, %v756
        %v917 = vpack.c.b16 %v773, %v765
        %v918 = vpack.c.b16 %v774, %v766
        %v919 = vpack.c.b16 %v775, %v767
        %v920 = vpack.c.b16 %v776, %v768
        %v921 = vpack.c.b16 %v777, %v769
        %v922 = vpack.c.b16 %v778, %v770
        %v923 = vpack.c.b16 %v779, %v771
        %v924 = vpack.c.b16 %v780, %v772
        %v925 = vpack.c.b16 %v789, %v781
        %v926 = vpack.c.b16 %v790, %v782
        %v927 = vpack.c.b16 %v791, %v783
        %v928 = vpack.c.b16 %v792, %v784
        %v929 = vpack.c.b16 %v793, %v785
        %v930 = vpack.c.b16 %v794, %v786
        %v931 = vpack.c.b16 %v795, %v787
        %v932 = vpack.c.b16 %v796, %v788
        %v933 = vpack.c.b16 %v805, %v797
        %v934 = vpack.c.b16 %v806, %v798
        %v935 = vpack.c.b16 %v807, %v799
        %v936 = vpack.c.b16 %v808, %v800
        %v937 = vpack.c.b16 %v809, %v801
        %v938 = vpack.c.b16 %v810, %v802
        %v939 = vpack.c.b16 %v811, %v803
        %v940 = vpack.c.b16 %v812, %v804
        %v941 = vpack.c.b16 %v821, %v813
        %v942 = vpack.c.b16 %v822, %v814
        %v943 = vpack.c.b16 %v823, %v815
        %v944 = vpack.c.b16 %v824, %v816
        %v945 = vpack.c.b16 %v825, %v817
        %v946 = vpack.c.b16 %v826, %v818
        %v947 = vpack.c.b16 %v827, %v819
        %v948 = vpack.c.b16 %v828, %v820
        %v949 = vpack.c.b16 %v837, %v829
        %v950 = vpack.c.b16 %v838, %v830
        %v951 = vpack.c.b16 %v839, %v831
        %v952 = vpack.c.b16 %v840, %v832
        %v953 = vpack.c.b16 %v841, %v833
        %v954 = vpack.c.b16 %v842, %v834
        %v955 = vpack.c.b16 %v843, %v835
        %v956 = vpack.c.b16 %v844, %v836
        %v957 = vpack.c.b16 %v845, %v845
        %v958 = vpack.c.b16 %v846, %v846
        %v959 = vpack.c.b16 %v847, %v847
        %v960 = vpack.c.b16 %v848, %v848
        %v961 = vpack.c.b16 %v849, %v849
        %v962 = vpack.c.b16 %v850, %v850
        %v963 = vpack.c.b16 %v851, %v851
        %v964 = vpack.c.b16 %v852, %v852
        %vm1069 = vcmask 719872
        %v1071 = vsel %vm1069, %v527, 0
        %vm1073 = vcmask 1043456
        %v1075 = vsel %vm1073, %v957, 0
        %v1078 = vsel %vm1073, %v958, 0
        %v1081 = vsel %vm1073, %v959, 0
        %v1084 = vsel %vm1073, %v960, 0
        %v1087 = vsel %vm1073, %v961, 0
        %v1090 = vsel %vm1073, %v962, 0
        %v1093 = vsel %vm1073, %v963, 0
        %v1096 = vsel %vm1073, %v964, 0
        %1098 = vmatpush.bf16.msra.mxu0 %v909
        %1099 = vmatpush.bf16.msra.mxu0 %v901
        %1100 = vmatpush.bf16.msra.mxu0 %v893
        %1101 = vmatpush.bf16.msra.mxu0 %v885
        %1102 = vmatpush.bf16.msra.mxu0 %v877
        %1103 = vmatpush.bf16.msra.mxu0 %v869
        %1104 = vmatpush.bf16.msra.mxu0 %v861
        %1105 = vmatpush.bf16.msra.mxu0 %v853
        %1106 = vmatmul.bf16.gmra.mxu0 %v526
        %v1107 = vpop.f32.mrf.mxu0
        %v1108 = vadd.f32 %v521, %v1107
        %v1109 = vpop.f32.mrf.mxu0
        %1110 = vdwg.mxu0
        %1111 = vmatpush.bf16.msra.mxu0 0
        %1112 = vmatpush.bf16.msra.mxu0 0
        %1113 = vmatpush.bf16.msra.mxu0 %v1075
        %1114 = vmatpush.bf16.msra.mxu0 %v949
        %1115 = vmatpush.bf16.msra.mxu0 %v941
        %1116 = vmatpush.bf16.msra.mxu0 %v933
        %1117 = vmatpush.bf16.msra.mxu0 %v925
        %1118 = vmatpush.bf16.msra.mxu0 %v917
        %1119 = vmatmul.bf16.gmra.mxu0 %v1071
        %v1120 = vpop.f32.mrf.mxu0
        %v1121 = vadd.f32 %v1108, %v1120
        %v1122 = vpop.f32.mrf.mxu0
        %1123 = vdwg.mxu0
        %1124 = vmatpush.bf16.msra.mxu0 %v910
        %1125 = vmatpush.bf16.msra.mxu0 %v902
        %1126 = vmatpush.bf16.msra.mxu0 %v894
        %1127 = vmatpush.bf16.msra.mxu0 %v886
        %1128 = vmatpush.bf16.msra.mxu0 %v878
        %1129 = vmatpush.bf16.msra.mxu0 %v870
        %1130 = vmatpush.bf16.msra.mxu0 %v862
        %1131 = vmatpush.bf16.msra.mxu0 %v854
        %1132 = vmatmul.bf16.gmra.mxu0 %v526
        %v1133 = vpop.f32.mrf.mxu0
        %v1134 = vadd.f32 %v521, %v1133
        %v1135 = vpop.f32.mrf.mxu0
        %1136 = vdwg.mxu0
        %1137 = vmatpush.bf16.msra.mxu0 0
        %1138 = vmatpush.bf16.msra.mxu0 0
        %1139 = vmatpush.bf16.msra.mxu0 %v1078
        %1140 = vmatpush.bf16.msra.mxu0 %v950
        %1141 = vmatpush.bf16.msra.mxu0 %v942
        %1142 = vmatpush.bf16.msra.mxu0 %v934
        %1143 = vmatpush.bf16.msra.mxu0 %v926
        %1144 = vmatpush.bf16.msra.mxu0 %v918
        %1145 = vmatmul.bf16.gmra.mxu0 %v1071
        %v1146 = vpop.f32.mrf.mxu0
        %v1147 = vadd.f32 %v1134, %v1146
        %v1148 = vpop.f32.mrf.mxu0
        %1149 = vdwg.mxu0
        %1150 = vmatpush.bf16.msra.mxu0 %v911
        %1151 = vmatpush.bf16.msra.mxu0 %v903
        %1152 = vmatpush.bf16.msra.mxu0 %v895
        %1153 = vmatpush.bf16.msra.mxu0 %v887
        %1154 = vmatpush.bf16.msra.mxu0 %v879
        %1155 = vmatpush.bf16.msra.mxu0 %v871
        %1156 = vmatpush.bf16.msra.mxu0 %v863
        %1157 = vmatpush.bf16.msra.mxu0 %v855
        %1158 = vmatmul.bf16.gmra.mxu0 %v526
        %v1159 = vpop.f32.mrf.mxu0
        %v1160 = vadd.f32 %v521, %v1159
        %v1161 = vpop.f32.mrf.mxu0
        %1162 = vdwg.mxu0
        %1163 = vmatpush.bf16.msra.mxu0 0
        %1164 = vmatpush.bf16.msra.mxu0 0
        %1165 = vmatpush.bf16.msra.mxu0 %v1081
        %1166 = vmatpush.bf16.msra.mxu0 %v951
        %1167 = vmatpush.bf16.msra.mxu0 %v943
        %1168 = vmatpush.bf16.msra.mxu0 %v935
        %1169 = vmatpush.bf16.msra.mxu0 %v927
        %1170 = vmatpush.bf16.msra.mxu0 %v919
        %1171 = vmatmul.bf16.gmra.mxu0 %v1071
        %v1172 = vpop.f32.mrf.mxu0
        %v1173 = vadd.f32 %v1160, %v1172
        %v1174 = vpop.f32.mrf.mxu0
        %1175 = vdwg.mxu0
        %1176 = vmatpush.bf16.msra.mxu0 %v912
        %1177 = vmatpush.bf16.msra.mxu0 %v904
        %1178 = vmatpush.bf16.msra.mxu0 %v896
        %1179 = vmatpush.bf16.msra.mxu0 %v888
        %1180 = vmatpush.bf16.msra.mxu0 %v880
        %1181 = vmatpush.bf16.msra.mxu0 %v872
        %1182 = vmatpush.bf16.msra.mxu0 %v864
        %1183 = vmatpush.bf16.msra.mxu0 %v856
        %1184 = vmatmul.bf16.gmra.mxu0 %v526
        %v1185 = vpop.f32.mrf.mxu0
        %v1186 = vadd.f32 %v521, %v1185
        %v1187 = vpop.f32.mrf.mxu0
        %1188 = vdwg.mxu0
        %1189 = vmatpush.bf16.msra.mxu0 0
        %1190 = vmatpush.bf16.msra.mxu0 0
        %1191 = vmatpush.bf16.msra.mxu0 %v1084
        %1192 = vmatpush.bf16.msra.mxu0 %v952
        %1193 = vmatpush.bf16.msra.mxu0 %v944
        %1194 = vmatpush.bf16.msra.mxu0 %v936
        %1195 = vmatpush.bf16.msra.mxu0 %v928
        %1196 = vmatpush.bf16.msra.mxu0 %v920
        %1197 = vmatmul.bf16.gmra.mxu0 %v1071
        %v1198 = vpop.f32.mrf.mxu0
        %v1199 = vadd.f32 %v1186, %v1198
        %v1200 = vpop.f32.mrf.mxu0
        %1201 = vdwg.mxu0
        %1202 = vmatpush.bf16.msra.mxu0 %v913
        %1203 = vmatpush.bf16.msra.mxu0 %v905
        %1204 = vmatpush.bf16.msra.mxu0 %v897
        %1205 = vmatpush.bf16.msra.mxu0 %v889
        %1206 = vmatpush.bf16.msra.mxu0 %v881
        %1207 = vmatpush.bf16.msra.mxu0 %v873
        %1208 = vmatpush.bf16.msra.mxu0 %v865
        %1209 = vmatpush.bf16.msra.mxu0 %v857
        %1210 = vmatmul.bf16.gmra.mxu0 %v526
        %v1211 = vpop.f32.mrf.mxu0
        %v1212 = vadd.f32 %v521, %v1211
        %v1213 = vpop.f32.mrf.mxu0
        %1214 = vdwg.mxu0
        %1215 = vmatpush.bf16.msra.mxu0 0
        %1216 = vmatpush.bf16.msra.mxu0 0
        %1217 = vmatpush.bf16.msra.mxu0 %v1087
        %1218 = vmatpush.bf16.msra.mxu0 %v953
        %1219 = vmatpush.bf16.msra.mxu0 %v945
        %1220 = vmatpush.bf16.msra.mxu0 %v937
        %1221 = vmatpush.bf16.msra.mxu0 %v929
        %1222 = vmatpush.bf16.msra.mxu0 %v921
        %1223 = vmatmul.bf16.gmra.mxu0 %v1071
        %v1224 = vpop.f32.mrf.mxu0
        %v1225 = vadd.f32 %v1212, %v1224
        %v1226 = vpop.f32.mrf.mxu0
        %1227 = vdwg.mxu0
        %1228 = vmatpush.bf16.msra.mxu0 %v914
        %1229 = vmatpush.bf16.msra.mxu0 %v906
        %1230 = vmatpush.bf16.msra.mxu0 %v898
        %1231 = vmatpush.bf16.msra.mxu0 %v890
        %1232 = vmatpush.bf16.msra.mxu0 %v882
        %1233 = vmatpush.bf16.msra.mxu0 %v874
        %1234 = vmatpush.bf16.msra.mxu0 %v866
        %1235 = vmatpush.bf16.msra.mxu0 %v858
        %1236 = vmatmul.bf16.gmra.mxu0 %v526
        %v1237 = vpop.f32.mrf.mxu0
        %v1238 = vadd.f32 %v521, %v1237
        %v1239 = vpop.f32.mrf.mxu0
        %1240 = vdwg.mxu0
        %1241 = vmatpush.bf16.msra.mxu0 0
        %1242 = vmatpush.bf16.msra.mxu0 0
        %1243 = vmatpush.bf16.msra.mxu0 %v1090
        %1244 = vmatpush.bf16.msra.mxu0 %v954
        %1245 = vmatpush.bf16.msra.mxu0 %v946
        %1246 = vmatpush.bf16.msra.mxu0 %v938
        %1247 = vmatpush.bf16.msra.mxu0 %v930
        %1248 = vmatpush.bf16.msra.mxu0 %v922
        %1249 = vmatmul.bf16.gmra.mxu0 %v1071
        %v1250 = vpop.f32.mrf.mxu0
        %v1251 = vadd.f32 %v1238, %v1250
        %v1252 = vpop.f32.mrf.mxu0
        %1253 = vdwg.mxu0
        %1254 = vmatpush.bf16.msra.mxu0 %v915
        %1255 = vmatpush.bf16.msra.mxu0 %v907
        %1256 = vmatpush.bf16.msra.mxu0 %v899
        %1257 = vmatpush.bf16.msra.mxu0 %v891
        %1258 = vmatpush.bf16.msra.mxu0 %v883
        %1259 = vmatpush.bf16.msra.mxu0 %v875
        %1260 = vmatpush.bf16.msra.mxu0 %v867
        %1261 = vmatpush.bf16.msra.mxu0 %v859
        %1262 = vmatmul.bf16.gmra.mxu0 %v526
        %v1263 = vpop.f32.mrf.mxu0
        %v1264 = vadd.f32 %v521, %v1263
        %v1265 = vpop.f32.mrf.mxu0
        %1266 = vdwg.mxu0
        %1267 = vmatpush.bf16.msra.mxu0 0
        %1268 = vmatpush.bf16.msra.mxu0 0
        %1269 = vmatpush.bf16.msra.mxu0 %v1093
        %1270 = vmatpush.bf16.msra.mxu0 %v955
        %1271 = vmatpush.bf16.msra.mxu0 %v947
        %1272 = vmatpush.bf16.msra.mxu0 %v939
        %1273 = vmatpush.bf16.msra.mxu0 %v931
        %1274 = vmatpush.bf16.msra.mxu0 %v923
        %1275 = vmatmul.bf16.gmra.mxu0 %v1071
        %v1276 = vpop.f32.mrf.mxu0
        %v1277 = vadd.f32 %v1264, %v1276
        %v1278 = vpop.f32.mrf.mxu0
        %1279 = vdwg.mxu0
        %1280 = vmatpush.bf16.msra.mxu0 %v916
        %1281 = vmatpush.bf16.msra.mxu0 %v908
        %1282 = vmatpush.bf16.msra.mxu0 %v900
        %1283 = vmatpush.bf16.msra.mxu0 %v892
        %1284 = vmatpush.bf16.msra.mxu0 %v884
        %1285 = vmatpush.bf16.msra.mxu0 %v876
        %1286 = vmatpush.bf16.msra.mxu0 %v868
        %1287 = vmatpush.bf16.msra.mxu0 %v860
        %1288 = vmatmul.bf16.gmra.mxu0 %v526
        %v1289 = vpop.f32.mrf.mxu0
        %v1290 = vadd.f32 %v521, %v1289
        %v1291 = vpop.f32.mrf.mxu0
        %1292 = vdwg.mxu0
        %1293 = vmatpush.bf16.msra.mxu0 0
        %1294 = vmatpush.bf16.msra.mxu0 0
        %1295 = vmatpush.bf16.msra.mxu0 %v1096
        %1296 = vmatpush.bf16.msra.mxu0 %v956
        %1297 = vmatpush.bf16.msra.mxu0 %v948
        %1298 = vmatpush.bf16.msra.mxu0 %v940
        %1299 = vmatpush.bf16.msra.mxu0 %v932
        %1300 = vmatpush.bf16.msra.mxu0 %v924
        %1301 = vmatmul.bf16.gmra.mxu0 %v1071
        %v1302 = vpop.f32.mrf.mxu0
        %v1303 = vadd.f32 %v1290, %v1302
        %v1304 = vpop.f32.mrf.mxu0
        %1305 = vdwg.mxu0
        %v1306 = vpack.c.bf16 %v1147, %v1121
        %v1307 = vpack.c.bf16 %v1199, %v1173
        %v1308 = vpack.c.bf16 %v1251, %v1225
        %v1309 = vpack.c.bf16 %v1303, %v1277
        %1310 = vst [vmem:[%s405] sm:$0xff] %v1306
        %1311 = vst [vmem:[%s405 + $0x8] sm:$0xff] %v1307
        %1312 = vst [vmem:[%s405 + $0x10] sm:$0xff] %v1308
        %1313 = vst [vmem:[%s405 + $0x18] sm:$0xff] %v1309
        %s1314 = smul.u32 8, %s14
        %p1315 = scmp.lt.s32.totalorder %s1314, 15
        %s1316 = scalar_select %p1315, %s1314, 15
        %s1317 = smul.addr %s1316, 4
        %s1318 = scalar_lea.vmem %s3, %s1317
        // Predicated region
        $region56: #{calo_ae_forward.15} parent=50 // pred_check
          %p1319 = pneg %p100
        $region57: #{calo_ae_forward.15} parent=50 // pred_check_branch
          %1321 = sbr.rel (%p1319) target = $region59
        $region58: #{calo_ae_forward.15} parent=50 // pred_region
          %s1322 = smul.u32 8, %s14
        $region59: #{calo_ae_forward.15} parent=50 // pred_fallthru
          _
      $region51: #{calo_ae_forward.15} parent=5 // pred_fallthru
        _
      %p1323 = scmp.le.s32.totalorder 2, %s9
      // Predicated region
      $region60: #{calo_ae_forward.15} parent=5 // pred_check
        %p1324 = pneg %p1323
      $region61: #{calo_ae_forward.15} parent=5 // pred_check_branch
        %1326 = sbr.rel (%p1324) target = $region63
      $region62: #{calo_ae_forward.15} parent=5 // pred_region
        %s1327 = ssub.s32 %s9, 2
        // Predicated region
        $region64: #{calo_ae_forward.15} parent=62 // pred_check
          %p1328 = pneg %p106
        $region65: #{calo_ae_forward.15} parent=62 // pred_check_branch
          %1330 = sbr.rel (%p1328) target = $region67
        $region66: #{calo_ae_forward.15} parent=62 // pred_region
          %s1331 = smul.u32 8, %s15
          %p1332 = scmp.lt.s32.totalorder %s1331, 15
          %s1333 = scalar_select %p1332, %s1331, 15
          %s1334 = smul.addr %s1333, 4
          %s1335 = scalar_lea.vmem %s3, %s1334
        $region67: #{calo_ae_forward.15} parent=62 // pred_fallthru
          _
      $region63: #{calo_ae_forward.15} parent=5 // pred_fallthru
        _
    $region6: #{calo_ae_forward.15} parent=1 // loop_footer
      %s13 = sadd.s32 1, %s9
    $region7: #{calo_ae_forward.15} parent=1 // loop_footer_branch
      %8 = sbr.rel target = $region3
    $region8: #{calo_ae_forward.15} parent=1 // loop_exit
      _

</llo_original>
